<compile_context>
chip_gen: v7x
topology: tpu7x:2x2x1
jax: 0.10.0
libtpu: 0.0.40
codegen_flags: <defaults>
</compile_context>

<pallas_src>
import jax
import jax.numpy as jnp
from jax import lax
from jax.experimental import pallas as pl
from jax.experimental.pallas import tpu as pltpu


def _choose_tile(total, candidates):
    """Largest candidate that evenly divides `total`; falls back to `total`."""
    for c in candidates:
        if c <= total and total % c == 0:
            return c
    return total


# ---------------------------------------------------------------------------
# Phase 1: K-tiled streaming reduction producing the (B, 64) attention vector.
# ---------------------------------------------------------------------------
def _ga_reduce_kernel(xf_ref, w0_ref, b0_ref, w1_ref, b1_ref, w2_ref, b2_ref,
                      a_ref, acc_ref):
    k = pl.program_id(0)

    @pl.when(k == 0)
    def _():
        acc_ref[...] = jnp.zeros_like(acc_ref)

    # conv0 partial: (B, tk) @ (tk, 64) on the MXU, f32 accumulation.
    acc_ref[...] += jnp.dot(xf_ref[...], w0_ref[...],
                            preferred_element_type=jnp.float32)

    # Tiny epilogue runs exactly once, on the last reduction step.
    @pl.when(k == pl.num_programs(0) - 1)
    def _():
        y = acc_ref[...] + b0_ref[...]                                 # (B, 64)
        z = jnp.maximum(
            jnp.dot(y, w1_ref[...], preferred_element_type=jnp.float32)
            + b1_ref[...], 0.0)                                        # (B, 4)
        a = jax.nn.sigmoid(
            jnp.dot(z, w2_ref[...], preferred_element_type=jnp.float32)
            + b2_ref[...])                                             # (B, 64)
        a_ref[...] = a.astype(a_ref.dtype)


# ---------------------------------------------------------------------------
# Phase 2: broadcast the attention vector over spatial (lane axis) and multiply.
# ---------------------------------------------------------------------------
def _ga_scale_kernel(a_ref, x_ref, o_ref):
    o_ref[...] = x_ref[...] * a_ref[...][:, :, None]


def global_aware_attention(x, w0, b0, w1, b1, w2, b2):
    """GlobalAwareAttention forward. x: (B, C, H, W) float32 NCHW."""
    B, C, H, W = x.shape
    Cout0 = w0.shape[0]          # 64
    Cmid = w1.shape[0]           # 4
    S = H * W
    K = C * S

    # Views / weight layouts (reshapes are free; weight transpose done once).
    xf = x.reshape(B, K)                        # conv0 contraction view
    x3 = x.reshape(B, C, S)                     # lane-dense scaling view
    w0f = w0.reshape(Cout0, K).T                # (C*H*W, 64)
    w1m = w1.reshape(Cmid, Cout0).T             # (64, 4)
    w2m = w2.reshape(Cout0, Cmid).T             # (4, 64)
    b0r = b0.reshape(1, Cout0)
    b1r = b1.reshape(1, Cmid)
    b2r = b2.reshape(1, Cout0)

    # --- Phase 1: stream w0 / x chunks over K = C*H*W, accumulate in VMEM ---
    tk = _choose_tile(K, (8192, 4096, 2048, 1024, 512, 256, 128))
    nk = K // tk

    attn = pl.pallas_call(
        _ga_reduce_kernel,
        out_shape=jax.ShapeDtypeStruct((B, Cout0), jnp.float32),
        grid=(nk,),
        in_specs=[
            pl.BlockSpec((B, tk), lambda k: (0, k)),        # x chunk (single pass)
            pl.BlockSpec((tk, Cout0), lambda k: (k, 0)),    # w0 chunk (streamed)
            pl.BlockSpec((1, Cout0), lambda k: (0, 0)),     # b0 (fetched once)
            pl.BlockSpec((Cout0, Cmid), lambda k: (0, 0)),  # w1
            pl.BlockSpec((1, Cmid), lambda k: (0, 0)),      # b1
            pl.BlockSpec((Cmid, Cout0), lambda k: (0, 0)),  # w2
            pl.BlockSpec((1, Cout0), lambda k: (0, 0)),     # b2
        ],
        out_specs=pl.BlockSpec((B, Cout0), lambda k: (0, 0)),
        scratch_shapes=[pltpu.VMEM((B, Cout0), jnp.float32)],
        compiler_params=pltpu.CompilerParams(
            dimension_semantics=("arbitrary",)),            # reduction axis
    )(xf, w0f, b0r, w1m, b1r, w2m, b2r)

    # --- Phase 2: lane-dense elementwise scaling over spatial tiles ---------
    ts = _choose_tile(S, (2048, 1024, 512, 256, 128))
    ns = S // ts

    out3 = pl.pallas_call(
        _ga_scale_kernel,
        out_shape=jax.ShapeDtypeStruct((B, C, S), x.dtype),
        grid=(ns,),
        in_specs=[
            pl.BlockSpec((B, C), lambda s: (0, 0)),         # attention vector
            pl.BlockSpec((B, C, ts), lambda s: (0, 0, s)),  # x spatial tile
        ],
        out_specs=pl.BlockSpec((B, C, ts), lambda s: (0, 0, s)),
        compiler_params=pltpu.CompilerParams(
            dimension_semantics=("parallel",)),             # megacore on v7x
    )(attn.astype(x.dtype), x3)

    return out3.reshape(B, C, H, W)


# ---------------------------------------------------------------------------
# Full GlobalAttentionUnit forward.
# ---------------------------------------------------------------------------
def _conv2d_nchw(x, w, b, padding):
    dn = lax.conv_dimension_numbers(x.shape, w.shape, ("NCHW", "OIHW", "NCHW"))
    y = lax.conv_general_dilated(x, w, window_strides=(1, 1), padding=padding,
                                 dimension_numbers=dn)
    return y + b[None, :, None, None]


# TODO(synk): the 3x3 convolutions (GlobalAttentionUnit.conv / conv_final) are
# dispatched to XLA's conv primitive rather than hand-written Pallas kernels;
# the Pallas work targets the GA module per the performance review.
def global_attention_unit(x, params, n_ga_units=2):
    ip = x
    for _ in range(n_ga_units):
        ip = _conv2d_nchw(ip, params["conv_w"], params["conv_b"], ((1, 1), (1, 1)))
        ip = global_aware_attention(ip, params["ga_w0"], params["ga_b0"],
                                    params["ga_w1"], params["ga_b1"],
                                    params["ga_w2"], params["ga_b2"])
    r = _conv2d_nchw(ip, params["conv_w"], params["conv_b"], ((1, 1), (1, 1)))
    return _conv2d_nchw(r, params["convf_w"], params["convf_b"], ((1, 1), (1, 1)))


# ---------------------------------------------------------------------------
# Pure-JAX references mirroring the PyTorch forward.
# ---------------------------------------------------------------------------
def _ga_reference(x, w0, b0, w1, b1, w2, b2):
    dn0 = lax.conv_dimension_numbers(x.shape, w0.shape, ("NCHW", "OIHW", "NCHW"))
    c0 = lax.conv_general_dilated(x, w0, (1, 1), "VALID", dimension_numbers=dn0)
    c0 = c0 + b0[None, :, None, None]                           # (B, 64, 1, 1)
    dn1 = lax.conv_dimension_numbers(c0.shape, w1.shape, ("NCHW", "OIHW", "NCHW"))
    c1 = jax.nn.relu(
        lax.conv_general_dilated(c0, w1, (1, 1), "VALID", dimension_numbers=dn1)
        + b1[None, :, None, None])                              # (B, 4, 1, 1)
    dn2 = lax.conv_dimension_numbers(c1.shape, w2.shape, ("NCHW", "OIHW", "NCHW"))
    c2 = jax.nn.sigmoid(
        lax.conv_general_dilated(c1, w2, (1, 1), "VALID", dimension_numbers=dn2)
        + b2[None, :, None, None])                              # (B, 64, 1, 1)
    return x * c2


def _unit_reference(x, params, n_ga_units=2):
    ip = x
    for _ in range(n_ga_units):
        ip = _conv2d_nchw(ip, params["conv_w"], params["conv_b"], ((1, 1), (1, 1)))
        ip = _ga_reference(ip, params["ga_w0"], params["ga_b0"], params["ga_w1"],
                           params["ga_b1"], params["ga_w2"], params["ga_b2"])
    r = _conv2d_nchw(ip, params["conv_w"], params["conv_b"], ((1, 1), (1, 1)))
    return _conv2d_nchw(r, params["convf_w"], params["convf_b"], ((1, 1), (1, 1)))


if __name__ == "__main__":
    # Small shapes consistent with the module: channels fixed by __init__
    # (64 -> 64 -> 4 -> 64, final 64 -> 3); spatial / conv0 kernel size scaled
    # 256 -> 16 so conv0 still spans the full image ("global" 1x1 output).
    B, C, H, W = 2, 64, 16, 16
    CMID, COUT = 4, 3

    key = jax.random.PRNGKey(0)
    (kx, kc, kcb, k0, kb0, k1, kb1, k2, kb2, kf, kfb) = jax.random.split(key, 11)

    x = jax.random.normal(kx, (B, C, H, W), dtype=jnp.float32)

    params = dict(
        conv_w=jax.random.normal(kc, (C, C, 3, 3), jnp.float32) / (C * 9) ** 0.5,
        conv_b=jax.random.normal(kcb, (C,), jnp.float32) * 0.1,
        ga_w0=jax.random.normal(k0, (C, C, H, W), jnp.float32) / (C * H * W) ** 0.5,
        ga_b0=jax.random.normal(kb0, (C,), jnp.float32) * 0.1,
        ga_w1=jax.random.normal(k1, (CMID, C, 1, 1), jnp.float32) / C ** 0.5,
        ga_b1=jax.random.normal(kb1, (CMID,), jnp.float32) * 0.1,
        ga_w2=jax.random.normal(k2, (C, CMID, 1, 1), jnp.float32) / CMID ** 0.5,
        ga_b2=jax.random.normal(kb2, (C,), jnp.float32) * 0.1,
        convf_w=jax.random.normal(kf, (COUT, C, 3, 3), jnp.float32) / (C * 9) ** 0.5,
        convf_b=jax.random.normal(kfb, (COUT,), jnp.float32) * 0.1,
    )

    # 1) GA module alone: Pallas two-phase kernel vs conv-based reference.
    ga_out = jax.block_until_ready(
        global_aware_attention(x, params["ga_w0"], params["ga_b0"],
                               params["ga_w1"], params["ga_b1"],
                               params["ga_w2"], params["ga_b2"]))
    ga_ref = jax.block_until_ready(
        _ga_reference(x, params["ga_w0"], params["ga_b0"], params["ga_w1"],
                      params["ga_b1"], params["ga_w2"], params["ga_b2"]))
    assert ga_out.shape == (B, C, H, W)
    assert jnp.allclose(ga_out, ga_ref, atol=1e-4, rtol=1e-4), (
        f"GA max abs err {jnp.max(jnp.abs(ga_out - ga_ref))}")

    # 2) Full GlobalAttentionUnit forward (2 GA units).
    out = jax.block_until_ready(global_attention_unit(x, params, n_ga_units=2))
    ref = jax.block_until_ready(_unit_reference(x, params, n_ga_units=2))
    assert out.shape == (B, COUT, H, W)
    assert jnp.allclose(out, ref, atol=1e-3, rtol=1e-3), (
        f"unit max abs err {jnp.max(jnp.abs(out - ref))}")

    print("KERNEL_OK")
</pallas_src>

<mosaic_0001>
module attributes {stable_mosaic.version = 11 : i64} {
  func.func @_ga_reduce_kernel(%arg0: i32, %arg1: memref<2x8192xf32, #tpu.memory_space<vmem>>, %arg2: memref<8192x64xf32, #tpu.memory_space<vmem>>, %arg3: memref<1x64xf32, #tpu.memory_space<vmem>>, %arg4: memref<64x4xf32, #tpu.memory_space<vmem>>, %arg5: memref<1x4xf32, #tpu.memory_space<vmem>>, %arg6: memref<4x64xf32, #tpu.memory_space<vmem>>, %arg7: memref<1x64xf32, #tpu.memory_space<vmem>>, %arg8: memref<2x64xf32, #tpu.memory_space<vmem>>, %arg9: memref<2x64xf32, #tpu.memory_space<vmem>>) attributes {dimension_semantics = [#tpu.dimension_semantics<arbitrary>], iteration_bounds = array<i64: 2>, scalar_prefetch = 0 : i64, scratch_operands = 1 : i64, tpu.core_type = #tpu.core_type<tc>, window_params = [{transform_indices = @transform_0, window_bounds = array<i64: 2, 8192>}, {transform_indices = @transform_1, window_bounds = array<i64: 8192, 64>}, {pipeline_mode = #tpu.pipeline_mode<synchronous>, transform_indices = @transform_2, window_bounds = array<i64: 1, 64>}, {pipeline_mode = #tpu.pipeline_mode<synchronous>, transform_indices = @transform_3, window_bounds = array<i64: 64, 4>}, {pipeline_mode = #tpu.pipeline_mode<synchronous>, transform_indices = @transform_4, window_bounds = array<i64: 1, 4>}, {pipeline_mode = #tpu.pipeline_mode<synchronous>, transform_indices = @transform_5, window_bounds = array<i64: 4, 64>}, {pipeline_mode = #tpu.pipeline_mode<synchronous>, transform_indices = @transform_6, window_bounds = array<i64: 1, 64>}, {pipeline_mode = #tpu.pipeline_mode<synchronous>, transform_indices = @transform_7, window_bounds = array<i64: 2, 64>}]} {
    %c0_i32 = arith.constant 0 : i32
    %0 = arith.cmpi eq, %arg0, %c0_i32 : i32
    %1 = arith.extui %0 : i1 to i32
    %c0_i32_0 = arith.constant 0 : i32
    %2 = arith.cmpi ne, %1, %c0_i32_0 : i32
    scf.if %2 {
      %cst_9 = arith.constant 0.000000e+00 : f32
      %12 = vector.broadcast %cst_9 : f32 to vector<2x64xf32>
      %c0_10 = arith.constant 0 : index
      %c0_11 = arith.constant 0 : index
      %13 = vector.load %arg9[%c0_10, %c0_11] : memref<2x64xf32, #tpu.memory_space<vmem>>, vector<2x64xf32>
      tpu.vector_store %arg9[%c0_10, %c0_11], %12 {strides = array<i32>} : memref<2x64xf32, #tpu.memory_space<vmem>>, vector<2x64xf32>,
    } else {
    }
    %c0 = arith.constant 0 : index
    %c0_1 = arith.constant 0 : index
    %3 = vector.load %arg9[%c0, %c0_1] : memref<2x64xf32, #tpu.memory_space<vmem>>, vector<2x64xf32>
    %c0_2 = arith.constant 0 : index
    %c0_3 = arith.constant 0 : index
    %4 = vector.load %arg1[%c0_2, %c0_3] : memref<2x8192xf32, #tpu.memory_space<vmem>>, vector<2x8192xf32>
    %c0_4 = arith.constant 0 : index
    %c0_5 = arith.constant 0 : index
    %5 = vector.load %arg2[%c0_4, %c0_5] : memref<8192x64xf32, #tpu.memory_space<vmem>>, vector<8192x64xf32>
    %cst = arith.constant dense<0.000000e+00> : vector<2x64xf32>
    %6 = tpu.matmul %4, %5, %cst {dimension_numbers = #tpu.dot_dimension_numbers<[1], [0], [0], [1], [0, 0, 1, 1], [], []>} : vector<2x8192xf32>, vector<8192x64xf32>, vector<2x64xf32> -> vector<2x64xf32>
    %7 = arith.addf %3, %6 : vector<2x64xf32>
    %c0_6 = arith.constant 0 : index
    %c0_7 = arith.constant 0 : index
    %8 = vector.load %arg9[%c0_6, %c0_7] : memref<2x64xf32, #tpu.memory_space<vmem>>, vector<2x64xf32>
    tpu.vector_store %arg9[%c0_6, %c0_7], %7 {strides = array<i32>} : memref<2x64xf32, #tpu.memory_space<vmem>>, vector<2x64xf32>,
    %c1_i32 = arith.constant 1 : i32
    %9 = arith.cmpi eq, %arg0, %c1_i32 : i32
    %10 = arith.extui %9 : i1 to i32
    %c0_i32_8 = arith.constant 0 : i32
    %11 = arith.cmpi ne, %10, %c0_i32_8 : i32
    scf.if %11 {
      %c0_9 = arith.constant 0 : index
      %c0_10 = arith.constant 0 : index
      %12 = vector.load %arg9[%c0_9, %c0_10] : memref<2x64xf32, #tpu.memory_space<vmem>>, vector<2x64xf32>
      %c0_11 = arith.constant 0 : index
      %c0_12 = arith.constant 0 : index
      %13 = vector.load %arg3[%c0_11, %c0_12] : memref<1x64xf32, #tpu.memory_space<vmem>>, vector<1x64xf32>
      %14 = vector.broadcast %13 : vector<1x64xf32> to vector<2x64xf32>
      %15 = arith.addf %12, %14 : vector<2x64xf32>
      %c0_13 = arith.constant 0 : index
      %c0_14 = arith.constant 0 : index
      %16 = vector.load %arg4[%c0_13, %c0_14] : memref<64x4xf32, #tpu.memory_space<vmem>>, vector<64x4xf32>
      %cst_15 = arith.constant dense<0.000000e+00> : vector<2x4xf32>
      %17 = tpu.matmul %15, %16, %cst_15 {dimension_numbers = #tpu.dot_dimension_numbers<[1], [0], [0], [1], [0, 0, 1, 1], [], []>} : vector<2x64xf32>, vector<64x4xf32>, vector<2x4xf32> -> vector<2x4xf32>
      %c0_16 = arith.constant 0 : index
      %c0_17 = arith.constant 0 : index
      %18 = vector.load %arg5[%c0_16, %c0_17] : memref<1x4xf32, #tpu.memory_space<vmem>>, vector<1x4xf32>
      %19 = vector.broadcast %18 : vector<1x4xf32> to vector<2x4xf32>
      %20 = arith.addf %17, %19 : vector<2x4xf32>
      %cst_18 = arith.constant 0.000000e+00 : f32
      %21 = vector.broadcast %cst_18 : f32 to vector<2x4xf32>
      %22 = arith.maximumf %20, %21 : vector<2x4xf32>
      %c0_19 = arith.constant 0 : index
      %c0_20 = arith.constant 0 : index
      %23 = vector.load %arg6[%c0_19, %c0_20] : memref<4x64xf32, #tpu.memory_space<vmem>>, vector<4x64xf32>
      %cst_21 = arith.constant dense<0.000000e+00> : vector<2x64xf32>
      %24 = tpu.matmul %22, %23, %cst_21 {dimension_numbers = #tpu.dot_dimension_numbers<[1], [0], [0], [1], [0, 0, 1, 1], [], []>} : vector<2x4xf32>, vector<4x64xf32>, vector<2x64xf32> -> vector<2x64xf32>
      %c0_22 = arith.constant 0 : index
      %c0_23 = arith.constant 0 : index
      %25 = vector.load %arg7[%c0_22, %c0_23] : memref<1x64xf32, #tpu.memory_space<vmem>>, vector<1x64xf32>
      %26 = vector.broadcast %25 : vector<1x64xf32> to vector<2x64xf32>
      %27 = arith.addf %24, %26 : vector<2x64xf32>
      %28 = arith.negf %27 : vector<2x64xf32>
      %29 = math.exp %28 : vector<2x64xf32>
      %cst_24 = arith.constant 1.000000e+00 : f32
      %30 = vector.broadcast %cst_24 : f32 to vector<2x64xf32>
      %31 = arith.addf %30, %29 : vector<2x64xf32>
      %32 = arith.divf %30, %31 : vector<2x64xf32>
      %c0_25 = arith.constant 0 : index
      %c0_26 = arith.constant 0 : index
      %33 = vector.load %arg8[%c0_25, %c0_26] : memref<2x64xf32, #tpu.memory_space<vmem>>, vector<2x64xf32>
      tpu.vector_store %arg8[%c0_25, %c0_26], %32 {strides = array<i32>} : memref<2x64xf32, #tpu.memory_space<vmem>>, vector<2x64xf32>,
    } else {
    }
    return
  }
  func.func @transform_0(%arg0: i32) -> (i32, i32) {
    %c0_i32 = arith.constant 0 : i32
    %c0_i32_0 = arith.constant 0 : i32
    return %c0_i32, %arg0 : i32, i32
  }
  func.func @transform_1(%arg0: i32) -> (i32, i32) {
    %c0_i32 = arith.constant 0 : i32
    %c0_i32_0 = arith.constant 0 : i32
    return %arg0, %c0_i32 : i32, i32
  }
  func.func @transform_2(%arg0: i32) -> (i32, i32) {
    %c0_i32 = arith.constant 0 : i32
    %c0_i32_0 = arith.constant 0 : i32
    %c0_i32_1 = arith.constant 0 : i32
    return %c0_i32, %c0_i32_0 : i32, i32
  }
  func.func @transform_3(%arg0: i32) -> (i32, i32) {
    %c0_i32 = arith.constant 0 : i32
    %c0_i32_0 = arith.constant 0 : i32
    %c0_i32_1 = arith.constant 0 : i32
    return %c0_i32, %c0_i32_0 : i32, i32
  }
  func.func @transform_4(%arg0: i32) -> (i32, i32) {
    %c0_i32 = arith.constant 0 : i32
    %c0_i32_0 = arith.constant 0 : i32
    %c0_i32_1 = arith.constant 0 : i32
    return %c0_i32, %c0_i32_0 : i32, i32
  }
  func.func @transform_5(%arg0: i32) -> (i32, i32) {
    %c0_i32 = arith.constant 0 : i32
    %c0_i32_0 = arith.constant 0 : i32
    %c0_i32_1 = arith.constant 0 : i32
    return %c0_i32, %c0_i32_0 : i32, i32
  }
  func.func @transform_6(%arg0: i32) -> (i32, i32) {
    %c0_i32 = arith.constant 0 : i32
    %c0_i32_0 = arith.constant 0 : i32
    %c0_i32_1 = arith.constant 0 : i32
    return %c0_i32, %c0_i32_0 : i32, i32
  }
  func.func @transform_7(%arg0: i32) -> (i32, i32) {
    %c0_i32 = arith.constant 0 : i32
    %c0_i32_0 = arith.constant 0 : i32
    %c0_i32_1 = arith.constant 0 : i32
    return %c0_i32, %c0_i32_0 : i32, i32
  }
}

</mosaic_0001>

<llo_original>
// kernel: tpu_custom_call.1
$region0: #{tpu_custom_call.1}
  #allocation0 [shape = 'u32[]', space=smem, size = 0x4, offset = 0x4, fixed_abs, tag = 'smem constant byte address 0x4 - core index']
  #allocation1 [shape = 'u32[144,128]{1,0:T(1,128)}', space=vmem, size = 0x12000, scoped, tag = 'internal scratch']
  #allocation2 [shape = 'f32[2,64]{1,0:T(2,128)}', space=vmem, size = 0x400, scoped, tag = 'scratch operand']
  %s0 = inlined_call_operand.vmem [shape: f32[2,16384], index: 0, kind: input, shape index: {}]
  %s1 = inlined_call_operand.vmem [shape: f32[16384,64], index: 1, kind: input, shape index: {}]
  %s2 = inlined_call_operand.vmem [shape: f32[1,64], index: 2, kind: input, shape index: {}]
  %s3 = inlined_call_operand.vmem [shape: f32[64,4], index: 3, kind: input, shape index: {}]
  %s4 = inlined_call_operand.vmem [shape: f32[1,4], index: 4, kind: input, shape index: {}]
  %s5 = inlined_call_operand.vmem [shape: f32[4,64], index: 5, kind: input, shape index: {}]
  %s6 = inlined_call_operand.vmem [shape: f32[1,64], index: 6, kind: input, shape index: {}]
  %s7 = inlined_call_operand.hbm [shape: f32[2,64], index: 7, kind: output, shape index: {}]
  %s8 = sld [smem:[#allocation0]]
  $region69: #{tpu_custom_call.1} parent=0
    _
  %s10 = ssub.s32 1, %s8
  %s11 = scalar_select 0, %s10, %s8
  $region1: #{tpu_custom_call.1} parent=0
    #allocation3 [shape = 'u8[1024]{0}', space=vmem, size = 0x400, scoped, tag = 'output window, operand 0, single buffered']
    #allocation4 [shape = 's32[2]{0}', space=sflag, size = 0x8, scoped, tag = 'scoped memory for tpu_custom_call.1']
    %12 = vsyncpa [#allocation4], 0
    loop: start=0, step=1, limit=4
    $region2: #{tpu_custom_call.1} parent=1 // loop_pre_header
      _
    $region3: #{tpu_custom_call.1} parent=1 // loop_header
      %s14 = sphi 0, %s18
      %p15 = scmp.ge.s32.totalorder %s14, 4
      %s24 = sphi 0, %s26
      %s27 = sphi 0, %s24
      %s28 = sphi 0, %s27
      %s44 = sphi 0, %s28
      %s50 = sphi 0, %s52
      %s53 = sphi 0, %s50
      %s54 = sphi 0, %s53
      %s70 = sphi 0, %s54
      %s74 = sphi 0, %s74
      %s76 = sphi 0, %s74
      %s77 = sphi 0, %s76
      %s91 = sphi 0, %s77
      %s95 = sphi 0, %s95
      %s97 = sphi 0, %s95
      %s98 = sphi 0, %s97
      %s112 = sphi 0, %s98
      %s116 = sphi 0, %s116
      %s118 = sphi 0, %s116
      %s119 = sphi 0, %s118
      %s133 = sphi 0, %s119
      %s137 = sphi 0, %s137
      %s139 = sphi 0, %s137
      %s140 = sphi 0, %s139
      %s154 = sphi 0, %s140
      %s158 = sphi 0, %s158
      %s160 = sphi 0, %s158
      %s161 = sphi 0, %s160
      %s175 = sphi 0, %s161
      %s179 = sphi 0, %s179
      %s181 = sphi 0, %s179
      %s182 = sphi 0, %s181
      %s196 = sphi 0, %s182
    $region4: #{tpu_custom_call.1} parent=1 // loop_header_branch
      %17 = sbr.rel (%p15) target = $region8
    $region5: #{tpu_custom_call.1} parent=1 // loop_body
      %s19 = ssub.s32 %s14, 1
      %s20 = ssub.s32 %s14, 2
      %s21 = sadd.s32 %s14, 1
      %s22 = ssub.s32 %s14, %s21
      %p23 = scmp.eq.s32.totalorder %s22, 0
      %s25 = sadd.s32 %s24, 1
      %s26 = scalar_select %p23, %s24, %s25
      %p29 = pneg %p23
      %p30 = scmp.eq.s32.totalorder %s14, 1
      %p31 = por %p29, %p30
      %p32 = scmp.ne.s32.totalorder %s24, %s27
      %p33 = scmp.eq.s32.totalorder %s14, 0
      %p34 = por %p32, %p33
      %p35 = scmp.ne.s32.totalorder %s24, %s27
      %p36 = scmp.eq.s32.totalorder %s19, 1
      %p37 = por %p35, %p36
      %p38 = scmp.ne.s32.totalorder %s27, %s28
      %p39 = scmp.eq.s32.totalorder %s19, 0
      %p40 = por %p38, %p39
      %p41 = scmp.ne.s32.totalorder %s27, %s28
      %p42 = scmp.eq.s32.totalorder %s20, 1
      %p43 = por %p41, %p42
      %p45 = scmp.ne.s32.totalorder %s28, %s44
      %p46 = scmp.eq.s32.totalorder %s20, 0
      %p47 = por %p45, %p46
      %s48 = ssub.s32 %s14, %s21
      %p49 = scmp.eq.s32.totalorder %s48, 0
      %s51 = sadd.s32 %s50, 1
      %s52 = scalar_select %p49, %s50, %s51
      %p55 = pneg %p49
      %p56 = scmp.eq.s32.totalorder %s14, 1
      %p57 = por %p55, %p56
      %p58 = scmp.ne.s32.totalorder %s50, %s53
      %p59 = scmp.eq.s32.totalorder %s14, 0
      %p60 = por %p58, %p59
      %p61 = scmp.ne.s32.totalorder %s50, %s53
      %p62 = scmp.eq.s32.totalorder %s19, 1
      %p63 = por %p61, %p62
      %p64 = scmp.ne.s32.totalorder %s53, %s54
      %p65 = scmp.eq.s32.totalorder %s19, 0
      %p66 = por %p64, %p65
      %p67 = scmp.ne.s32.totalorder %s53, %s54
      %p68 = scmp.eq.s32.totalorder %s20, 1
      %p69 = por %p67, %p68
      %p71 = scmp.ne.s32.totalorder %s54, %s70
      %p72 = scmp.eq.s32.totalorder %s20, 0
      %p73 = por %p71, %p72
      %s75 = sadd.s32 %s74, 1
      %p78 = scmp.eq.s32.totalorder %s14, 1
      %p79 = scmp.ne.s32.totalorder %s74, %s76
      %p80 = scmp.eq.s32.totalorder %s14, 0
      %p81 = por %p79, %p80
      %p82 = scmp.ne.s32.totalorder %s74, %s76
      %p83 = scmp.eq.s32.totalorder %s19, 1
      %p84 = por %p82, %p83
      %p85 = scmp.ne.s32.totalorder %s76, %s77
      %p86 = scmp.eq.s32.totalorder %s19, 0
      %p87 = por %p85, %p86
      %p88 = scmp.ne.s32.totalorder %s76, %s77
      %p89 = scmp.eq.s32.totalorder %s20, 1
      %p90 = por %p88, %p89
      %p92 = scmp.ne.s32.totalorder %s77, %s91
      %p93 = scmp.eq.s32.totalorder %s20, 0
      %p94 = por %p92, %p93
      %s96 = sadd.s32 %s95, 1
      %p99 = scmp.eq.s32.totalorder %s14, 1
      %p100 = scmp.ne.s32.totalorder %s95, %s97
      %p101 = scmp.eq.s32.totalorder %s14, 0
      %p102 = por %p100, %p101
      %p103 = scmp.ne.s32.totalorder %s95, %s97
      %p104 = scmp.eq.s32.totalorder %s19, 1
      %p105 = por %p103, %p104
      %p106 = scmp.ne.s32.totalorder %s97, %s98
      %p107 = scmp.eq.s32.totalorder %s19, 0
      %p108 = por %p106, %p107
      %p109 = scmp.ne.s32.totalorder %s97, %s98
      %p110 = scmp.eq.s32.totalorder %s20, 1
      %p111 = por %p109, %p110
      %p113 = scmp.ne.s32.totalorder %s98, %s112
      %p114 = scmp.eq.s32.totalorder %s20, 0
      %p115 = por %p113, %p114
      %s117 = sadd.s32 %s116, 1
      %p120 = scmp.eq.s32.totalorder %s14, 1
      %p121 = scmp.ne.s32.totalorder %s116, %s118
      %p122 = scmp.eq.s32.totalorder %s14, 0
      %p123 = por %p121, %p122
      %p124 = scmp.ne.s32.totalorder %s116, %s118
      %p125 = scmp.eq.s32.totalorder %s19, 1
      %p126 = por %p124, %p125
      %p127 = scmp.ne.s32.totalorder %s118, %s119
      %p128 = scmp.eq.s32.totalorder %s19, 0
      %p129 = por %p127, %p128
      %p130 = scmp.ne.s32.totalorder %s118, %s119
      %p131 = scmp.eq.s32.totalorder %s20, 1
      %p132 = por %p130, %p131
      %p134 = scmp.ne.s32.totalorder %s119, %s133
      %p135 = scmp.eq.s32.totalorder %s20, 0
      %p136 = por %p134, %p135
      %s138 = sadd.s32 %s137, 1
      %p141 = scmp.eq.s32.totalorder %s14, 1
      %p142 = scmp.ne.s32.totalorder %s137, %s139
      %p143 = scmp.eq.s32.totalorder %s14, 0
      %p144 = por %p142, %p143
      %p145 = scmp.ne.s32.totalorder %s137, %s139
      %p146 = scmp.eq.s32.totalorder %s19, 1
      %p147 = por %p145, %p146
      %p148 = scmp.ne.s32.totalorder %s139, %s140
      %p149 = scmp.eq.s32.totalorder %s19, 0
      %p150 = por %p148, %p149
      %p151 = scmp.ne.s32.totalorder %s139, %s140
      %p152 = scmp.eq.s32.totalorder %s20, 1
      %p153 = por %p151, %p152
      %p155 = scmp.ne.s32.totalorder %s140, %s154
      %p156 = scmp.eq.s32.totalorder %s20, 0
      %p157 = por %p155, %p156
      %s159 = sadd.s32 %s158, 1
      %p162 = scmp.eq.s32.totalorder %s14, 1
      %p163 = scmp.ne.s32.totalorder %s158, %s160
      %p164 = scmp.eq.s32.totalorder %s14, 0
      %p165 = por %p163, %p164
      %p166 = scmp.ne.s32.totalorder %s158, %s160
      %p167 = scmp.eq.s32.totalorder %s19, 1
      %p168 = por %p166, %p167
      %p169 = scmp.ne.s32.totalorder %s160, %s161
      %p170 = scmp.eq.s32.totalorder %s19, 0
      %p171 = por %p169, %p170
      %p172 = scmp.ne.s32.totalorder %s160, %s161
      %p173 = scmp.eq.s32.totalorder %s20, 1
      %p174 = por %p172, %p173
      %p176 = scmp.ne.s32.totalorder %s161, %s175
      %p177 = scmp.eq.s32.totalorder %s20, 0
      %p178 = por %p176, %p177
      %s180 = sadd.s32 %s179, 1
      %p183 = scmp.eq.s32.totalorder %s14, 1
      %p184 = scmp.ne.s32.totalorder %s179, %s181
      %p185 = scmp.eq.s32.totalorder %s14, 0
      %p186 = por %p184, %p185
      %p187 = scmp.ne.s32.totalorder %s179, %s181
      %p188 = scmp.eq.s32.totalorder %s19, 1
      %p189 = por %p187, %p188
      %p190 = scmp.ne.s32.totalorder %s181, %s182
      %p191 = scmp.eq.s32.totalorder %s19, 0
      %p192 = por %p190, %p191
      %p193 = scmp.ne.s32.totalorder %s181, %s182
      %p194 = scmp.eq.s32.totalorder %s20, 1
      %p195 = por %p193, %p194
      %p197 = scmp.ne.s32.totalorder %s182, %s196
      %p198 = scmp.eq.s32.totalorder %s20, 0
      %p199 = por %p197, %p198
      %p200 = scmp.le.s32.totalorder 1, %s14
      %p201 = scmp.lt.s32.totalorder %s14, 3
      %p202 = pnand %p200, %p201
      %p203 = pneg %p202
      // Predicated region
      $region9: #{tpu_custom_call.1} parent=5 // pred_check
        _
      $region10: #{tpu_custom_call.1} parent=5 // pred_check_branch
        %205 = sbr.rel (%p202) target = $region12
      $region11: #{tpu_custom_call.1} parent=5 // pred_region
        %s206 = ssub.s32 %s14, 1
        // Predicated region
        $region13: #{tpu_custom_call.1} parent=11 // pred_check
          %p207 = pneg %p87
        $region14: #{tpu_custom_call.1} parent=11 // pred_check_branch
          %209 = sbr.rel (%p207) target = $region16
        $region15: #{tpu_custom_call.1} parent=11 // pred_region
          _
        $region16: #{tpu_custom_call.1} parent=11 // pred_fallthru
          _
        // Predicated region
        $region17: #{tpu_custom_call.1} parent=11 // pred_check
          %p210 = pneg %p108
        $region18: #{tpu_custom_call.1} parent=11 // pred_check_branch
          %212 = sbr.rel (%p210) target = $region20
        $region19: #{tpu_custom_call.1} parent=11 // pred_region
          _
        $region20: #{tpu_custom_call.1} parent=11 // pred_fallthru
          _
        // Predicated region
        $region21: #{tpu_custom_call.1} parent=11 // pred_check
          %p213 = pneg %p129
        $region22: #{tpu_custom_call.1} parent=11 // pred_check_branch
          %215 = sbr.rel (%p213) target = $region24
        $region23: #{tpu_custom_call.1} parent=11 // pred_region
          _
        $region24: #{tpu_custom_call.1} parent=11 // pred_fallthru
          _
        // Predicated region
        $region25: #{tpu_custom_call.1} parent=11 // pred_check
          %p216 = pneg %p150
        $region26: #{tpu_custom_call.1} parent=11 // pred_check_branch
          %218 = sbr.rel (%p216) target = $region28
        $region27: #{tpu_custom_call.1} parent=11 // pred_region
          _
        $region28: #{tpu_custom_call.1} parent=11 // pred_fallthru
          _
        // Predicated region
        $region29: #{tpu_custom_call.1} parent=11 // pred_check
          %p219 = pneg %p171
        $region30: #{tpu_custom_call.1} parent=11 // pred_check_branch
          %221 = sbr.rel (%p219) target = $region32
        $region31: #{tpu_custom_call.1} parent=11 // pred_region
          _
        $region32: #{tpu_custom_call.1} parent=11 // pred_fallthru
          _
      $region12: #{tpu_custom_call.1} parent=5 // pred_fallthru
        _
      %p222 = scmp.lt.s32.totalorder %s14, 2
      // Predicated region
      $region33: #{tpu_custom_call.1} parent=5 // pred_check
        %p223 = pneg %p222
      $region34: #{tpu_custom_call.1} parent=5 // pred_check_branch
        %225 = sbr.rel (%p223) target = $region36
      $region35: #{tpu_custom_call.1} parent=5 // pred_region
        // Predicated region
        $region37: #{tpu_custom_call.1} parent=35 // pred_check
          %p226 = pneg %p34
        $region38: #{tpu_custom_call.1} parent=35 // pred_check_branch
          %228 = sbr.rel (%p226) target = $region40
        $region39: #{tpu_custom_call.1} parent=35 // pred_region
          %s229 = smul.u32 64, %s14
          %p230 = scmp.lt.s32.totalorder %s229, 127
          %s231 = scalar_select %p230, %s229, 127
          %s232 = smul.addr %s231, 2
          %s233 = scalar_lea.vmem %s0, %s232
          %s234 = smul.u32 64, %s14
        $region40: #{tpu_custom_call.1} parent=35 // pred_fallthru
          _
        // Predicated region
        $region41: #{tpu_custom_call.1} parent=35 // pred_check
          %p235 = pneg %p60
        $region42: #{tpu_custom_call.1} parent=35 // pred_check_branch
          %237 = sbr.rel (%p235) target = $region44
        $region43: #{tpu_custom_call.1} parent=35 // pred_region
          %s238 = smul.u32 1024, %s14
          %p239 = scmp.lt.s32.totalorder %s238, 2047
          %s240 = scalar_select %p239, %s238, 2047
          %s241 = smul.addr %s240, 8
          %s242 = scalar_lea.vmem %s1, %s241
          %s243 = smul.u32 1024, %s14
        $region44: #{tpu_custom_call.1} parent=35 // pred_fallthru
          _
      $region36: #{tpu_custom_call.1} parent=5 // pred_fallthru
        _
      %p244 = scmp.le.s32.totalorder 1, %s14
      %p245 = scmp.lt.s32.totalorder %s14, 3
      %p246 = pnand %p244, %p245
      %p247 = pneg %p246
      // Predicated region
      $region45: #{tpu_custom_call.1} parent=5 // pred_check
        _
      $region46: #{tpu_custom_call.1} parent=5 // pred_check_branch
        %249 = sbr.rel (%p246) target = $region48
      $region47: #{tpu_custom_call.1} parent=5 // pred_region
        %s250 = ssub.s32 %s14, 1
        %s251 = smul.u32 64, %s19
        %p252 = scmp.lt.s32.totalorder %s251, 127
        %s253 = scalar_select %p252, %s251, 127
        %s254 = smul.addr %s253, 2
        %s255 = scalar_lea.vmem %s0, %s254
        %p256 = pneg %p40
        %p257 = pneg %p37
        %s258 = smul.u32 1024, %s19
        %p259 = scmp.lt.s32.totalorder %s258, 2047
        %s260 = scalar_select %p259, %s258, 2047
        %s261 = smul.addr %s260, 8
        %s262 = scalar_lea.vmem %s1, %s261
        %p263 = pneg %p66
        %p264 = pneg %p63
        %p265 = pneg %p87
        %p266 = pneg %p84
        %p267 = pneg %p108
        %p268 = pneg %p105
        %p269 = pneg %p129
        %p270 = pneg %p126
        %p271 = pneg %p150
        %p272 = pneg %p147
        %p273 = pneg %p171
        %p274 = pneg %p168
        %p275 = pneg %p192
        %p276 = pneg %p189
        %s277 = smul.u32 64, %s19
        %p278 = scmp.lt.s32.totalorder %s277, 127
        %s279 = scalar_select %p278, %s277, 127
        %s280 = smul.addr %s279, 2
        %s281 = scalar_lea.vmem %s0, %s280
        %s282 = smul.u32 64, %s19
        %s283 = smul.u32 1024, %s19
        %p284 = scmp.lt.s32.totalorder %s283, 2047
        %s285 = scalar_select %p284, %s283, 2047
        %s286 = smul.addr %s285, 8
        %s287 = scalar_lea.vmem %s1, %s286
        %s288 = smul.u32 1024, %s19
        %p289 = scmp.eq.s32.totalorder %s19, 0
        // Predicated region
        $region49: #{tpu_custom_call.1} parent=47 // pred_check
          %p290 = pneg %p289
        $region50: #{tpu_custom_call.1} parent=47 // pred_check_branch
          %292 = sbr.rel (%p290) target = $region52
        $region51: #{tpu_custom_call.1} parent=47 // pred_region
          %vm293 = vcmask 517120
          %294 = vst.msk [vmem:[#allocation2] sm:$0x3] %vm293, 0.0
        $region52: #{tpu_custom_call.1} parent=47 // pred_fallthru
          _
        %v295 = vld [vmem:[#allocation2] sm:$0x3]
        %v296 = vld [vmem:[%s281] sm:$0xff]
        %v297 = vld [vmem:[%s281 + $0x8] sm:$0xff]
        %v298 = vld [vmem:[%s281 + $0x10] sm:$0xff]
        %v299 = vld [vmem:[%s281 + $0x18] sm:$0xff]
        %v300 = vld [vmem:[%s281 + $0x20] sm:$0xff]
        %v301 = vld [vmem:[%s281 + $0x28] sm:$0xff]
        %v302 = vld [vmem:[%s281 + $0x30] sm:$0xff]
        %v303 = vld [vmem:[%s281 + $0x38] sm:$0xff]
        %v304 = vld [vmem:[%s281 + $0x40] sm:$0xff]
        %v305 = vld [vmem:[%s281 + $0x48] sm:$0xff]
        %v306 = vld [vmem:[%s281 + $0x50] sm:$0xff]
        %v307 = vld [vmem:[%s281 + $0x58] sm:$0xff]
        %v308 = vld [vmem:[%s281 + $0x60] sm:$0xff]
        %v309 = vld [vmem:[%s281 + $0x68] sm:$0xff]
        %v310 = vld [vmem:[%s281 + $0x70] sm:$0xff]
        %v311 = vld [vmem:[%s281 + $0x78] sm:$0xff]
        %v312 = vld [vmem:[%s287] sm:$0xff]
        %v313 = vld [vmem:[%s287 + $0x8] sm:$0xff]
        %v314 = vld [vmem:[%s287 + $0x10] sm:$0xff]
        %v315 = vld [vmem:[%s287 + $0x18] sm:$0xff]
        %v316 = vld [vmem:[%s287 + $0x20] sm:$0xff]
        %v317 = vld [vmem:[%s287 + $0x28] sm:$0xff]
        %v318 = vld [vmem:[%s287 + $0x30] sm:$0xff]
        %v319 = vld [vmem:[%s287 + $0x38] sm:$0xff]
        %v320 = vld [vmem:[%s287 + $0x40] sm:$0xff]
        %v321 = vld [vmem:[%s287 + $0x48] sm:$0xff]
        %v322 = vld [vmem:[%s287 + $0x50] sm:$0xff]
        %v323 = vld [vmem:[%s287 + $0x58] sm:$0xff]
        %v324 = vld [vmem:[%s287 + $0x60] sm:$0xff]
        %v325 = vld [vmem:[%s287 + $0x68] sm:$0xff]
        %v326 = vld [vmem:[%s287 + $0x70] sm:$0xff]
        %v327 = vld [vmem:[%s287 + $0x78] sm:$0xff]
        %v328 = vld [vmem:[%s287 + $0x80] sm:$0xff]
        %v329 = vld [vmem:[%s287 + $0x88] sm:$0xff]
        %v330 = vld [vmem:[%s287 + $0x90] sm:$0xff]
        %v331 = vld [vmem:[%s287 + $0x98] sm:$0xff]
        %v332 = vld [vmem:[%s287 + $0xa0] sm:$0xff]
        %v333 = vld [vmem:[%s287 + $0xa8] sm:$0xff]
        %v334 = vld [vmem:[%s287 + $0xb0] sm:$0xff]
        %v335 = vld [vmem:[%s287 + $0xb8] sm:$0xff]
        %v336 = vld [vmem:[%s287 + $0xc0] sm:$0xff]
        %v337 = vld [vmem:[%s287 + $0xc8] sm:$0xff]
        %v338 = vld [vmem:[%s287 + $0xd0] sm:$0xff]
        %v339 = vld [vmem:[%s287 + $0xd8] sm:$0xff]
        %v340 = vld [vmem:[%s287 + $0xe0] sm:$0xff]
        %v341 = vld [vmem:[%s287 + $0xe8] sm:$0xff]
        %v342 = vld [vmem:[%s287 + $0xf0] sm:$0xff]
        %v343 = vld [vmem:[%s287 + $0xf8] sm:$0xff]
        %v344 = vld [vmem:[%s287 + $0x100] sm:$0xff]
        %v345 = vld [vmem:[%s287 + $0x108] sm:$0xff]
        %v346 = vld [vmem:[%s287 + $0x110] sm:$0xff]
        %v347 = vld [vmem:[%s287 + $0x118] sm:$0xff]
        %v348 = vld [vmem:[%s287 + $0x120] sm:$0xff]
        %v349 = vld [vmem:[%s287 + $0x128] sm:$0xff]
        %v350 = vld [vmem:[%s287 + $0x130] sm:$0xff]
        %v351 = vld [vmem:[%s287 + $0x138] sm:$0xff]
        %v352 = vld [vmem:[%s287 + $0x140] sm:$0xff]
        %v353 = vld [vmem:[%s287 + $0x148] sm:$0xff]
        %v354 = vld [vmem:[%s287 + $0x150] sm:$0xff]
        %v355 = vld [vmem:[%s287 + $0x158] sm:$0xff]
        %v356 = vld [vmem:[%s287 + $0x160] sm:$0xff]
        %v357 = vld [vmem:[%s287 + $0x168] sm:$0xff]
        %v358 = vld [vmem:[%s287 + $0x170] sm:$0xff]
        %v359 = vld [vmem:[%s287 + $0x178] sm:$0xff]
        %v360 = vld [vmem:[%s287 + $0x180] sm:$0xff]
        %v361 = vld [vmem:[%s287 + $0x188] sm:$0xff]
        %v362 = vld [vmem:[%s287 + $0x190] sm:$0xff]
        %v363 = vld [vmem:[%s287 + $0x198] sm:$0xff]
        %v364 = vld [vmem:[%s287 + $0x1a0] sm:$0xff]
        %v365 = vld [vmem:[%s287 + $0x1a8] sm:$0xff]
        %v366 = vld [vmem:[%s287 + $0x1b0] sm:$0xff]
        %v367 = vld [vmem:[%s287 + $0x1b8] sm:$0xff]
        %v368 = vld [vmem:[%s287 + $0x1c0] sm:$0xff]
        %v369 = vld [vmem:[%s287 + $0x1c8] sm:$0xff]
        %v370 = vld [vmem:[%s287 + $0x1d0] sm:$0xff]
        %v371 = vld [vmem:[%s287 + $0x1d8] sm:$0xff]
        %v372 = vld [vmem:[%s287 + $0x1e0] sm:$0xff]
        %v373 = vld [vmem:[%s287 + $0x1e8] sm:$0xff]
        %v374 = vld [vmem:[%s287 + $0x1f0] sm:$0xff]
        %v375 = vld [vmem:[%s287 + $0x1f8] sm:$0xff]
        %v376 = vld [vmem:[%s287 + $0x200] sm:$0xff]
        %v377 = vld [vmem:[%s287 + $0x208] sm:$0xff]
        %v378 = vld [vmem:[%s287 + $0x210] sm:$0xff]
        %v379 = vld [vmem:[%s287 + $0x218] sm:$0xff]
        %v380 = vld [vmem:[%s287 + $0x220] sm:$0xff]
        %v381 = vld [vmem:[%s287 + $0x228] sm:$0xff]
        %v382 = vld [vmem:[%s287 + $0x230] sm:$0xff]
        %v383 = vld [vmem:[%s287 + $0x238] sm:$0xff]
        %v384 = vld [vmem:[%s287 + $0x240] sm:$0xff]
        %v385 = vld [vmem:[%s287 + $0x248] sm:$0xff]
        %v386 = vld [vmem:[%s287 + $0x250] sm:$0xff]
        %v387 = vld [vmem:[%s287 + $0x258] sm:$0xff]
        %v388 = vld [vmem:[%s287 + $0x260] sm:$0xff]
        %v389 = vld [vmem:[%s287 + $0x268] sm:$0xff]
        %v390 = vld [vmem:[%s287 + $0x270] sm:$0xff]
        %v391 = vld [vmem:[%s287 + $0x278] sm:$0xff]
        %v392 = vld [vmem:[%s287 + $0x280] sm:$0xff]
        %v393 = vld [vmem:[%s287 + $0x288] sm:$0xff]
        %v394 = vld [vmem:[%s287 + $0x290] sm:$0xff]
        %v395 = vld [vmem:[%s287 + $0x298] sm:$0xff]
        %v396 = vld [vmem:[%s287 + $0x2a0] sm:$0xff]
        %v397 = vld [vmem:[%s287 + $0x2a8] sm:$0xff]
        %v398 = vld [vmem:[%s287 + $0x2b0] sm:$0xff]
        %v399 = vld [vmem:[%s287 + $0x2b8] sm:$0xff]
        %v400 = vld [vmem:[%s287 + $0x2c0] sm:$0xff]
        %v401 = vld [vmem:[%s287 + $0x2c8] sm:$0xff]
        %v402 = vld [vmem:[%s287 + $0x2d0] sm:$0xff]
        %v403 = vld [vmem:[%s287 + $0x2d8] sm:$0xff]
        %v404 = vld [vmem:[%s287 + $0x2e0] sm:$0xff]
        %v405 = vld [vmem:[%s287 + $0x2e8] sm:$0xff]
        %v406 = vld [vmem:[%s287 + $0x2f0] sm:$0xff]
        %v407 = vld [vmem:[%s287 + $0x2f8] sm:$0xff]
        %v408 = vld [vmem:[%s287 + $0x300] sm:$0xff]
        %v409 = vld [vmem:[%s287 + $0x308] sm:$0xff]
        %v410 = vld [vmem:[%s287 + $0x310] sm:$0xff]
        %v411 = vld [vmem:[%s287 + $0x318] sm:$0xff]
        %v412 = vld [vmem:[%s287 + $0x320] sm:$0xff]
        %v413 = vld [vmem:[%s287 + $0x328] sm:$0xff]
        %v414 = vld [vmem:[%s287 + $0x330] sm:$0xff]
        %v415 = vld [vmem:[%s287 + $0x338] sm:$0xff]
        %v416 = vld [vmem:[%s287 + $0x340] sm:$0xff]
        %v417 = vld [vmem:[%s287 + $0x348] sm:$0xff]
        %v418 = vld [vmem:[%s287 + $0x350] sm:$0xff]
        %v419 = vld [vmem:[%s287 + $0x358] sm:$0xff]
        %v420 = vld [vmem:[%s287 + $0x360] sm:$0xff]
        %v421 = vld [vmem:[%s287 + $0x368] sm:$0xff]
        %v422 = vld [vmem:[%s287 + $0x370] sm:$0xff]
        %v423 = vld [vmem:[%s287 + $0x378] sm:$0xff]
        %v424 = vld [vmem:[%s287 + $0x380] sm:$0xff]
        %v425 = vld [vmem:[%s287 + $0x388] sm:$0xff]
        %v426 = vld [vmem:[%s287 + $0x390] sm:$0xff]
        %v427 = vld [vmem:[%s287 + $0x398] sm:$0xff]
        %v428 = vld [vmem:[%s287 + $0x3a0] sm:$0xff]
        %v429 = vld [vmem:[%s287 + $0x3a8] sm:$0xff]
        %v430 = vld [vmem:[%s287 + $0x3b0] sm:$0xff]
        %v431 = vld [vmem:[%s287 + $0x3b8] sm:$0xff]
        %v432 = vld [vmem:[%s287 + $0x3c0] sm:$0xff]
        %v433 = vld [vmem:[%s287 + $0x3c8] sm:$0xff]
        %v434 = vld [vmem:[%s287 + $0x3d0] sm:$0xff]
        %v435 = vld [vmem:[%s287 + $0x3d8] sm:$0xff]
        %v436 = vld [vmem:[%s287 + $0x3e0] sm:$0xff]
        %v437 = vld [vmem:[%s287 + $0x3e8] sm:$0xff]
        %v438 = vld [vmem:[%s287 + $0x3f0] sm:$0xff]
        %v439 = vld [vmem:[%s287 + $0x3f8] sm:$0xff]
        %v440 = vld [vmem:[%s287 + $0x400] sm:$0xff]
        %v441 = vld [vmem:[%s287 + $0x408] sm:$0xff]
        %v442 = vld [vmem:[%s287 + $0x410] sm:$0xff]
        %v443 = vld [vmem:[%s287 + $0x418] sm:$0xff]
        %v444 = vld [vmem:[%s287 + $0x420] sm:$0xff]
        %v445 = vld [vmem:[%s287 + $0x428] sm:$0xff]
        %v446 = vld [vmem:[%s287 + $0x430] sm:$0xff]
        %v447 = vld [vmem:[%s287 + $0x438] sm:$0xff]
        %v448 = vld [vmem:[%s287 + $0x440] sm:$0xff]
        %v449 = vld [vmem:[%s287 + $0x448] sm:$0xff]
        %v450 = vld [vmem:[%s287 + $0x450] sm:$0xff]
        %v451 = vld [vmem:[%s287 + $0x458] sm:$0xff]
        %v452 = vld [vmem:[%s287 + $0x460] sm:$0xff]
        %v453 = vld [vmem:[%s287 + $0x468] sm:$0xff]
        %v454 = vld [vmem:[%s287 + $0x470] sm:$0xff]
        %v455 = vld [vmem:[%s287 + $0x478] sm:$0xff]
        %v456 = vld [vmem:[%s287 + $0x480] sm:$0xff]
        %v457 = vld [vmem:[%s287 + $0x488] sm:$0xff]
        %v458 = vld [vmem:[%s287 + $0x490] sm:$0xff]
        %v459 = vld [vmem:[%s287 + $0x498] sm:$0xff]
        %v460 = vld [vmem:[%s287 + $0x4a0] sm:$0xff]
        %v461 = vld [vmem:[%s287 + $0x4a8] sm:$0xff]
        %v462 = vld [vmem:[%s287 + $0x4b0] sm:$0xff]
        %v463 = vld [vmem:[%s287 + $0x4b8] sm:$0xff]
        %v464 = vld [vmem:[%s287 + $0x4c0] sm:$0xff]
        %v465 = vld [vmem:[%s287 + $0x4c8] sm:$0xff]
        %v466 = vld [vmem:[%s287 + $0x4d0] sm:$0xff]
        %v467 = vld [vmem:[%s287 + $0x4d8] sm:$0xff]
        %v468 = vld [vmem:[%s287 + $0x4e0] sm:$0xff]
        %v469 = vld [vmem:[%s287 + $0x4e8] sm:$0xff]
        %v470 = vld [vmem:[%s287 + $0x4f0] sm:$0xff]
        %v471 = vld [vmem:[%s287 + $0x4f8] sm:$0xff]
        %v472 = vld [vmem:[%s287 + $0x500] sm:$0xff]
        %v473 = vld [vmem:[%s287 + $0x508] sm:$0xff]
        %v474 = vld [vmem:[%s287 + $0x510] sm:$0xff]
        %v475 = vld [vmem:[%s287 + $0x518] sm:$0xff]
        %v476 = vld [vmem:[%s287 + $0x520] sm:$0xff]
        %v477 = vld [vmem:[%s287 + $0x528] sm:$0xff]
        %v478 = vld [vmem:[%s287 + $0x530] sm:$0xff]
        %v479 = vld [vmem:[%s287 + $0x538] sm:$0xff]
        %v480 = vld [vmem:[%s287 + $0x540] sm:$0xff]
        %v481 = vld [vmem:[%s287 + $0x548] sm:$0xff]
        %v482 = vld [vmem:[%s287 + $0x550] sm:$0xff]
        %v483 = vld [vmem:[%s287 + $0x558] sm:$0xff]
        %v484 = vld [vmem:[%s287 + $0x560] sm:$0xff]
        %v485 = vld [vmem:[%s287 + $0x568] sm:$0xff]
        %v486 = vld [vmem:[%s287 + $0x570] sm:$0xff]
        %v487 = vld [vmem:[%s287 + $0x578] sm:$0xff]
        %v488 = vld [vmem:[%s287 + $0x580] sm:$0xff]
        %v489 = vld [vmem:[%s287 + $0x588] sm:$0xff]
        %v490 = vld [vmem:[%s287 + $0x590] sm:$0xff]
        %v491 = vld [vmem:[%s287 + $0x598] sm:$0xff]
        %v492 = vld [vmem:[%s287 + $0x5a0] sm:$0xff]
        %v493 = vld [vmem:[%s287 + $0x5a8] sm:$0xff]
        %v494 = vld [vmem:[%s287 + $0x5b0] sm:$0xff]
        %v495 = vld [vmem:[%s287 + $0x5b8] sm:$0xff]
        %v496 = vld [vmem:[%s287 + $0x5c0] sm:$0xff]
        %v497 = vld [vmem:[%s287 + $0x5c8] sm:$0xff]
        %v498 = vld [vmem:[%s287 + $0x5d0] sm:$0xff]
        %v499 = vld [vmem:[%s287 + $0x5d8] sm:$0xff]
        %v500 = vld [vmem:[%s287 + $0x5e0] sm:$0xff]
        %v501 = vld [vmem:[%s287 + $0x5e8] sm:$0xff]
        %v502 = vld [vmem:[%s287 + $0x5f0] sm:$0xff]
        %v503 = vld [vmem:[%s287 + $0x5f8] sm:$0xff]
        %v504 = vld [vmem:[%s287 + $0x600] sm:$0xff]
        %v505 = vld [vmem:[%s287 + $0x608] sm:$0xff]
        %v506 = vld [vmem:[%s287 + $0x610] sm:$0xff]
        %v507 = vld [vmem:[%s287 + $0x618] sm:$0xff]
        %v508 = vld [vmem:[%s287 + $0x620] sm:$0xff]
        %v509 = vld [vmem:[%s287 + $0x628] sm:$0xff]
        %v510 = vld [vmem:[%s287 + $0x630] sm:$0xff]
        %v511 = vld [vmem:[%s287 + $0x638] sm:$0xff]
        %v512 = vld [vmem:[%s287 + $0x640] sm:$0xff]
        %v513 = vld [vmem:[%s287 + $0x648] sm:$0xff]
        %v514 = vld [vmem:[%s287 + $0x650] sm:$0xff]
        %v515 = vld [vmem:[%s287 + $0x658] sm:$0xff]
        %v516 = vld [vmem:[%s287 + $0x660] sm:$0xff]
        %v517 = vld [vmem:[%s287 + $0x668] sm:$0xff]
        %v518 = vld [vmem:[%s287 + $0x670] sm:$0xff]
        %v519 = vld [vmem:[%s287 + $0x678] sm:$0xff]
        %v520 = vld [vmem:[%s287 + $0x680] sm:$0xff]
        %v521 = vld [vmem:[%s287 + $0x688] sm:$0xff]
        %v522 = vld [vmem:[%s287 + $0x690] sm:$0xff]
        %v523 = vld [vmem:[%s287 + $0x698] sm:$0xff]
        %v524 = vld [vmem:[%s287 + $0x6a0] sm:$0xff]
        %v525 = vld [vmem:[%s287 + $0x6a8] sm:$0xff]
        %v526 = vld [vmem:[%s287 + $0x6b0] sm:$0xff]
        %v527 = vld [vmem:[%s287 + $0x6b8] sm:$0xff]
        %v528 = vld [vmem:[%s287 + $0x6c0] sm:$0xff]
        %v529 = vld [vmem:[%s287 + $0x6c8] sm:$0xff]
        %v530 = vld [vmem:[%s287 + $0x6d0] sm:$0xff]
        %v531 = vld [vmem:[%s287 + $0x6d8] sm:$0xff]
        %v532 = vld [vmem:[%s287 + $0x6e0] sm:$0xff]
        %v533 = vld [vmem:[%s287 + $0x6e8] sm:$0xff]
        %v534 = vld [vmem:[%s287 + $0x6f0] sm:$0xff]
        %v535 = vld [vmem:[%s287 + $0x6f8] sm:$0xff]
        %v536 = vld [vmem:[%s287 + $0x700] sm:$0xff]
        %v537 = vld [vmem:[%s287 + $0x708] sm:$0xff]
        %v538 = vld [vmem:[%s287 + $0x710] sm:$0xff]
        %v539 = vld [vmem:[%s287 + $0x718] sm:$0xff]
        %v540 = vld [vmem:[%s287 + $0x720] sm:$0xff]
        %v541 = vld [vmem:[%s287 + $0x728] sm:$0xff]
        %v542 = vld [vmem:[%s287 + $0x730] sm:$0xff]
        %v543 = vld [vmem:[%s287 + $0x738] sm:$0xff]
        %v544 = vld [vmem:[%s287 + $0x740] sm:$0xff]
        %v545 = vld [vmem:[%s287 + $0x748] sm:$0xff]
        %v546 = vld [vmem:[%s287 + $0x750] sm:$0xff]
        %v547 = vld [vmem:[%s287 + $0x758] sm:$0xff]
        %v548 = vld [vmem:[%s287 + $0x760] sm:$0xff]
        %v549 = vld [vmem:[%s287 + $0x768] sm:$0xff]
        %v550 = vld [vmem:[%s287 + $0x770] sm:$0xff]
        %v551 = vld [vmem:[%s287 + $0x778] sm:$0xff]
        %v552 = vld [vmem:[%s287 + $0x780] sm:$0xff]
        %v553 = vld [vmem:[%s287 + $0x788] sm:$0xff]
        %v554 = vld [vmem:[%s287 + $0x790] sm:$0xff]
        %v555 = vld [vmem:[%s287 + $0x798] sm:$0xff]
        %v556 = vld [vmem:[%s287 + $0x7a0] sm:$0xff]
        %v557 = vld [vmem:[%s287 + $0x7a8] sm:$0xff]
        %v558 = vld [vmem:[%s287 + $0x7b0] sm:$0xff]
        %v559 = vld [vmem:[%s287 + $0x7b8] sm:$0xff]
        %v560 = vld [vmem:[%s287 + $0x7c0] sm:$0xff]
        %v561 = vld [vmem:[%s287 + $0x7c8] sm:$0xff]
        %v562 = vld [vmem:[%s287 + $0x7d0] sm:$0xff]
        %v563 = vld [vmem:[%s287 + $0x7d8] sm:$0xff]
        %v564 = vld [vmem:[%s287 + $0x7e0] sm:$0xff]
        %v565 = vld [vmem:[%s287 + $0x7e8] sm:$0xff]
        %v566 = vld [vmem:[%s287 + $0x7f0] sm:$0xff]
        %v567 = vld [vmem:[%s287 + $0x7f8] sm:$0xff]
        %v568 = vld [vmem:[%s287 + $0x800] sm:$0xff]
        %v569 = vld [vmem:[%s287 + $0x808] sm:$0xff]
        %v570 = vld [vmem:[%s287 + $0x810] sm:$0xff]
        %v571 = vld [vmem:[%s287 + $0x818] sm:$0xff]
        %v572 = vld [vmem:[%s287 + $0x820] sm:$0xff]
        %v573 = vld [vmem:[%s287 + $0x828] sm:$0xff]
        %v574 = vld [vmem:[%s287 + $0x830] sm:$0xff]
        %v575 = vld [vmem:[%s287 + $0x838] sm:$0xff]
        %v576 = vld [vmem:[%s287 + $0x840] sm:$0xff]
        %v577 = vld [vmem:[%s287 + $0x848] sm:$0xff]
        %v578 = vld [vmem:[%s287 + $0x850] sm:$0xff]
        %v579 = vld [vmem:[%s287 + $0x858] sm:$0xff]
        %v580 = vld [vmem:[%s287 + $0x860] sm:$0xff]
        %v581 = vld [vmem:[%s287 + $0x868] sm:$0xff]
        %v582 = vld [vmem:[%s287 + $0x870] sm:$0xff]
        %v583 = vld [vmem:[%s287 + $0x878] sm:$0xff]
        %v584 = vld [vmem:[%s287 + $0x880] sm:$0xff]
        %v585 = vld [vmem:[%s287 + $0x888] sm:$0xff]
        %v586 = vld [vmem:[%s287 + $0x890] sm:$0xff]
        %v587 = vld [vmem:[%s287 + $0x898] sm:$0xff]
        %v588 = vld [vmem:[%s287 + $0x8a0] sm:$0xff]
        %v589 = vld [vmem:[%s287 + $0x8a8] sm:$0xff]
        %v590 = vld [vmem:[%s287 + $0x8b0] sm:$0xff]
        %v591 = vld [vmem:[%s287 + $0x8b8] sm:$0xff]
        %v592 = vld [vmem:[%s287 + $0x8c0] sm:$0xff]
        %v593 = vld [vmem:[%s287 + $0x8c8] sm:$0xff]
        %v594 = vld [vmem:[%s287 + $0x8d0] sm:$0xff]
        %v595 = vld [vmem:[%s287 + $0x8d8] sm:$0xff]
        %v596 = vld [vmem:[%s287 + $0x8e0] sm:$0xff]
        %v597 = vld [vmem:[%s287 + $0x8e8] sm:$0xff]
        %v598 = vld [vmem:[%s287 + $0x8f0] sm:$0xff]
        %v599 = vld [vmem:[%s287 + $0x8f8] sm:$0xff]
        %v600 = vld [vmem:[%s287 + $0x900] sm:$0xff]
        %v601 = vld [vmem:[%s287 + $0x908] sm:$0xff]
        %v602 = vld [vmem:[%s287 + $0x910] sm:$0xff]
        %v603 = vld [vmem:[%s287 + $0x918] sm:$0xff]
        %v604 = vld [vmem:[%s287 + $0x920] sm:$0xff]
        %v605 = vld [vmem:[%s287 + $0x928] sm:$0xff]
        %v606 = vld [vmem:[%s287 + $0x930] sm:$0xff]
        %v607 = vld [vmem:[%s287 + $0x938] sm:$0xff]
        %v608 = vld [vmem:[%s287 + $0x940] sm:$0xff]
        %v609 = vld [vmem:[%s287 + $0x948] sm:$0xff]
        %v610 = vld [vmem:[%s287 + $0x950] sm:$0xff]
        %v611 = vld [vmem:[%s287 + $0x958] sm:$0xff]
        %v612 = vld [vmem:[%s287 + $0x960] sm:$0xff]
        %v613 = vld [vmem:[%s287 + $0x968] sm:$0xff]
        %v614 = vld [vmem:[%s287 + $0x970] sm:$0xff]
        %v615 = vld [vmem:[%s287 + $0x978] sm:$0xff]
        %v616 = vld [vmem:[%s287 + $0x980] sm:$0xff]
        %v617 = vld [vmem:[%s287 + $0x988] sm:$0xff]
        %v618 = vld [vmem:[%s287 + $0x990] sm:$0xff]
        %v619 = vld [vmem:[%s287 + $0x998] sm:$0xff]
        %v620 = vld [vmem:[%s287 + $0x9a0] sm:$0xff]
        %v621 = vld [vmem:[%s287 + $0x9a8] sm:$0xff]
        %v622 = vld [vmem:[%s287 + $0x9b0] sm:$0xff]
        %v623 = vld [vmem:[%s287 + $0x9b8] sm:$0xff]
        %v624 = vld [vmem:[%s287 + $0x9c0] sm:$0xff]
        %v625 = vld [vmem:[%s287 + $0x9c8] sm:$0xff]
        %v626 = vld [vmem:[%s287 + $0x9d0] sm:$0xff]
        %v627 = vld [vmem:[%s287 + $0x9d8] sm:$0xff]
        %v628 = vld [vmem:[%s287 + $0x9e0] sm:$0xff]
        %v629 = vld [vmem:[%s287 + $0x9e8] sm:$0xff]
        %v630 = vld [vmem:[%s287 + $0x9f0] sm:$0xff]
        %v631 = vld [vmem:[%s287 + $0x9f8] sm:$0xff]
        %v632 = vld [vmem:[%s287 + $0xa00] sm:$0xff]
        %v633 = vld [vmem:[%s287 + $0xa08] sm:$0xff]
        %v634 = vld [vmem:[%s287 + $0xa10] sm:$0xff]
        %v635 = vld [vmem:[%s287 + $0xa18] sm:$0xff]
        %v636 = vld [vmem:[%s287 + $0xa20] sm:$0xff]
        %v637 = vld [vmem:[%s287 + $0xa28] sm:$0xff]
        %v638 = vld [vmem:[%s287 + $0xa30] sm:$0xff]
        %v639 = vld [vmem:[%s287 + $0xa38] sm:$0xff]
        %v640 = vld [vmem:[%s287 + $0xa40] sm:$0xff]
        %v641 = vld [vmem:[%s287 + $0xa48] sm:$0xff]
        %v642 = vld [vmem:[%s287 + $0xa50] sm:$0xff]
        %v643 = vld [vmem:[%s287 + $0xa58] sm:$0xff]
        %v644 = vld [vmem:[%s287 + $0xa60] sm:$0xff]
        %v645 = vld [vmem:[%s287 + $0xa68] sm:$0xff]
        %v646 = vld [vmem:[%s287 + $0xa70] sm:$0xff]
        %v647 = vld [vmem:[%s287 + $0xa78] sm:$0xff]
        %v648 = vld [vmem:[%s287 + $0xa80] sm:$0xff]
        %v649 = vld [vmem:[%s287 + $0xa88] sm:$0xff]
        %v650 = vld [vmem:[%s287 + $0xa90] sm:$0xff]
        %v651 = vld [vmem:[%s287 + $0xa98] sm:$0xff]
        %v652 = vld [vmem:[%s287 + $0xaa0] sm:$0xff]
        %v653 = vld [vmem:[%s287 + $0xaa8] sm:$0xff]
        %v654 = vld [vmem:[%s287 + $0xab0] sm:$0xff]
        %v655 = vld [vmem:[%s287 + $0xab8] sm:$0xff]
        %v656 = vld [vmem:[%s287 + $0xac0] sm:$0xff]
        %v657 = vld [vmem:[%s287 + $0xac8] sm:$0xff]
        %v658 = vld [vmem:[%s287 + $0xad0] sm:$0xff]
        %v659 = vld [vmem:[%s287 + $0xad8] sm:$0xff]
        %v660 = vld [vmem:[%s287 + $0xae0] sm:$0xff]
        %v661 = vld [vmem:[%s287 + $0xae8] sm:$0xff]
        %v662 = vld [vmem:[%s287 + $0xaf0] sm:$0xff]
        %v663 = vld [vmem:[%s287 + $0xaf8] sm:$0xff]
        %v664 = vld [vmem:[%s287 + $0xb00] sm:$0xff]
        %v665 = vld [vmem:[%s287 + $0xb08] sm:$0xff]
        %v666 = vld [vmem:[%s287 + $0xb10] sm:$0xff]
        %v667 = vld [vmem:[%s287 + $0xb18] sm:$0xff]
        %v668 = vld [vmem:[%s287 + $0xb20] sm:$0xff]
        %v669 = vld [vmem:[%s287 + $0xb28] sm:$0xff]
        %v670 = vld [vmem:[%s287 + $0xb30] sm:$0xff]
        %v671 = vld [vmem:[%s287 + $0xb38] sm:$0xff]
        %v672 = vld [vmem:[%s287 + $0xb40] sm:$0xff]
        %v673 = vld [vmem:[%s287 + $0xb48] sm:$0xff]
        %v674 = vld [vmem:[%s287 + $0xb50] sm:$0xff]
        %v675 = vld [vmem:[%s287 + $0xb58] sm:$0xff]
        %v676 = vld [vmem:[%s287 + $0xb60] sm:$0xff]
        %v677 = vld [vmem:[%s287 + $0xb68] sm:$0xff]
        %v678 = vld [vmem:[%s287 + $0xb70] sm:$0xff]
        %v679 = vld [vmem:[%s287 + $0xb78] sm:$0xff]
        %v680 = vld [vmem:[%s287 + $0xb80] sm:$0xff]
        %v681 = vld [vmem:[%s287 + $0xb88] sm:$0xff]
        %v682 = vld [vmem:[%s287 + $0xb90] sm:$0xff]
        %v683 = vld [vmem:[%s287 + $0xb98] sm:$0xff]
        %v684 = vld [vmem:[%s287 + $0xba0] sm:$0xff]
        %v685 = vld [vmem:[%s287 + $0xba8] sm:$0xff]
        %v686 = vld [vmem:[%s287 + $0xbb0] sm:$0xff]
        %v687 = vld [vmem:[%s287 + $0xbb8] sm:$0xff]
        %v688 = vld [vmem:[%s287 + $0xbc0] sm:$0xff]
        %v689 = vld [vmem:[%s287 + $0xbc8] sm:$0xff]
        %v690 = vld [vmem:[%s287 + $0xbd0] sm:$0xff]
        %v691 = vld [vmem:[%s287 + $0xbd8] sm:$0xff]
        %v692 = vld [vmem:[%s287 + $0xbe0] sm:$0xff]
        %v693 = vld [vmem:[%s287 + $0xbe8] sm:$0xff]
        %v694 = vld [vmem:[%s287 + $0xbf0] sm:$0xff]
        %v695 = vld [vmem:[%s287 + $0xbf8] sm:$0xff]
        %v696 = vld [vmem:[%s287 + $0xc00] sm:$0xff]
        %v697 = vld [vmem:[%s287 + $0xc08] sm:$0xff]
        %v698 = vld [vmem:[%s287 + $0xc10] sm:$0xff]
        %v699 = vld [vmem:[%s287 + $0xc18] sm:$0xff]
        %v700 = vld [vmem:[%s287 + $0xc20] sm:$0xff]
        %v701 = vld [vmem:[%s287 + $0xc28] sm:$0xff]
        %v702 = vld [vmem:[%s287 + $0xc30] sm:$0xff]
        %v703 = vld [vmem:[%s287 + $0xc38] sm:$0xff]
        %v704 = vld [vmem:[%s287 + $0xc40] sm:$0xff]
        %v705 = vld [vmem:[%s287 + $0xc48] sm:$0xff]
        %v706 = vld [vmem:[%s287 + $0xc50] sm:$0xff]
        %v707 = vld [vmem:[%s287 + $0xc58] sm:$0xff]
        %v708 = vld [vmem:[%s287 + $0xc60] sm:$0xff]
        %v709 = vld [vmem:[%s287 + $0xc68] sm:$0xff]
        %v710 = vld [vmem:[%s287 + $0xc70] sm:$0xff]
        %v711 = vld [vmem:[%s287 + $0xc78] sm:$0xff]
        %v712 = vld [vmem:[%s287 + $0xc80] sm:$0xff]
        %v713 = vld [vmem:[%s287 + $0xc88] sm:$0xff]
        %v714 = vld [vmem:[%s287 + $0xc90] sm:$0xff]
        %v715 = vld [vmem:[%s287 + $0xc98] sm:$0xff]
        %v716 = vld [vmem:[%s287 + $0xca0] sm:$0xff]
        %v717 = vld [vmem:[%s287 + $0xca8] sm:$0xff]
        %v718 = vld [vmem:[%s287 + $0xcb0] sm:$0xff]
        %v719 = vld [vmem:[%s287 + $0xcb8] sm:$0xff]
        %v720 = vld [vmem:[%s287 + $0xcc0] sm:$0xff]
        %v721 = vld [vmem:[%s287 + $0xcc8] sm:$0xff]
        %v722 = vld [vmem:[%s287 + $0xcd0] sm:$0xff]
        %v723 = vld [vmem:[%s287 + $0xcd8] sm:$0xff]
        %v724 = vld [vmem:[%s287 + $0xce0] sm:$0xff]
        %v725 = vld [vmem:[%s287 + $0xce8] sm:$0xff]
        %v726 = vld [vmem:[%s287 + $0xcf0] sm:$0xff]
        %v727 = vld [vmem:[%s287 + $0xcf8] sm:$0xff]
        %v728 = vld [vmem:[%s287 + $0xd00] sm:$0xff]
        %v729 = vld [vmem:[%s287 + $0xd08] sm:$0xff]
        %v730 = vld [vmem:[%s287 + $0xd10] sm:$0xff]
        %v731 = vld [vmem:[%s287 + $0xd18] sm:$0xff]
        %v732 = vld [vmem:[%s287 + $0xd20] sm:$0xff]
        %v733 = vld [vmem:[%s287 + $0xd28] sm:$0xff]
        %v734 = vld [vmem:[%s287 + $0xd30] sm:$0xff]
        %v735 = vld [vmem:[%s287 + $0xd38] sm:$0xff]
        %v736 = vld [vmem:[%s287 + $0xd40] sm:$0xff]
        %v737 = vld [vmem:[%s287 + $0xd48] sm:$0xff]
        %v738 = vld [vmem:[%s287 + $0xd50] sm:$0xff]
        %v739 = vld [vmem:[%s287 + $0xd58] sm:$0xff]
        %v740 = vld [vmem:[%s287 + $0xd60] sm:$0xff]
        %v741 = vld [vmem:[%s287 + $0xd68] sm:$0xff]
        %v742 = vld [vmem:[%s287 + $0xd70] sm:$0xff]
        %v743 = vld [vmem:[%s287 + $0xd78] sm:$0xff]
        %v744 = vld [vmem:[%s287 + $0xd80] sm:$0xff]
        %v745 = vld [vmem:[%s287 + $0xd88] sm:$0xff]
        %v746 = vld [vmem:[%s287 + $0xd90] sm:$0xff]
        %v747 = vld [vmem:[%s287 + $0xd98] sm:$0xff]
        %v748 = vld [vmem:[%s287 + $0xda0] sm:$0xff]
        %v749 = vld [vmem:[%s287 + $0xda8] sm:$0xff]
        %v750 = vld [vmem:[%s287 + $0xdb0] sm:$0xff]
        %v751 = vld [vmem:[%s287 + $0xdb8] sm:$0xff]
        %v752 = vld [vmem:[%s287 + $0xdc0] sm:$0xff]
        %v753 = vld [vmem:[%s287 + $0xdc8] sm:$0xff]
        %v754 = vld [vmem:[%s287 + $0xdd0] sm:$0xff]
        %v755 = vld [vmem:[%s287 + $0xdd8] sm:$0xff]
        %v756 = vld [vmem:[%s287 + $0xde0] sm:$0xff]
        %v757 = vld [vmem:[%s287 + $0xde8] sm:$0xff]
        %v758 = vld [vmem:[%s287 + $0xdf0] sm:$0xff]
        %v759 = vld [vmem:[%s287 + $0xdf8] sm:$0xff]
        %v760 = vld [vmem:[%s287 + $0xe00] sm:$0xff]
        %v761 = vld [vmem:[%s287 + $0xe08] sm:$0xff]
        %v762 = vld [vmem:[%s287 + $0xe10] sm:$0xff]
        %v763 = vld [vmem:[%s287 + $0xe18] sm:$0xff]
        %v764 = vld [vmem:[%s287 + $0xe20] sm:$0xff]
        %v765 = vld [vmem:[%s287 + $0xe28] sm:$0xff]
        %v766 = vld [vmem:[%s287 + $0xe30] sm:$0xff]
        %v767 = vld [vmem:[%s287 + $0xe38] sm:$0xff]
        %v768 = vld [vmem:[%s287 + $0xe40] sm:$0xff]
        %v769 = vld [vmem:[%s287 + $0xe48] sm:$0xff]
        %v770 = vld [vmem:[%s287 + $0xe50] sm:$0xff]
        %v771 = vld [vmem:[%s287 + $0xe58] sm:$0xff]
        %v772 = vld [vmem:[%s287 + $0xe60] sm:$0xff]
        %v773 = vld [vmem:[%s287 + $0xe68] sm:$0xff]
        %v774 = vld [vmem:[%s287 + $0xe70] sm:$0xff]
        %v775 = vld [vmem:[%s287 + $0xe78] sm:$0xff]
        %v776 = vld [vmem:[%s287 + $0xe80] sm:$0xff]
        %v777 = vld [vmem:[%s287 + $0xe88] sm:$0xff]
        %v778 = vld [vmem:[%s287 + $0xe90] sm:$0xff]
        %v779 = vld [vmem:[%s287 + $0xe98] sm:$0xff]
        %v780 = vld [vmem:[%s287 + $0xea0] sm:$0xff]
        %v781 = vld [vmem:[%s287 + $0xea8] sm:$0xff]
        %v782 = vld [vmem:[%s287 + $0xeb0] sm:$0xff]
        %v783 = vld [vmem:[%s287 + $0xeb8] sm:$0xff]
        %v784 = vld [vmem:[%s287 + $0xec0] sm:$0xff]
        %v785 = vld [vmem:[%s287 + $0xec8] sm:$0xff]
        %v786 = vld [vmem:[%s287 + $0xed0] sm:$0xff]
        %v787 = vld [vmem:[%s287 + $0xed8] sm:$0xff]
        %v788 = vld [vmem:[%s287 + $0xee0] sm:$0xff]
        %v789 = vld [vmem:[%s287 + $0xee8] sm:$0xff]
        %v790 = vld [vmem:[%s287 + $0xef0] sm:$0xff]
        %v791 = vld [vmem:[%s287 + $0xef8] sm:$0xff]
        %v792 = vld [vmem:[%s287 + $0xf00] sm:$0xff]
        %v793 = vld [vmem:[%s287 + $0xf08] sm:$0xff]
        %v794 = vld [vmem:[%s287 + $0xf10] sm:$0xff]
        %v795 = vld [vmem:[%s287 + $0xf18] sm:$0xff]
        %v796 = vld [vmem:[%s287 + $0xf20] sm:$0xff]
        %v797 = vld [vmem:[%s287 + $0xf28] sm:$0xff]
        %v798 = vld [vmem:[%s287 + $0xf30] sm:$0xff]
        %v799 = vld [vmem:[%s287 + $0xf38] sm:$0xff]
        %v800 = vld [vmem:[%s287 + $0xf40] sm:$0xff]
        %v801 = vld [vmem:[%s287 + $0xf48] sm:$0xff]
        %v802 = vld [vmem:[%s287 + $0xf50] sm:$0xff]
        %v803 = vld [vmem:[%s287 + $0xf58] sm:$0xff]
        %v804 = vld [vmem:[%s287 + $0xf60] sm:$0xff]
        %v805 = vld [vmem:[%s287 + $0xf68] sm:$0xff]
        %v806 = vld [vmem:[%s287 + $0xf70] sm:$0xff]
        %v807 = vld [vmem:[%s287 + $0xf78] sm:$0xff]
        %v808 = vld [vmem:[%s287 + $0xf80] sm:$0xff]
        %v809 = vld [vmem:[%s287 + $0xf88] sm:$0xff]
        %v810 = vld [vmem:[%s287 + $0xf90] sm:$0xff]
        %v811 = vld [vmem:[%s287 + $0xf98] sm:$0xff]
        %v812 = vld [vmem:[%s287 + $0xfa0] sm:$0xff]
        %v813 = vld [vmem:[%s287 + $0xfa8] sm:$0xff]
        %v814 = vld [vmem:[%s287 + $0xfb0] sm:$0xff]
        %v815 = vld [vmem:[%s287 + $0xfb8] sm:$0xff]
        %v816 = vld [vmem:[%s287 + $0xfc0] sm:$0xff]
        %v817 = vld [vmem:[%s287 + $0xfc8] sm:$0xff]
        %v818 = vld [vmem:[%s287 + $0xfd0] sm:$0xff]
        %v819 = vld [vmem:[%s287 + $0xfd8] sm:$0xff]
        %v820 = vld [vmem:[%s287 + $0xfe0] sm:$0xff]
        %v821 = vld [vmem:[%s287 + $0xfe8] sm:$0xff]
        %v822 = vld [vmem:[%s287 + $0xff0] sm:$0xff]
        %v823 = vld [vmem:[%s287 + $0xff8] sm:$0xff]
        %v824 = vld [vmem:[%s287 + $0x1000] sm:$0xff]
        %v825 = vld [vmem:[%s287 + $0x1008] sm:$0xff]
        %v826 = vld [vmem:[%s287 + $0x1010] sm:$0xff]
        %v827 = vld [vmem:[%s287 + $0x1018] sm:$0xff]
        %v828 = vld [vmem:[%s287 + $0x1020] sm:$0xff]
        %v829 = vld [vmem:[%s287 + $0x1028] sm:$0xff]
        %v830 = vld [vmem:[%s287 + $0x1030] sm:$0xff]
        %v831 = vld [vmem:[%s287 + $0x1038] sm:$0xff]
        %v832 = vld [vmem:[%s287 + $0x1040] sm:$0xff]
        %v833 = vld [vmem:[%s287 + $0x1048] sm:$0xff]
        %v834 = vld [vmem:[%s287 + $0x1050] sm:$0xff]
        %v835 = vld [vmem:[%s287 + $0x1058] sm:$0xff]
        %v836 = vld [vmem:[%s287 + $0x1060] sm:$0xff]
        %v837 = vld [vmem:[%s287 + $0x1068] sm:$0xff]
        %v838 = vld [vmem:[%s287 + $0x1070] sm:$0xff]
        %v839 = vld [vmem:[%s287 + $0x1078] sm:$0xff]
        %v840 = vld [vmem:[%s287 + $0x1080] sm:$0xff]
        %v841 = vld [vmem:[%s287 + $0x1088] sm:$0xff]
        %v842 = vld [vmem:[%s287 + $0x1090] sm:$0xff]
        %v843 = vld [vmem:[%s287 + $0x1098] sm:$0xff]
        %v844 = vld [vmem:[%s287 + $0x10a0] sm:$0xff]
        %v845 = vld [vmem:[%s287 + $0x10a8] sm:$0xff]
        %v846 = vld [vmem:[%s287 + $0x10b0] sm:$0xff]
        %v847 = vld [vmem:[%s287 + $0x10b8] sm:$0xff]
        %v848 = vld [vmem:[%s287 + $0x10c0] sm:$0xff]
        %v849 = vld [vmem:[%s287 + $0x10c8] sm:$0xff]
        %v850 = vld [vmem:[%s287 + $0x10d0] sm:$0xff]
        %v851 = vld [vmem:[%s287 + $0x10d8] sm:$0xff]
        %v852 = vld [vmem:[%s287 + $0x10e0] sm:$0xff]
        %v853 = vld [vmem:[%s287 + $0x10e8] sm:$0xff]
        %v854 = vld [vmem:[%s287 + $0x10f0] sm:$0xff]
        %v855 = vld [vmem:[%s287 + $0x10f8] sm:$0xff]
        %v856 = vld [vmem:[%s287 + $0x1100] sm:$0xff]
        %v857 = vld [vmem:[%s287 + $0x1108] sm:$0xff]
        %v858 = vld [vmem:[%s287 + $0x1110] sm:$0xff]
        %v859 = vld [vmem:[%s287 + $0x1118] sm:$0xff]
        %v860 = vld [vmem:[%s287 + $0x1120] sm:$0xff]
        %v861 = vld [vmem:[%s287 + $0x1128] sm:$0xff]
        %v862 = vld [vmem:[%s287 + $0x1130] sm:$0xff]
        %v863 = vld [vmem:[%s287 + $0x1138] sm:$0xff]
        %v864 = vld [vmem:[%s287 + $0x1140] sm:$0xff]
        %v865 = vld [vmem:[%s287 + $0x1148] sm:$0xff]
        %v866 = vld [vmem:[%s287 + $0x1150] sm:$0xff]
        %v867 = vld [vmem:[%s287 + $0x1158] sm:$0xff]
        %v868 = vld [vmem:[%s287 + $0x1160] sm:$0xff]
        %v869 = vld [vmem:[%s287 + $0x1168] sm:$0xff]
        %v870 = vld [vmem:[%s287 + $0x1170] sm:$0xff]
        %v871 = vld [vmem:[%s287 + $0x1178] sm:$0xff]
        %v872 = vld [vmem:[%s287 + $0x1180] sm:$0xff]
        %v873 = vld [vmem:[%s287 + $0x1188] sm:$0xff]
        %v874 = vld [vmem:[%s287 + $0x1190] sm:$0xff]
        %v875 = vld [vmem:[%s287 + $0x1198] sm:$0xff]
        %v876 = vld [vmem:[%s287 + $0x11a0] sm:$0xff]
        %v877 = vld [vmem:[%s287 + $0x11a8] sm:$0xff]
        %v878 = vld [vmem:[%s287 + $0x11b0] sm:$0xff]
        %v879 = vld [vmem:[%s287 + $0x11b8] sm:$0xff]
        %v880 = vld [vmem:[%s287 + $0x11c0] sm:$0xff]
        %v881 = vld [vmem:[%s287 + $0x11c8] sm:$0xff]
        %v882 = vld [vmem:[%s287 + $0x11d0] sm:$0xff]
        %v883 = vld [vmem:[%s287 + $0x11d8] sm:$0xff]
        %v884 = vld [vmem:[%s287 + $0x11e0] sm:$0xff]
        %v885 = vld [vmem:[%s287 + $0x11e8] sm:$0xff]
        %v886 = vld [vmem:[%s287 + $0x11f0] sm:$0xff]
        %v887 = vld [vmem:[%s287 + $0x11f8] sm:$0xff]
        %v888 = vld [vmem:[%s287 + $0x1200] sm:$0xff]
        %v889 = vld [vmem:[%s287 + $0x1208] sm:$0xff]
        %v890 = vld [vmem:[%s287 + $0x1210] sm:$0xff]
        %v891 = vld [vmem:[%s287 + $0x1218] sm:$0xff]
        %v892 = vld [vmem:[%s287 + $0x1220] sm:$0xff]
        %v893 = vld [vmem:[%s287 + $0x1228] sm:$0xff]
        %v894 = vld [vmem:[%s287 + $0x1230] sm:$0xff]
        %v895 = vld [vmem:[%s287 + $0x1238] sm:$0xff]
        %v896 = vld [vmem:[%s287 + $0x1240] sm:$0xff]
        %v897 = vld [vmem:[%s287 + $0x1248] sm:$0xff]
        %v898 = vld [vmem:[%s287 + $0x1250] sm:$0xff]
        %v899 = vld [vmem:[%s287 + $0x1258] sm:$0xff]
        %v900 = vld [vmem:[%s287 + $0x1260] sm:$0xff]
        %v901 = vld [vmem:[%s287 + $0x1268] sm:$0xff]
        %v902 = vld [vmem:[%s287 + $0x1270] sm:$0xff]
        %v903 = vld [vmem:[%s287 + $0x1278] sm:$0xff]
        %v904 = vld [vmem:[%s287 + $0x1280] sm:$0xff]
        %v905 = vld [vmem:[%s287 + $0x1288] sm:$0xff]
        %v906 = vld [vmem:[%s287 + $0x1290] sm:$0xff]
        %v907 = vld [vmem:[%s287 + $0x1298] sm:$0xff]
        %v908 = vld [vmem:[%s287 + $0x12a0] sm:$0xff]
        %v909 = vld [vmem:[%s287 + $0x12a8] sm:$0xff]
        %v910 = vld [vmem:[%s287 + $0x12b0] sm:$0xff]
        %v911 = vld [vmem:[%s287 + $0x12b8] sm:$0xff]
        %v912 = vld [vmem:[%s287 + $0x12c0] sm:$0xff]
        %v913 = vld [vmem:[%s287 + $0x12c8] sm:$0xff]
        %v914 = vld [vmem:[%s287 + $0x12d0] sm:$0xff]
        %v915 = vld [vmem:[%s287 + $0x12d8] sm:$0xff]
        %v916 = vld [vmem:[%s287 + $0x12e0] sm:$0xff]
        %v917 = vld [vmem:[%s287 + $0x12e8] sm:$0xff]
        %v918 = vld [vmem:[%s287 + $0x12f0] sm:$0xff]
        %v919 = vld [vmem:[%s287 + $0x12f8] sm:$0xff]
        %v920 = vld [vmem:[%s287 + $0x1300] sm:$0xff]
        %v921 = vld [vmem:[%s287 + $0x1308] sm:$0xff]
        %v922 = vld [vmem:[%s287 + $0x1310] sm:$0xff]
        %v923 = vld [vmem:[%s287 + $0x1318] sm:$0xff]
        %v924 = vld [vmem:[%s287 + $0x1320] sm:$0xff]
        %v925 = vld [vmem:[%s287 + $0x1328] sm:$0xff]
        %v926 = vld [vmem:[%s287 + $0x1330] sm:$0xff]
        %v927 = vld [vmem:[%s287 + $0x1338] sm:$0xff]
        %v928 = vld [vmem:[%s287 + $0x1340] sm:$0xff]
        %v929 = vld [vmem:[%s287 + $0x1348] sm:$0xff]
        %v930 = vld [vmem:[%s287 + $0x1350] sm:$0xff]
        %v931 = vld [vmem:[%s287 + $0x1358] sm:$0xff]
        %v932 = vld [vmem:[%s287 + $0x1360] sm:$0xff]
        %v933 = vld [vmem:[%s287 + $0x1368] sm:$0xff]
        %v934 = vld [vmem:[%s287 + $0x1370] sm:$0xff]
        %v935 = vld [vmem:[%s287 + $0x1378] sm:$0xff]
        %v936 = vld [vmem:[%s287 + $0x1380] sm:$0xff]
        %v937 = vld [vmem:[%s287 + $0x1388] sm:$0xff]
        %v938 = vld [vmem:[%s287 + $0x1390] sm:$0xff]
        %v939 = vld [vmem:[%s287 + $0x1398] sm:$0xff]
        %v940 = vld [vmem:[%s287 + $0x13a0] sm:$0xff]
        %v941 = vld [vmem:[%s287 + $0x13a8] sm:$0xff]
        %v942 = vld [vmem:[%s287 + $0x13b0] sm:$0xff]
        %v943 = vld [vmem:[%s287 + $0x13b8] sm:$0xff]
        %v944 = vld [vmem:[%s287 + $0x13c0] sm:$0xff]
        %v945 = vld [vmem:[%s287 + $0x13c8] sm:$0xff]
        %v946 = vld [vmem:[%s287 + $0x13d0] sm:$0xff]
        %v947 = vld [vmem:[%s287 + $0x13d8] sm:$0xff]
        %v948 = vld [vmem:[%s287 + $0x13e0] sm:$0xff]
        %v949 = vld [vmem:[%s287 + $0x13e8] sm:$0xff]
        %v950 = vld [vmem:[%s287 + $0x13f0] sm:$0xff]
        %v951 = vld [vmem:[%s287 + $0x13f8] sm:$0xff]
        %v952 = vld [vmem:[%s287 + $0x1400] sm:$0xff]
        %v953 = vld [vmem:[%s287 + $0x1408] sm:$0xff]
        %v954 = vld [vmem:[%s287 + $0x1410] sm:$0xff]
        %v955 = vld [vmem:[%s287 + $0x1418] sm:$0xff]
        %v956 = vld [vmem:[%s287 + $0x1420] sm:$0xff]
        %v957 = vld [vmem:[%s287 + $0x1428] sm:$0xff]
        %v958 = vld [vmem:[%s287 + $0x1430] sm:$0xff]
        %v959 = vld [vmem:[%s287 + $0x1438] sm:$0xff]
        %v960 = vld [vmem:[%s287 + $0x1440] sm:$0xff]
        %v961 = vld [vmem:[%s287 + $0x1448] sm:$0xff]
        %v962 = vld [vmem:[%s287 + $0x1450] sm:$0xff]
        %v963 = vld [vmem:[%s287 + $0x1458] sm:$0xff]
        %v964 = vld [vmem:[%s287 + $0x1460] sm:$0xff]
        %v965 = vld [vmem:[%s287 + $0x1468] sm:$0xff]
        %v966 = vld [vmem:[%s287 + $0x1470] sm:$0xff]
        %v967 = vld [vmem:[%s287 + $0x1478] sm:$0xff]
        %v968 = vld [vmem:[%s287 + $0x1480] sm:$0xff]
        %v969 = vld [vmem:[%s287 + $0x1488] sm:$0xff]
        %v970 = vld [vmem:[%s287 + $0x1490] sm:$0xff]
        %v971 = vld [vmem:[%s287 + $0x1498] sm:$0xff]
        %v972 = vld [vmem:[%s287 + $0x14a0] sm:$0xff]
        %v973 = vld [vmem:[%s287 + $0x14a8] sm:$0xff]
        %v974 = vld [vmem:[%s287 + $0x14b0] sm:$0xff]
        %v975 = vld [vmem:[%s287 + $0x14b8] sm:$0xff]
        %v976 = vld [vmem:[%s287 + $0x14c0] sm:$0xff]
        %v977 = vld [vmem:[%s287 + $0x14c8] sm:$0xff]
        %v978 = vld [vmem:[%s287 + $0x14d0] sm:$0xff]
        %v979 = vld [vmem:[%s287 + $0x14d8] sm:$0xff]
        %v980 = vld [vmem:[%s287 + $0x14e0] sm:$0xff]
        %v981 = vld [vmem:[%s287 + $0x14e8] sm:$0xff]
        %v982 = vld [vmem:[%s287 + $0x14f0] sm:$0xff]
        %v983 = vld [vmem:[%s287 + $0x14f8] sm:$0xff]
        %v984 = vld [vmem:[%s287 + $0x1500] sm:$0xff]
        %v985 = vld [vmem:[%s287 + $0x1508] sm:$0xff]
        %v986 = vld [vmem:[%s287 + $0x1510] sm:$0xff]
        %v987 = vld [vmem:[%s287 + $0x1518] sm:$0xff]
        %v988 = vld [vmem:[%s287 + $0x1520] sm:$0xff]
        %v989 = vld [vmem:[%s287 + $0x1528] sm:$0xff]
        %v990 = vld [vmem:[%s287 + $0x1530] sm:$0xff]
        %v991 = vld [vmem:[%s287 + $0x1538] sm:$0xff]
        %v992 = vld [vmem:[%s287 + $0x1540] sm:$0xff]
        %v993 = vld [vmem:[%s287 + $0x1548] sm:$0xff]
        %v994 = vld [vmem:[%s287 + $0x1550] sm:$0xff]
        %v995 = vld [vmem:[%s287 + $0x1558] sm:$0xff]
        %v996 = vld [vmem:[%s287 + $0x1560] sm:$0xff]
        %v997 = vld [vmem:[%s287 + $0x1568] sm:$0xff]
        %v998 = vld [vmem:[%s287 + $0x1570] sm:$0xff]
        %v999 = vld [vmem:[%s287 + $0x1578] sm:$0xff]
        %v1000 = vld [vmem:[%s287 + $0x1580] sm:$0xff]
        %v1001 = vld [vmem:[%s287 + $0x1588] sm:$0xff]
        %v1002 = vld [vmem:[%s287 + $0x1590] sm:$0xff]
        %v1003 = vld [vmem:[%s287 + $0x1598] sm:$0xff]
        %v1004 = vld [vmem:[%s287 + $0x15a0] sm:$0xff]
        %v1005 = vld [vmem:[%s287 + $0x15a8] sm:$0xff]
        %v1006 = vld [vmem:[%s287 + $0x15b0] sm:$0xff]
        %v1007 = vld [vmem:[%s287 + $0x15b8] sm:$0xff]
        %v1008 = vld [vmem:[%s287 + $0x15c0] sm:$0xff]
        %v1009 = vld [vmem:[%s287 + $0x15c8] sm:$0xff]
        %v1010 = vld [vmem:[%s287 + $0x15d0] sm:$0xff]
        %v1011 = vld [vmem:[%s287 + $0x15d8] sm:$0xff]
        %v1012 = vld [vmem:[%s287 + $0x15e0] sm:$0xff]
        %v1013 = vld [vmem:[%s287 + $0x15e8] sm:$0xff]
        %v1014 = vld [vmem:[%s287 + $0x15f0] sm:$0xff]
        %v1015 = vld [vmem:[%s287 + $0x15f8] sm:$0xff]
        %v1016 = vld [vmem:[%s287 + $0x1600] sm:$0xff]
        %v1017 = vld [vmem:[%s287 + $0x1608] sm:$0xff]
        %v1018 = vld [vmem:[%s287 + $0x1610] sm:$0xff]
        %v1019 = vld [vmem:[%s287 + $0x1618] sm:$0xff]
        %v1020 = vld [vmem:[%s287 + $0x1620] sm:$0xff]
        %v1021 = vld [vmem:[%s287 + $0x1628] sm:$0xff]
        %v1022 = vld [vmem:[%s287 + $0x1630] sm:$0xff]
        %v1023 = vld [vmem:[%s287 + $0x1638] sm:$0xff]
        %v1024 = vld [vmem:[%s287 + $0x1640] sm:$0xff]
        %v1025 = vld [vmem:[%s287 + $0x1648] sm:$0xff]
        %v1026 = vld [vmem:[%s287 + $0x1650] sm:$0xff]
        %v1027 = vld [vmem:[%s287 + $0x1658] sm:$0xff]
        %v1028 = vld [vmem:[%s287 + $0x1660] sm:$0xff]
        %v1029 = vld [vmem:[%s287 + $0x1668] sm:$0xff]
        %v1030 = vld [vmem:[%s287 + $0x1670] sm:$0xff]
        %v1031 = vld [vmem:[%s287 + $0x1678] sm:$0xff]
        %v1032 = vld [vmem:[%s287 + $0x1680] sm:$0xff]
        %v1033 = vld [vmem:[%s287 + $0x1688] sm:$0xff]
        %v1034 = vld [vmem:[%s287 + $0x1690] sm:$0xff]
        %v1035 = vld [vmem:[%s287 + $0x1698] sm:$0xff]
        %v1036 = vld [vmem:[%s287 + $0x16a0] sm:$0xff]
        %v1037 = vld [vmem:[%s287 + $0x16a8] sm:$0xff]
        %v1038 = vld [vmem:[%s287 + $0x16b0] sm:$0xff]
        %v1039 = vld [vmem:[%s287 + $0x16b8] sm:$0xff]
        %v1040 = vld [vmem:[%s287 + $0x16c0] sm:$0xff]
        %v1041 = vld [vmem:[%s287 + $0x16c8] sm:$0xff]
        %v1042 = vld [vmem:[%s287 + $0x16d0] sm:$0xff]
        %v1043 = vld [vmem:[%s287 + $0x16d8] sm:$0xff]
        %v1044 = vld [vmem:[%s287 + $0x16e0] sm:$0xff]
        %v1045 = vld [vmem:[%s287 + $0x16e8] sm:$0xff]
        %v1046 = vld [vmem:[%s287 + $0x16f0] sm:$0xff]
        %v1047 = vld [vmem:[%s287 + $0x16f8] sm:$0xff]
        %v1048 = vld [vmem:[%s287 + $0x1700] sm:$0xff]
        %v1049 = vld [vmem:[%s287 + $0x1708] sm:$0xff]
        %v1050 = vld [vmem:[%s287 + $0x1710] sm:$0xff]
        %v1051 = vld [vmem:[%s287 + $0x1718] sm:$0xff]
        %v1052 = vld [vmem:[%s287 + $0x1720] sm:$0xff]
        %v1053 = vld [vmem:[%s287 + $0x1728] sm:$0xff]
        %v1054 = vld [vmem:[%s287 + $0x1730] sm:$0xff]
        %v1055 = vld [vmem:[%s287 + $0x1738] sm:$0xff]
        %v1056 = vld [vmem:[%s287 + $0x1740] sm:$0xff]
        %v1057 = vld [vmem:[%s287 + $0x1748] sm:$0xff]
        %v1058 = vld [vmem:[%s287 + $0x1750] sm:$0xff]
        %v1059 = vld [vmem:[%s287 + $0x1758] sm:$0xff]
        %v1060 = vld [vmem:[%s287 + $0x1760] sm:$0xff]
        %v1061 = vld [vmem:[%s287 + $0x1768] sm:$0xff]
        %v1062 = vld [vmem:[%s287 + $0x1770] sm:$0xff]
        %v1063 = vld [vmem:[%s287 + $0x1778] sm:$0xff]
        %v1064 = vld [vmem:[%s287 + $0x1780] sm:$0xff]
        %v1065 = vld [vmem:[%s287 + $0x1788] sm:$0xff]
        %v1066 = vld [vmem:[%s287 + $0x1790] sm:$0xff]
        %v1067 = vld [vmem:[%s287 + $0x1798] sm:$0xff]
        %v1068 = vld [vmem:[%s287 + $0x17a0] sm:$0xff]
        %v1069 = vld [vmem:[%s287 + $0x17a8] sm:$0xff]
        %v1070 = vld [vmem:[%s287 + $0x17b0] sm:$0xff]
        %v1071 = vld [vmem:[%s287 + $0x17b8] sm:$0xff]
        %v1072 = vld [vmem:[%s287 + $0x17c0] sm:$0xff]
        %v1073 = vld [vmem:[%s287 + $0x17c8] sm:$0xff]
        %v1074 = vld [vmem:[%s287 + $0x17d0] sm:$0xff]
        %v1075 = vld [vmem:[%s287 + $0x17d8] sm:$0xff]
        %v1076 = vld [vmem:[%s287 + $0x17e0] sm:$0xff]
        %v1077 = vld [vmem:[%s287 + $0x17e8] sm:$0xff]
        %v1078 = vld [vmem:[%s287 + $0x17f0] sm:$0xff]
        %v1079 = vld [vmem:[%s287 + $0x17f8] sm:$0xff]
        %v1080 = vld [vmem:[%s287 + $0x1800] sm:$0xff]
        %v1081 = vld [vmem:[%s287 + $0x1808] sm:$0xff]
        %v1082 = vld [vmem:[%s287 + $0x1810] sm:$0xff]
        %v1083 = vld [vmem:[%s287 + $0x1818] sm:$0xff]
        %v1084 = vld [vmem:[%s287 + $0x1820] sm:$0xff]
        %v1085 = vld [vmem:[%s287 + $0x1828] sm:$0xff]
        %v1086 = vld [vmem:[%s287 + $0x1830] sm:$0xff]
        %v1087 = vld [vmem:[%s287 + $0x1838] sm:$0xff]
        %v1088 = vld [vmem:[%s287 + $0x1840] sm:$0xff]
        %v1089 = vld [vmem:[%s287 + $0x1848] sm:$0xff]
        %v1090 = vld [vmem:[%s287 + $0x1850] sm:$0xff]
        %v1091 = vld [vmem:[%s287 + $0x1858] sm:$0xff]
        %v1092 = vld [vmem:[%s287 + $0x1860] sm:$0xff]
        %v1093 = vld [vmem:[%s287 + $0x1868] sm:$0xff]
        %v1094 = vld [vmem:[%s287 + $0x1870] sm:$0xff]
        %v1095 = vld [vmem:[%s287 + $0x1878] sm:$0xff]
        %v1096 = vld [vmem:[%s287 + $0x1880] sm:$0xff]
        %v1097 = vld [vmem:[%s287 + $0x1888] sm:$0xff]
        %v1098 = vld [vmem:[%s287 + $0x1890] sm:$0xff]
        %v1099 = vld [vmem:[%s287 + $0x1898] sm:$0xff]
        %v1100 = vld [vmem:[%s287 + $0x18a0] sm:$0xff]
        %v1101 = vld [vmem:[%s287 + $0x18a8] sm:$0xff]
        %v1102 = vld [vmem:[%s287 + $0x18b0] sm:$0xff]
        %v1103 = vld [vmem:[%s287 + $0x18b8] sm:$0xff]
        %v1104 = vld [vmem:[%s287 + $0x18c0] sm:$0xff]
        %v1105 = vld [vmem:[%s287 + $0x18c8] sm:$0xff]
        %v1106 = vld [vmem:[%s287 + $0x18d0] sm:$0xff]
        %v1107 = vld [vmem:[%s287 + $0x18d8] sm:$0xff]
        %v1108 = vld [vmem:[%s287 + $0x18e0] sm:$0xff]
        %v1109 = vld [vmem:[%s287 + $0x18e8] sm:$0xff]
        %v1110 = vld [vmem:[%s287 + $0x18f0] sm:$0xff]
        %v1111 = vld [vmem:[%s287 + $0x18f8] sm:$0xff]
        %v1112 = vld [vmem:[%s287 + $0x1900] sm:$0xff]
        %v1113 = vld [vmem:[%s287 + $0x1908] sm:$0xff]
        %v1114 = vld [vmem:[%s287 + $0x1910] sm:$0xff]
        %v1115 = vld [vmem:[%s287 + $0x1918] sm:$0xff]
        %v1116 = vld [vmem:[%s287 + $0x1920] sm:$0xff]
        %v1117 = vld [vmem:[%s287 + $0x1928] sm:$0xff]
        %v1118 = vld [vmem:[%s287 + $0x1930] sm:$0xff]
        %v1119 = vld [vmem:[%s287 + $0x1938] sm:$0xff]
        %v1120 = vld [vmem:[%s287 + $0x1940] sm:$0xff]
        %v1121 = vld [vmem:[%s287 + $0x1948] sm:$0xff]
        %v1122 = vld [vmem:[%s287 + $0x1950] sm:$0xff]
        %v1123 = vld [vmem:[%s287 + $0x1958] sm:$0xff]
        %v1124 = vld [vmem:[%s287 + $0x1960] sm:$0xff]
        %v1125 = vld [vmem:[%s287 + $0x1968] sm:$0xff]
        %v1126 = vld [vmem:[%s287 + $0x1970] sm:$0xff]
        %v1127 = vld [vmem:[%s287 + $0x1978] sm:$0xff]
        %v1128 = vld [vmem:[%s287 + $0x1980] sm:$0xff]
        %v1129 = vld [vmem:[%s287 + $0x1988] sm:$0xff]
        %v1130 = vld [vmem:[%s287 + $0x1990] sm:$0xff]
        %v1131 = vld [vmem:[%s287 + $0x1998] sm:$0xff]
        %v1132 = vld [vmem:[%s287 + $0x19a0] sm:$0xff]
        %v1133 = vld [vmem:[%s287 + $0x19a8] sm:$0xff]
        %v1134 = vld [vmem:[%s287 + $0x19b0] sm:$0xff]
        %v1135 = vld [vmem:[%s287 + $0x19b8] sm:$0xff]
        %v1136 = vld [vmem:[%s287 + $0x19c0] sm:$0xff]
        %v1137 = vld [vmem:[%s287 + $0x19c8] sm:$0xff]
        %v1138 = vld [vmem:[%s287 + $0x19d0] sm:$0xff]
        %v1139 = vld [vmem:[%s287 + $0x19d8] sm:$0xff]
        %v1140 = vld [vmem:[%s287 + $0x19e0] sm:$0xff]
        %v1141 = vld [vmem:[%s287 + $0x19e8] sm:$0xff]
        %v1142 = vld [vmem:[%s287 + $0x19f0] sm:$0xff]
        %v1143 = vld [vmem:[%s287 + $0x19f8] sm:$0xff]
        %v1144 = vld [vmem:[%s287 + $0x1a00] sm:$0xff]
        %v1145 = vld [vmem:[%s287 + $0x1a08] sm:$0xff]
        %v1146 = vld [vmem:[%s287 + $0x1a10] sm:$0xff]
        %v1147 = vld [vmem:[%s287 + $0x1a18] sm:$0xff]
        %v1148 = vld [vmem:[%s287 + $0x1a20] sm:$0xff]
        %v1149 = vld [vmem:[%s287 + $0x1a28] sm:$0xff]
        %v1150 = vld [vmem:[%s287 + $0x1a30] sm:$0xff]
        %v1151 = vld [vmem:[%s287 + $0x1a38] sm:$0xff]
        %v1152 = vld [vmem:[%s287 + $0x1a40] sm:$0xff]
        %v1153 = vld [vmem:[%s287 + $0x1a48] sm:$0xff]
        %v1154 = vld [vmem:[%s287 + $0x1a50] sm:$0xff]
        %v1155 = vld [vmem:[%s287 + $0x1a58] sm:$0xff]
        %v1156 = vld [vmem:[%s287 + $0x1a60] sm:$0xff]
        %v1157 = vld [vmem:[%s287 + $0x1a68] sm:$0xff]
        %v1158 = vld [vmem:[%s287 + $0x1a70] sm:$0xff]
        %v1159 = vld [vmem:[%s287 + $0x1a78] sm:$0xff]
        %v1160 = vld [vmem:[%s287 + $0x1a80] sm:$0xff]
        %v1161 = vld [vmem:[%s287 + $0x1a88] sm:$0xff]
        %v1162 = vld [vmem:[%s287 + $0x1a90] sm:$0xff]
        %v1163 = vld [vmem:[%s287 + $0x1a98] sm:$0xff]
        %v1164 = vld [vmem:[%s287 + $0x1aa0] sm:$0xff]
        %v1165 = vld [vmem:[%s287 + $0x1aa8] sm:$0xff]
        %v1166 = vld [vmem:[%s287 + $0x1ab0] sm:$0xff]
        %v1167 = vld [vmem:[%s287 + $0x1ab8] sm:$0xff]
        %v1168 = vld [vmem:[%s287 + $0x1ac0] sm:$0xff]
        %v1169 = vld [vmem:[%s287 + $0x1ac8] sm:$0xff]
        %v1170 = vld [vmem:[%s287 + $0x1ad0] sm:$0xff]
        %v1171 = vld [vmem:[%s287 + $0x1ad8] sm:$0xff]
        %v1172 = vld [vmem:[%s287 + $0x1ae0] sm:$0xff]
        %v1173 = vld [vmem:[%s287 + $0x1ae8] sm:$0xff]
        %v1174 = vld [vmem:[%s287 + $0x1af0] sm:$0xff]
        %v1175 = vld [vmem:[%s287 + $0x1af8] sm:$0xff]
        %v1176 = vld [vmem:[%s287 + $0x1b00] sm:$0xff]
        %v1177 = vld [vmem:[%s287 + $0x1b08] sm:$0xff]
        %v1178 = vld [vmem:[%s287 + $0x1b10] sm:$0xff]
        %v1179 = vld [vmem:[%s287 + $0x1b18] sm:$0xff]
        %v1180 = vld [vmem:[%s287 + $0x1b20] sm:$0xff]
        %v1181 = vld [vmem:[%s287 + $0x1b28] sm:$0xff]
        %v1182 = vld [vmem:[%s287 + $0x1b30] sm:$0xff]
        %v1183 = vld [vmem:[%s287 + $0x1b38] sm:$0xff]
        %v1184 = vld [vmem:[%s287 + $0x1b40] sm:$0xff]
        %v1185 = vld [vmem:[%s287 + $0x1b48] sm:$0xff]
        %v1186 = vld [vmem:[%s287 + $0x1b50] sm:$0xff]
        %v1187 = vld [vmem:[%s287 + $0x1b58] sm:$0xff]
        %v1188 = vld [vmem:[%s287 + $0x1b60] sm:$0xff]
        %v1189 = vld [vmem:[%s287 + $0x1b68] sm:$0xff]
        %v1190 = vld [vmem:[%s287 + $0x1b70] sm:$0xff]
        %v1191 = vld [vmem:[%s287 + $0x1b78] sm:$0xff]
        %v1192 = vld [vmem:[%s287 + $0x1b80] sm:$0xff]
        %v1193 = vld [vmem:[%s287 + $0x1b88] sm:$0xff]
        %v1194 = vld [vmem:[%s287 + $0x1b90] sm:$0xff]
        %v1195 = vld [vmem:[%s287 + $0x1b98] sm:$0xff]
        %v1196 = vld [vmem:[%s287 + $0x1ba0] sm:$0xff]
        %v1197 = vld [vmem:[%s287 + $0x1ba8] sm:$0xff]
        %v1198 = vld [vmem:[%s287 + $0x1bb0] sm:$0xff]
        %v1199 = vld [vmem:[%s287 + $0x1bb8] sm:$0xff]
        %v1200 = vld [vmem:[%s287 + $0x1bc0] sm:$0xff]
        %v1201 = vld [vmem:[%s287 + $0x1bc8] sm:$0xff]
        %v1202 = vld [vmem:[%s287 + $0x1bd0] sm:$0xff]
        %v1203 = vld [vmem:[%s287 + $0x1bd8] sm:$0xff]
        %v1204 = vld [vmem:[%s287 + $0x1be0] sm:$0xff]
        %v1205 = vld [vmem:[%s287 + $0x1be8] sm:$0xff]
        %v1206 = vld [vmem:[%s287 + $0x1bf0] sm:$0xff]
        %v1207 = vld [vmem:[%s287 + $0x1bf8] sm:$0xff]
        %v1208 = vld [vmem:[%s287 + $0x1c00] sm:$0xff]
        %v1209 = vld [vmem:[%s287 + $0x1c08] sm:$0xff]
        %v1210 = vld [vmem:[%s287 + $0x1c10] sm:$0xff]
        %v1211 = vld [vmem:[%s287 + $0x1c18] sm:$0xff]
        %v1212 = vld [vmem:[%s287 + $0x1c20] sm:$0xff]
        %v1213 = vld [vmem:[%s287 + $0x1c28] sm:$0xff]
        %v1214 = vld [vmem:[%s287 + $0x1c30] sm:$0xff]
        %v1215 = vld [vmem:[%s287 + $0x1c38] sm:$0xff]
        %v1216 = vld [vmem:[%s287 + $0x1c40] sm:$0xff]
        %v1217 = vld [vmem:[%s287 + $0x1c48] sm:$0xff]
        %v1218 = vld [vmem:[%s287 + $0x1c50] sm:$0xff]
        %v1219 = vld [vmem:[%s287 + $0x1c58] sm:$0xff]
        %v1220 = vld [vmem:[%s287 + $0x1c60] sm:$0xff]
        %v1221 = vld [vmem:[%s287 + $0x1c68] sm:$0xff]
        %v1222 = vld [vmem:[%s287 + $0x1c70] sm:$0xff]
        %v1223 = vld [vmem:[%s287 + $0x1c78] sm:$0xff]
        %v1224 = vld [vmem:[%s287 + $0x1c80] sm:$0xff]
        %v1225 = vld [vmem:[%s287 + $0x1c88] sm:$0xff]
        %v1226 = vld [vmem:[%s287 + $0x1c90] sm:$0xff]
        %v1227 = vld [vmem:[%s287 + $0x1c98] sm:$0xff]
        %v1228 = vld [vmem:[%s287 + $0x1ca0] sm:$0xff]
        %v1229 = vld [vmem:[%s287 + $0x1ca8] sm:$0xff]
        %v1230 = vld [vmem:[%s287 + $0x1cb0] sm:$0xff]
        %v1231 = vld [vmem:[%s287 + $0x1cb8] sm:$0xff]
        %v1232 = vld [vmem:[%s287 + $0x1cc0] sm:$0xff]
        %v1233 = vld [vmem:[%s287 + $0x1cc8] sm:$0xff]
        %v1234 = vld [vmem:[%s287 + $0x1cd0] sm:$0xff]
        %v1235 = vld [vmem:[%s287 + $0x1cd8] sm:$0xff]
        %v1236 = vld [vmem:[%s287 + $0x1ce0] sm:$0xff]
        %v1237 = vld [vmem:[%s287 + $0x1ce8] sm:$0xff]
        %v1238 = vld [vmem:[%s287 + $0x1cf0] sm:$0xff]
        %v1239 = vld [vmem:[%s287 + $0x1cf8] sm:$0xff]
        %v1240 = vld [vmem:[%s287 + $0x1d00] sm:$0xff]
        %v1241 = vld [vmem:[%s287 + $0x1d08] sm:$0xff]
        %v1242 = vld [vmem:[%s287 + $0x1d10] sm:$0xff]
        %v1243 = vld [vmem:[%s287 + $0x1d18] sm:$0xff]
        %v1244 = vld [vmem:[%s287 + $0x1d20] sm:$0xff]
        %v1245 = vld [vmem:[%s287 + $0x1d28] sm:$0xff]
        %v1246 = vld [vmem:[%s287 + $0x1d30] sm:$0xff]
        %v1247 = vld [vmem:[%s287 + $0x1d38] sm:$0xff]
        %v1248 = vld [vmem:[%s287 + $0x1d40] sm:$0xff]
        %v1249 = vld [vmem:[%s287 + $0x1d48] sm:$0xff]
        %v1250 = vld [vmem:[%s287 + $0x1d50] sm:$0xff]
        %v1251 = vld [vmem:[%s287 + $0x1d58] sm:$0xff]
        %v1252 = vld [vmem:[%s287 + $0x1d60] sm:$0xff]
        %v1253 = vld [vmem:[%s287 + $0x1d68] sm:$0xff]
        %v1254 = vld [vmem:[%s287 + $0x1d70] sm:$0xff]
        %v1255 = vld [vmem:[%s287 + $0x1d78] sm:$0xff]
        %v1256 = vld [vmem:[%s287 + $0x1d80] sm:$0xff]
        %v1257 = vld [vmem:[%s287 + $0x1d88] sm:$0xff]
        %v1258 = vld [vmem:[%s287 + $0x1d90] sm:$0xff]
        %v1259 = vld [vmem:[%s287 + $0x1d98] sm:$0xff]
        %v1260 = vld [vmem:[%s287 + $0x1da0] sm:$0xff]
        %v1261 = vld [vmem:[%s287 + $0x1da8] sm:$0xff]
        %v1262 = vld [vmem:[%s287 + $0x1db0] sm:$0xff]
        %v1263 = vld [vmem:[%s287 + $0x1db8] sm:$0xff]
        %v1264 = vld [vmem:[%s287 + $0x1dc0] sm:$0xff]
        %v1265 = vld [vmem:[%s287 + $0x1dc8] sm:$0xff]
        %v1266 = vld [vmem:[%s287 + $0x1dd0] sm:$0xff]
        %v1267 = vld [vmem:[%s287 + $0x1dd8] sm:$0xff]
        %v1268 = vld [vmem:[%s287 + $0x1de0] sm:$0xff]
        %v1269 = vld [vmem:[%s287 + $0x1de8] sm:$0xff]
        %v1270 = vld [vmem:[%s287 + $0x1df0] sm:$0xff]
        %v1271 = vld [vmem:[%s287 + $0x1df8] sm:$0xff]
        %v1272 = vld [vmem:[%s287 + $0x1e00] sm:$0xff]
        %v1273 = vld [vmem:[%s287 + $0x1e08] sm:$0xff]
        %v1274 = vld [vmem:[%s287 + $0x1e10] sm:$0xff]
        %v1275 = vld [vmem:[%s287 + $0x1e18] sm:$0xff]
        %v1276 = vld [vmem:[%s287 + $0x1e20] sm:$0xff]
        %v1277 = vld [vmem:[%s287 + $0x1e28] sm:$0xff]
        %v1278 = vld [vmem:[%s287 + $0x1e30] sm:$0xff]
        %v1279 = vld [vmem:[%s287 + $0x1e38] sm:$0xff]
        %v1280 = vld [vmem:[%s287 + $0x1e40] sm:$0xff]
        %v1281 = vld [vmem:[%s287 + $0x1e48] sm:$0xff]
        %v1282 = vld [vmem:[%s287 + $0x1e50] sm:$0xff]
        %v1283 = vld [vmem:[%s287 + $0x1e58] sm:$0xff]
        %v1284 = vld [vmem:[%s287 + $0x1e60] sm:$0xff]
        %v1285 = vld [vmem:[%s287 + $0x1e68] sm:$0xff]
        %v1286 = vld [vmem:[%s287 + $0x1e70] sm:$0xff]
        %v1287 = vld [vmem:[%s287 + $0x1e78] sm:$0xff]
        %v1288 = vld [vmem:[%s287 + $0x1e80] sm:$0xff]
        %v1289 = vld [vmem:[%s287 + $0x1e88] sm:$0xff]
        %v1290 = vld [vmem:[%s287 + $0x1e90] sm:$0xff]
        %v1291 = vld [vmem:[%s287 + $0x1e98] sm:$0xff]
        %v1292 = vld [vmem:[%s287 + $0x1ea0] sm:$0xff]
        %v1293 = vld [vmem:[%s287 + $0x1ea8] sm:$0xff]
        %v1294 = vld [vmem:[%s287 + $0x1eb0] sm:$0xff]
        %v1295 = vld [vmem:[%s287 + $0x1eb8] sm:$0xff]
        %v1296 = vld [vmem:[%s287 + $0x1ec0] sm:$0xff]
        %v1297 = vld [vmem:[%s287 + $0x1ec8] sm:$0xff]
        %v1298 = vld [vmem:[%s287 + $0x1ed0] sm:$0xff]
        %v1299 = vld [vmem:[%s287 + $0x1ed8] sm:$0xff]
        %v1300 = vld [vmem:[%s287 + $0x1ee0] sm:$0xff]
        %v1301 = vld [vmem:[%s287 + $0x1ee8] sm:$0xff]
        %v1302 = vld [vmem:[%s287 + $0x1ef0] sm:$0xff]
        %v1303 = vld [vmem:[%s287 + $0x1ef8] sm:$0xff]
        %v1304 = vld [vmem:[%s287 + $0x1f00] sm:$0xff]
        %v1305 = vld [vmem:[%s287 + $0x1f08] sm:$0xff]
        %v1306 = vld [vmem:[%s287 + $0x1f10] sm:$0xff]
        %v1307 = vld [vmem:[%s287 + $0x1f18] sm:$0xff]
        %v1308 = vld [vmem:[%s287 + $0x1f20] sm:$0xff]
        %v1309 = vld [vmem:[%s287 + $0x1f28] sm:$0xff]
        %v1310 = vld [vmem:[%s287 + $0x1f30] sm:$0xff]
        %v1311 = vld [vmem:[%s287 + $0x1f38] sm:$0xff]
        %v1312 = vld [vmem:[%s287 + $0x1f40] sm:$0xff]
        %v1313 = vld [vmem:[%s287 + $0x1f48] sm:$0xff]
        %v1314 = vld [vmem:[%s287 + $0x1f50] sm:$0xff]
        %v1315 = vld [vmem:[%s287 + $0x1f58] sm:$0xff]
        %v1316 = vld [vmem:[%s287 + $0x1f60] sm:$0xff]
        %v1317 = vld [vmem:[%s287 + $0x1f68] sm:$0xff]
        %v1318 = vld [vmem:[%s287 + $0x1f70] sm:$0xff]
        %v1319 = vld [vmem:[%s287 + $0x1f78] sm:$0xff]
        %v1320 = vld [vmem:[%s287 + $0x1f80] sm:$0xff]
        %v1321 = vld [vmem:[%s287 + $0x1f88] sm:$0xff]
        %v1322 = vld [vmem:[%s287 + $0x1f90] sm:$0xff]
        %v1323 = vld [vmem:[%s287 + $0x1f98] sm:$0xff]
        %v1324 = vld [vmem:[%s287 + $0x1fa0] sm:$0xff]
        %v1325 = vld [vmem:[%s287 + $0x1fa8] sm:$0xff]
        %v1326 = vld [vmem:[%s287 + $0x1fb0] sm:$0xff]
        %v1327 = vld [vmem:[%s287 + $0x1fb8] sm:$0xff]
        %v1328 = vld [vmem:[%s287 + $0x1fc0] sm:$0xff]
        %v1329 = vld [vmem:[%s287 + $0x1fc8] sm:$0xff]
        %v1330 = vld [vmem:[%s287 + $0x1fd0] sm:$0xff]
        %v1331 = vld [vmem:[%s287 + $0x1fd8] sm:$0xff]
        %v1332 = vld [vmem:[%s287 + $0x1fe0] sm:$0xff]
        %v1333 = vld [vmem:[%s287 + $0x1fe8] sm:$0xff]
        %v1334 = vld [vmem:[%s287 + $0x1ff0] sm:$0xff]
        %v1335 = vld [vmem:[%s287 + $0x1ff8] sm:$0xff]
        %v1352 = vcombine.high %v296, %v296
        %v1354 = vunpack.c.l.s4 1983009808
        %v1355 = vunpack.c.0.s8 %v1354
        %v1356 = vlaneseq
        %v1357 = vshrl.u32 %v1356, 7
        %v1358 = vsub.s32 %v1355, %v1357
        %v1359 = vrot.slane %v296, %v1358
        %v1361 = vunpack.c.l.s4 1983009808
        %v1362 = vunpack.c.0.s8 %v1361
        %v1363 = vlaneseq
        %v1364 = vshrl.u32 %v1363, 7
        %v1365 = vsub.s32 %v1362, %v1364
        %v1366 = vrot.slane %v1352, %v1365
        %v1367 = vcombine.high %v1359, %v1359
        %v1368 = vcombine.high %v1366, %v1366
        %v1369 = vcombine.high %v297, %v297
        %v1371 = vunpack.c.l.s4 1983009808
        %v1372 = vunpack.c.0.s8 %v1371
        %v1373 = vlaneseq
        %v1374 = vshrl.u32 %v1373, 7
        %v1375 = vsub.s32 %v1372, %v1374
        %v1376 = vrot.slane %v297, %v1375
        %v1378 = vunpack.c.l.s4 1983009808
        %v1379 = vunpack.c.0.s8 %v1378
        %v1380 = vlaneseq
        %v1381 = vshrl.u32 %v1380, 7
        %v1382 = vsub.s32 %v1379, %v1381
        %v1383 = vrot.slane %v1369, %v1382
        %v1384 = vcombine.high %v1376, %v1376
        %v1385 = vcombine.high %v1383, %v1383
        %v1386 = vcombine.high %v298, %v298
        %v1388 = vunpack.c.l.s4 1983009808
        %v1389 = vunpack.c.0.s8 %v1388
        %v1390 = vlaneseq
        %v1391 = vshrl.u32 %v1390, 7
        %v1392 = vsub.s32 %v1389, %v1391
        %v1393 = vrot.slane %v298, %v1392
        %v1395 = vunpack.c.l.s4 1983009808
        %v1396 = vunpack.c.0.s8 %v1395
        %v1397 = vlaneseq
        %v1398 = vshrl.u32 %v1397, 7
        %v1399 = vsub.s32 %v1396, %v1398
        %v1400 = vrot.slane %v1386, %v1399
        %v1401 = vcombine.high %v1393, %v1393
        %v1402 = vcombine.high %v1400, %v1400
        %v1403 = vcombine.high %v299, %v299
        %v1405 = vunpack.c.l.s4 1983009808
        %v1406 = vunpack.c.0.s8 %v1405
        %v1407 = vlaneseq
        %v1408 = vshrl.u32 %v1407, 7
        %v1409 = vsub.s32 %v1406, %v1408
        %v1410 = vrot.slane %v299, %v1409
        %v1412 = vunpack.c.l.s4 1983009808
        %v1413 = vunpack.c.0.s8 %v1412
        %v1414 = vlaneseq
        %v1415 = vshrl.u32 %v1414, 7
        %v1416 = vsub.s32 %v1413, %v1415
        %v1417 = vrot.slane %v1403, %v1416
        %v1418 = vcombine.high %v1410, %v1410
        %v1419 = vcombine.high %v1417, %v1417
        %v1420 = vcombine.high %v300, %v300
        %v1422 = vunpack.c.l.s4 1983009808
        %v1423 = vunpack.c.0.s8 %v1422
        %v1424 = vlaneseq
        %v1425 = vshrl.u32 %v1424, 7
        %v1426 = vsub.s32 %v1423, %v1425
        %v1427 = vrot.slane %v300, %v1426
        %v1429 = vunpack.c.l.s4 1983009808
        %v1430 = vunpack.c.0.s8 %v1429
        %v1431 = vlaneseq
        %v1432 = vshrl.u32 %v1431, 7
        %v1433 = vsub.s32 %v1430, %v1432
        %v1434 = vrot.slane %v1420, %v1433
        %v1435 = vcombine.high %v1427, %v1427
        %v1436 = vcombine.high %v1434, %v1434
        %v1437 = vcombine.high %v301, %v301
        %v1439 = vunpack.c.l.s4 1983009808
        %v1440 = vunpack.c.0.s8 %v1439
        %v1441 = vlaneseq
        %v1442 = vshrl.u32 %v1441, 7
        %v1443 = vsub.s32 %v1440, %v1442
        %v1444 = vrot.slane %v301, %v1443
        %v1446 = vunpack.c.l.s4 1983009808
        %v1447 = vunpack.c.0.s8 %v1446
        %v1448 = vlaneseq
        %v1449 = vshrl.u32 %v1448, 7
        %v1450 = vsub.s32 %v1447, %v1449
        %v1451 = vrot.slane %v1437, %v1450
        %v1452 = vcombine.high %v1444, %v1444
        %v1453 = vcombine.high %v1451, %v1451
        %v1454 = vcombine.high %v302, %v302
        %v1456 = vunpack.c.l.s4 1983009808
        %v1457 = vunpack.c.0.s8 %v1456
        %v1458 = vlaneseq
        %v1459 = vshrl.u32 %v1458, 7
        %v1460 = vsub.s32 %v1457, %v1459
        %v1461 = vrot.slane %v302, %v1460
        %v1463 = vunpack.c.l.s4 1983009808
        %v1464 = vunpack.c.0.s8 %v1463
        %v1465 = vlaneseq
        %v1466 = vshrl.u32 %v1465, 7
        %v1467 = vsub.s32 %v1464, %v1466
        %v1468 = vrot.slane %v1454, %v1467
        %v1469 = vcombine.high %v1461, %v1461
        %v1470 = vcombine.high %v1468, %v1468
        %v1471 = vcombine.high %v303, %v303
        %v1473 = vunpack.c.l.s4 1983009808
        %v1474 = vunpack.c.0.s8 %v1473
        %v1475 = vlaneseq
        %v1476 = vshrl.u32 %v1475, 7
        %v1477 = vsub.s32 %v1474, %v1476
        %v1478 = vrot.slane %v303, %v1477
        %v1480 = vunpack.c.l.s4 1983009808
        %v1481 = vunpack.c.0.s8 %v1480
        %v1482 = vlaneseq
        %v1483 = vshrl.u32 %v1482, 7
        %v1484 = vsub.s32 %v1481, %v1483
        %v1485 = vrot.slane %v1471, %v1484
        %v1486 = vcombine.high %v1478, %v1478
        %v1487 = vcombine.high %v1485, %v1485
        %v1488 = vcombine.high %v304, %v304
        %v1490 = vunpack.c.l.s4 1983009808
        %v1491 = vunpack.c.0.s8 %v1490
        %v1492 = vlaneseq
        %v1493 = vshrl.u32 %v1492, 7
        %v1494 = vsub.s32 %v1491, %v1493
        %v1495 = vrot.slane %v304, %v1494
        %v1497 = vunpack.c.l.s4 1983009808
        %v1498 = vunpack.c.0.s8 %v1497
        %v1499 = vlaneseq
        %v1500 = vshrl.u32 %v1499, 7
        %v1501 = vsub.s32 %v1498, %v1500
        %v1502 = vrot.slane %v1488, %v1501
        %v1503 = vcombine.high %v1495, %v1495
        %v1504 = vcombine.high %v1502, %v1502
        %v1505 = vcombine.high %v305, %v305
        %v1507 = vunpack.c.l.s4 1983009808
        %v1508 = vunpack.c.0.s8 %v1507
        %v1509 = vlaneseq
        %v1510 = vshrl.u32 %v1509, 7
        %v1511 = vsub.s32 %v1508, %v1510
        %v1512 = vrot.slane %v305, %v1511
        %v1514 = vunpack.c.l.s4 1983009808
        %v1515 = vunpack.c.0.s8 %v1514
        %v1516 = vlaneseq
        %v1517 = vshrl.u32 %v1516, 7
        %v1518 = vsub.s32 %v1515, %v1517
        %v1519 = vrot.slane %v1505, %v1518
        %v1520 = vcombine.high %v1512, %v1512
        %v1521 = vcombine.high %v1519, %v1519
        %v1522 = vcombine.high %v306, %v306
        %v1524 = vunpack.c.l.s4 1983009808
        %v1525 = vunpack.c.0.s8 %v1524
        %v1526 = vlaneseq
        %v1527 = vshrl.u32 %v1526, 7
        %v1528 = vsub.s32 %v1525, %v1527
        %v1529 = vrot.slane %v306, %v1528
        %v1531 = vunpack.c.l.s4 1983009808
        %v1532 = vunpack.c.0.s8 %v1531
        %v1533 = vlaneseq
        %v1534 = vshrl.u32 %v1533, 7
        %v1535 = vsub.s32 %v1532, %v1534
        %v1536 = vrot.slane %v1522, %v1535
        %v1537 = vcombine.high %v1529, %v1529
        %v1538 = vcombine.high %v1536, %v1536
        %v1539 = vcombine.high %v307, %v307
        %v1541 = vunpack.c.l.s4 1983009808
        %v1542 = vunpack.c.0.s8 %v1541
        %v1543 = vlaneseq
        %v1544 = vshrl.u32 %v1543, 7
        %v1545 = vsub.s32 %v1542, %v1544
        %v1546 = vrot.slane %v307, %v1545
        %v1548 = vunpack.c.l.s4 1983009808
        %v1549 = vunpack.c.0.s8 %v1548
        %v1550 = vlaneseq
        %v1551 = vshrl.u32 %v1550, 7
        %v1552 = vsub.s32 %v1549, %v1551
        %v1553 = vrot.slane %v1539, %v1552
        %v1554 = vcombine.high %v1546, %v1546
        %v1555 = vcombine.high %v1553, %v1553
        %v1556 = vcombine.high %v308, %v308
        %v1558 = vunpack.c.l.s4 1983009808
        %v1559 = vunpack.c.0.s8 %v1558
        %v1560 = vlaneseq
        %v1561 = vshrl.u32 %v1560, 7
        %v1562 = vsub.s32 %v1559, %v1561
        %v1563 = vrot.slane %v308, %v1562
        %v1565 = vunpack.c.l.s4 1983009808
        %v1566 = vunpack.c.0.s8 %v1565
        %v1567 = vlaneseq
        %v1568 = vshrl.u32 %v1567, 7
        %v1569 = vsub.s32 %v1566, %v1568
        %v1570 = vrot.slane %v1556, %v1569
        %v1571 = vcombine.high %v1563, %v1563
        %v1572 = vcombine.high %v1570, %v1570
        %v1573 = vcombine.high %v309, %v309
        %v1575 = vunpack.c.l.s4 1983009808
        %v1576 = vunpack.c.0.s8 %v1575
        %v1577 = vlaneseq
        %v1578 = vshrl.u32 %v1577, 7
        %v1579 = vsub.s32 %v1576, %v1578
        %v1580 = vrot.slane %v309, %v1579
        %v1582 = vunpack.c.l.s4 1983009808
        %v1583 = vunpack.c.0.s8 %v1582
        %v1584 = vlaneseq
        %v1585 = vshrl.u32 %v1584, 7
        %v1586 = vsub.s32 %v1583, %v1585
        %v1587 = vrot.slane %v1573, %v1586
        %v1588 = vcombine.high %v1580, %v1580
        %v1589 = vcombine.high %v1587, %v1587
        %v1590 = vcombine.high %v310, %v310
        %v1592 = vunpack.c.l.s4 1983009808
        %v1593 = vunpack.c.0.s8 %v1592
        %v1594 = vlaneseq
        %v1595 = vshrl.u32 %v1594, 7
        %v1596 = vsub.s32 %v1593, %v1595
        %v1597 = vrot.slane %v310, %v1596
        %v1599 = vunpack.c.l.s4 1983009808
        %v1600 = vunpack.c.0.s8 %v1599
        %v1601 = vlaneseq
        %v1602 = vshrl.u32 %v1601, 7
        %v1603 = vsub.s32 %v1600, %v1602
        %v1604 = vrot.slane %v1590, %v1603
        %v1605 = vcombine.high %v1597, %v1597
        %v1606 = vcombine.high %v1604, %v1604
        %v1607 = vcombine.high %v311, %v311
        %v1609 = vunpack.c.l.s4 1983009808
        %v1610 = vunpack.c.0.s8 %v1609
        %v1611 = vlaneseq
        %v1612 = vshrl.u32 %v1611, 7
        %v1613 = vsub.s32 %v1610, %v1612
        %v1614 = vrot.slane %v311, %v1613
        %v1616 = vunpack.c.l.s4 1983009808
        %v1617 = vunpack.c.0.s8 %v1616
        %v1618 = vlaneseq
        %v1619 = vshrl.u32 %v1618, 7
        %v1620 = vsub.s32 %v1617, %v1619
        %v1621 = vrot.slane %v1607, %v1620
        %v1622 = vcombine.high %v1614, %v1614
        %v1623 = vcombine.high %v1621, %v1621
        %1688 = vmatprep.subr.mxu0 0.0
        %1689 = vmatpush1.msra.mxu0 %v312
        %1690 = vmatprep.subr.mxu0 0.0
        %1691 = vmatpush1.msra.mxu0 %v313
        %1692 = vmatprep.subr.mxu0 0.0
        %1693 = vmatpush1.msra.mxu0 %v314
        %1694 = vmatprep.subr.mxu0 0.0
        %1695 = vmatpush1.msra.mxu0 %v315
        %1696 = vmatprep.subr.mxu0 0.0
        %1697 = vmatpush1.msra.mxu0 %v316
        %1698 = vmatprep.subr.mxu0 0.0
        %1699 = vmatpush1.msra.mxu0 %v317
        %1700 = vmatprep.subr.mxu0 0.0
        %1701 = vmatpush1.msra.mxu0 %v318
        %1702 = vmatprep.subr.mxu0 0.0
        %1703 = vmatpush1.msra.mxu0 %v319
        %1704 = vmatprep.subr.mxu0 0.0
        %1705 = vmatpush1.msra.mxu0 %v320
        %1706 = vmatprep.subr.mxu0 0.0
        %1707 = vmatpush1.msra.mxu0 %v321
        %1708 = vmatprep.subr.mxu0 0.0
        %1709 = vmatpush1.msra.mxu0 %v322
        %1710 = vmatprep.subr.mxu0 0.0
        %1711 = vmatpush1.msra.mxu0 %v323
        %1712 = vmatprep.subr.mxu0 0.0
        %1713 = vmatpush1.msra.mxu0 %v324
        %1714 = vmatprep.subr.mxu0 0.0
        %1715 = vmatpush1.msra.mxu0 %v325
        %1716 = vmatprep.subr.mxu0 0.0
        %1717 = vmatpush1.msra.mxu0 %v326
        %1718 = vmatprep.subr.mxu0 0.0
        %1719 = vmatpush1.msra.mxu0 %v327
        %1720 = vmatprep.subr.mxu0 0.0
        %1721 = vmatpush1.msra.mxu0 %v328
        %1722 = vmatprep.subr.mxu0 0.0
        %1723 = vmatpush1.msra.mxu0 %v329
        %1724 = vmatprep.subr.mxu0 0.0
        %1725 = vmatpush1.msra.mxu0 %v330
        %1726 = vmatprep.subr.mxu0 0.0
        %1727 = vmatpush1.msra.mxu0 %v331
        %1728 = vmatprep.subr.mxu0 0.0
        %1729 = vmatpush1.msra.mxu0 %v332
        %1730 = vmatprep.subr.mxu0 0.0
        %1731 = vmatpush1.msra.mxu0 %v333
        %1732 = vmatprep.subr.mxu0 0.0
        %1733 = vmatpush1.msra.mxu0 %v334
        %1734 = vmatprep.subr.mxu0 0.0
        %1735 = vmatpush1.msra.mxu0 %v335
        %1736 = vmatprep.subr.mxu0 0.0
        %1737 = vmatpush1.msra.mxu0 %v336
        %1738 = vmatprep.subr.mxu0 0.0
        %1739 = vmatpush1.msra.mxu0 %v337
        %1740 = vmatprep.subr.mxu0 0.0
        %1741 = vmatpush1.msra.mxu0 %v338
        %1742 = vmatprep.subr.mxu0 0.0
        %1743 = vmatpush1.msra.mxu0 %v339
        %1744 = vmatprep.subr.mxu0 0.0
        %1745 = vmatpush1.msra.mxu0 %v340
        %1746 = vmatprep.subr.mxu0 0.0
        %1747 = vmatpush1.msra.mxu0 %v341
        %1748 = vmatprep.subr.mxu0 0.0
        %1749 = vmatpush1.msra.mxu0 %v342
        %1750 = vmatprep.subr.mxu0 0.0
        %1751 = vmatpush1.msra.mxu0 %v343
        %1752 = vmatprep.mubr.f32.mxu0 %v1367
        %1753 = vmatmul.mubr.f32.gmra.mrb[0].mxu0 %v1359
        %v1754 = vpop.f32.mrb[0].mxu0
        %v1755 = vadd.f32 0.0, %v1754
        %v1756 = vpop.f32.mrb[0].mxu0
        %1757 = vdwg.mxu0
        %1758 = vmatprep.subr.mxu0 0.0
        %1759 = vmatpush1.msra.mxu0 %v344
        %1760 = vmatprep.subr.mxu0 0.0
        %1761 = vmatpush1.msra.mxu0 %v345
        %1762 = vmatprep.subr.mxu0 0.0
        %1763 = vmatpush1.msra.mxu0 %v346
        %1764 = vmatprep.subr.mxu0 0.0
        %1765 = vmatpush1.msra.mxu0 %v347
        %1766 = vmatprep.subr.mxu0 0.0
        %1767 = vmatpush1.msra.mxu0 %v348
        %1768 = vmatprep.subr.mxu0 0.0
        %1769 = vmatpush1.msra.mxu0 %v349
        %1770 = vmatprep.subr.mxu0 0.0
        %1771 = vmatpush1.msra.mxu0 %v350
        %1772 = vmatprep.subr.mxu0 0.0
        %1773 = vmatpush1.msra.mxu0 %v351
        %1774 = vmatprep.subr.mxu0 0.0
        %1775 = vmatpush1.msra.mxu0 %v352
        %1776 = vmatprep.subr.mxu0 0.0
        %1777 = vmatpush1.msra.mxu0 %v353
        %1778 = vmatprep.subr.mxu0 0.0
        %1779 = vmatpush1.msra.mxu0 %v354
        %1780 = vmatprep.subr.mxu0 0.0
        %1781 = vmatpush1.msra.mxu0 %v355
        %1782 = vmatprep.subr.mxu0 0.0
        %1783 = vmatpush1.msra.mxu0 %v356
        %1784 = vmatprep.subr.mxu0 0.0
        %1785 = vmatpush1.msra.mxu0 %v357
        %1786 = vmatprep.subr.mxu0 0.0
        %1787 = vmatpush1.msra.mxu0 %v358
        %1788 = vmatprep.subr.mxu0 0.0
        %1789 = vmatpush1.msra.mxu0 %v359
        %1790 = vmatprep.subr.mxu0 0.0
        %1791 = vmatpush1.msra.mxu0 %v360
        %1792 = vmatprep.subr.mxu0 0.0
        %1793 = vmatpush1.msra.mxu0 %v361
        %1794 = vmatprep.subr.mxu0 0.0
        %1795 = vmatpush1.msra.mxu0 %v362
        %1796 = vmatprep.subr.mxu0 0.0
        %1797 = vmatpush1.msra.mxu0 %v363
        %1798 = vmatprep.subr.mxu0 0.0
        %1799 = vmatpush1.msra.mxu0 %v364
        %1800 = vmatprep.subr.mxu0 0.0
        %1801 = vmatpush1.msra.mxu0 %v365
        %1802 = vmatprep.subr.mxu0 0.0
        %1803 = vmatpush1.msra.mxu0 %v366
        %1804 = vmatprep.subr.mxu0 0.0
        %1805 = vmatpush1.msra.mxu0 %v367
        %1806 = vmatprep.subr.mxu0 0.0
        %1807 = vmatpush1.msra.mxu0 %v368
        %1808 = vmatprep.subr.mxu0 0.0
        %1809 = vmatpush1.msra.mxu0 %v369
        %1810 = vmatprep.subr.mxu0 0.0
        %1811 = vmatpush1.msra.mxu0 %v370
        %1812 = vmatprep.subr.mxu0 0.0
        %1813 = vmatpush1.msra.mxu0 %v371
        %1814 = vmatprep.subr.mxu0 0.0
        %1815 = vmatpush1.msra.mxu0 %v372
        %1816 = vmatprep.subr.mxu0 0.0
        %1817 = vmatpush1.msra.mxu0 %v373
        %1818 = vmatprep.subr.mxu0 0.0
        %1819 = vmatpush1.msra.mxu0 %v374
        %1820 = vmatprep.subr.mxu0 0.0
        %1821 = vmatpush1.msra.mxu0 %v375
        %1822 = vmatprep.mubr.f32.mxu0 %v1368
        %1823 = vmatmul.mubr.f32.gmra.mrb[0].mxu0 %v1366
        %v1824 = vpop.f32.mrb[0].mxu0
        %v1825 = vadd.f32 %v1755, %v1824
        %v1826 = vpop.f32.mrb[0].mxu0
        %1827 = vdwg.mxu0
        %1828 = vmatprep.subr.mxu0 0.0
        %1829 = vmatpush1.msra.mxu0 %v376
        %1830 = vmatprep.subr.mxu0 0.0
        %1831 = vmatpush1.msra.mxu0 %v377
        %1832 = vmatprep.subr.mxu0 0.0
        %1833 = vmatpush1.msra.mxu0 %v378
        %1834 = vmatprep.subr.mxu0 0.0
        %1835 = vmatpush1.msra.mxu0 %v379
        %1836 = vmatprep.subr.mxu0 0.0
        %1837 = vmatpush1.msra.mxu0 %v380
        %1838 = vmatprep.subr.mxu0 0.0
        %1839 = vmatpush1.msra.mxu0 %v381
        %1840 = vmatprep.subr.mxu0 0.0
        %1841 = vmatpush1.msra.mxu0 %v382
        %1842 = vmatprep.subr.mxu0 0.0
        %1843 = vmatpush1.msra.mxu0 %v383
        %1844 = vmatprep.subr.mxu0 0.0
        %1845 = vmatpush1.msra.mxu0 %v384
        %1846 = vmatprep.subr.mxu0 0.0
        %1847 = vmatpush1.msra.mxu0 %v385
        %1848 = vmatprep.subr.mxu0 0.0
        %1849 = vmatpush1.msra.mxu0 %v386
        %1850 = vmatprep.subr.mxu0 0.0
        %1851 = vmatpush1.msra.mxu0 %v387
        %1852 = vmatprep.subr.mxu0 0.0
        %1853 = vmatpush1.msra.mxu0 %v388
        %1854 = vmatprep.subr.mxu0 0.0
        %1855 = vmatpush1.msra.mxu0 %v389
        %1856 = vmatprep.subr.mxu0 0.0
        %1857 = vmatpush1.msra.mxu0 %v390
        %1858 = vmatprep.subr.mxu0 0.0
        %1859 = vmatpush1.msra.mxu0 %v391
        %1860 = vmatprep.subr.mxu0 0.0
        %1861 = vmatpush1.msra.mxu0 %v392
        %1862 = vmatprep.subr.mxu0 0.0
        %1863 = vmatpush1.msra.mxu0 %v393
        %1864 = vmatprep.subr.mxu0 0.0
        %1865 = vmatpush1.msra.mxu0 %v394
        %1866 = vmatprep.subr.mxu0 0.0
        %1867 = vmatpush1.msra.mxu0 %v395
        %1868 = vmatprep.subr.mxu0 0.0
        %1869 = vmatpush1.msra.mxu0 %v396
        %1870 = vmatprep.subr.mxu0 0.0
        %1871 = vmatpush1.msra.mxu0 %v397
        %1872 = vmatprep.subr.mxu0 0.0
        %1873 = vmatpush1.msra.mxu0 %v398
        %1874 = vmatprep.subr.mxu0 0.0
        %1875 = vmatpush1.msra.mxu0 %v399
        %1876 = vmatprep.subr.mxu0 0.0
        %1877 = vmatpush1.msra.mxu0 %v400
        %1878 = vmatprep.subr.mxu0 0.0
        %1879 = vmatpush1.msra.mxu0 %v401
        %1880 = vmatprep.subr.mxu0 0.0
        %1881 = vmatpush1.msra.mxu0 %v402
        %1882 = vmatprep.subr.mxu0 0.0
        %1883 = vmatpush1.msra.mxu0 %v403
        %1884 = vmatprep.subr.mxu0 0.0
        %1885 = vmatpush1.msra.mxu0 %v404
        %1886 = vmatprep.subr.mxu0 0.0
        %1887 = vmatpush1.msra.mxu0 %v405
        %1888 = vmatprep.subr.mxu0 0.0
        %1889 = vmatpush1.msra.mxu0 %v406
        %1890 = vmatprep.subr.mxu0 0.0
        %1891 = vmatpush1.msra.mxu0 %v407
        %1892 = vmatprep.mubr.f32.mxu0 %v1384
        %1893 = vmatmul.mubr.f32.gmra.mrb[0].mxu0 %v1376
        %v1894 = vpop.f32.mrb[0].mxu0
        %v1895 = vadd.f32 %v1825, %v1894
        %v1896 = vpop.f32.mrb[0].mxu0
        %1897 = vdwg.mxu0
        %1898 = vmatprep.subr.mxu0 0.0
        %1899 = vmatpush1.msra.mxu0 %v408
        %1900 = vmatprep.subr.mxu0 0.0
        %1901 = vmatpush1.msra.mxu0 %v409
        %1902 = vmatprep.subr.mxu0 0.0
        %1903 = vmatpush1.msra.mxu0 %v410
        %1904 = vmatprep.subr.mxu0 0.0
        %1905 = vmatpush1.msra.mxu0 %v411
        %1906 = vmatprep.subr.mxu0 0.0
        %1907 = vmatpush1.msra.mxu0 %v412
        %1908 = vmatprep.subr.mxu0 0.0
        %1909 = vmatpush1.msra.mxu0 %v413
        %1910 = vmatprep.subr.mxu0 0.0
        %1911 = vmatpush1.msra.mxu0 %v414
        %1912 = vmatprep.subr.mxu0 0.0
        %1913 = vmatpush1.msra.mxu0 %v415
        %1914 = vmatprep.subr.mxu0 0.0
        %1915 = vmatpush1.msra.mxu0 %v416
        %1916 = vmatprep.subr.mxu0 0.0
        %1917 = vmatpush1.msra.mxu0 %v417
        %1918 = vmatprep.subr.mxu0 0.0
        %1919 = vmatpush1.msra.mxu0 %v418
        %1920 = vmatprep.subr.mxu0 0.0
        %1921 = vmatpush1.msra.mxu0 %v419
        %1922 = vmatprep.subr.mxu0 0.0
        %1923 = vmatpush1.msra.mxu0 %v420
        %1924 = vmatprep.subr.mxu0 0.0
        %1925 = vmatpush1.msra.mxu0 %v421
        %1926 = vmatprep.subr.mxu0 0.0
        %1927 = vmatpush1.msra.mxu0 %v422
        %1928 = vmatprep.subr.mxu0 0.0
        %1929 = vmatpush1.msra.mxu0 %v423
        %1930 = vmatprep.subr.mxu0 0.0
        %1931 = vmatpush1.msra.mxu0 %v424
        %1932 = vmatprep.subr.mxu0 0.0
        %1933 = vmatpush1.msra.mxu0 %v425
        %1934 = vmatprep.subr.mxu0 0.0
        %1935 = vmatpush1.msra.mxu0 %v426
        %1936 = vmatprep.subr.mxu0 0.0
        %1937 = vmatpush1.msra.mxu0 %v427
        %1938 = vmatprep.subr.mxu0 0.0
        %1939 = vmatpush1.msra.mxu0 %v428
        %1940 = vmatprep.subr.mxu0 0.0
        %1941 = vmatpush1.msra.mxu0 %v429
        %1942 = vmatprep.subr.mxu0 0.0
        %1943 = vmatpush1.msra.mxu0 %v430
        %1944 = vmatprep.subr.mxu0 0.0
        %1945 = vmatpush1.msra.mxu0 %v431
        %1946 = vmatprep.subr.mxu0 0.0
        %1947 = vmatpush1.msra.mxu0 %v432
        %1948 = vmatprep.subr.mxu0 0.0
        %1949 = vmatpush1.msra.mxu0 %v433
        %1950 = vmatprep.subr.mxu0 0.0
        %1951 = vmatpush1.msra.mxu0 %v434
        %1952 = vmatprep.subr.mxu0 0.0
        %1953 = vmatpush1.msra.mxu0 %v435
        %1954 = vmatprep.subr.mxu0 0.0
        %1955 = vmatpush1.msra.mxu0 %v436
        %1956 = vmatprep.subr.mxu0 0.0
        %1957 = vmatpush1.msra.mxu0 %v437
        %1958 = vmatprep.subr.mxu0 0.0
        %1959 = vmatpush1.msra.mxu0 %v438
        %1960 = vmatprep.subr.mxu0 0.0
        %1961 = vmatpush1.msra.mxu0 %v439
        %1962 = vmatprep.mubr.f32.mxu0 %v1385
        %1963 = vmatmul.mubr.f32.gmra.mrb[0].mxu0 %v1383
        %v1964 = vpop.f32.mrb[0].mxu0
        %v1965 = vadd.f32 %v1895, %v1964
        %v1966 = vpop.f32.mrb[0].mxu0
        %1967 = vdwg.mxu0
        %1968 = vmatprep.subr.mxu0 0.0
        %1969 = vmatpush1.msra.mxu0 %v440
        %1970 = vmatprep.subr.mxu0 0.0
        %1971 = vmatpush1.msra.mxu0 %v441
        %1972 = vmatprep.subr.mxu0 0.0
        %1973 = vmatpush1.msra.mxu0 %v442
        %1974 = vmatprep.subr.mxu0 0.0
        %1975 = vmatpush1.msra.mxu0 %v443
        %1976 = vmatprep.subr.mxu0 0.0
        %1977 = vmatpush1.msra.mxu0 %v444
        %1978 = vmatprep.subr.mxu0 0.0
        %1979 = vmatpush1.msra.mxu0 %v445
        %1980 = vmatprep.subr.mxu0 0.0
        %1981 = vmatpush1.msra.mxu0 %v446
        %1982 = vmatprep.subr.mxu0 0.0
        %1983 = vmatpush1.msra.mxu0 %v447
        %1984 = vmatprep.subr.mxu0 0.0
        %1985 = vmatpush1.msra.mxu0 %v448
        %1986 = vmatprep.subr.mxu0 0.0
        %1987 = vmatpush1.msra.mxu0 %v449
        %1988 = vmatprep.subr.mxu0 0.0
        %1989 = vmatpush1.msra.mxu0 %v450
        %1990 = vmatprep.subr.mxu0 0.0
        %1991 = vmatpush1.msra.mxu0 %v451
        %1992 = vmatprep.subr.mxu0 0.0
        %1993 = vmatpush1.msra.mxu0 %v452
        %1994 = vmatprep.subr.mxu0 0.0
        %1995 = vmatpush1.msra.mxu0 %v453
        %1996 = vmatprep.subr.mxu0 0.0
        %1997 = vmatpush1.msra.mxu0 %v454
        %1998 = vmatprep.subr.mxu0 0.0
        %1999 = vmatpush1.msra.mxu0 %v455
        %2000 = vmatprep.subr.mxu0 0.0
        %2001 = vmatpush1.msra.mxu0 %v456
        %2002 = vmatprep.subr.mxu0 0.0
        %2003 = vmatpush1.msra.mxu0 %v457
        %2004 = vmatprep.subr.mxu0 0.0
        %2005 = vmatpush1.msra.mxu0 %v458
        %2006 = vmatprep.subr.mxu0 0.0
        %2007 = vmatpush1.msra.mxu0 %v459
        %2008 = vmatprep.subr.mxu0 0.0
        %2009 = vmatpush1.msra.mxu0 %v460
        %2010 = vmatprep.subr.mxu0 0.0
        %2011 = vmatpush1.msra.mxu0 %v461
        %2012 = vmatprep.subr.mxu0 0.0
        %2013 = vmatpush1.msra.mxu0 %v462
        %2014 = vmatprep.subr.mxu0 0.0
        %2015 = vmatpush1.msra.mxu0 %v463
        %2016 = vmatprep.subr.mxu0 0.0
        %2017 = vmatpush1.msra.mxu0 %v464
        %2018 = vmatprep.subr.mxu0 0.0
        %2019 = vmatpush1.msra.mxu0 %v465
        %2020 = vmatprep.subr.mxu0 0.0
        %2021 = vmatpush1.msra.mxu0 %v466
        %2022 = vmatprep.subr.mxu0 0.0
        %2023 = vmatpush1.msra.mxu0 %v467
        %2024 = vmatprep.subr.mxu0 0.0
        %2025 = vmatpush1.msra.mxu0 %v468
        %2026 = vmatprep.subr.mxu0 0.0
        %2027 = vmatpush1.msra.mxu0 %v469
        %2028 = vmatprep.subr.mxu0 0.0
        %2029 = vmatpush1.msra.mxu0 %v470
        %2030 = vmatprep.subr.mxu0 0.0
        %2031 = vmatpush1.msra.mxu0 %v471
        %2032 = vmatprep.mubr.f32.mxu0 %v1401
        %2033 = vmatmul.mubr.f32.gmra.mrb[0].mxu0 %v1393
        %v2034 = vpop.f32.mrb[0].mxu0
        %v2035 = vadd.f32 %v1965, %v2034
        %v2036 = vpop.f32.mrb[0].mxu0
        %2037 = vdwg.mxu0
        %2038 = vmatprep.subr.mxu0 0.0
        %2039 = vmatpush1.msra.mxu0 %v472
        %2040 = vmatprep.subr.mxu0 0.0
        %2041 = vmatpush1.msra.mxu0 %v473
        %2042 = vmatprep.subr.mxu0 0.0
        %2043 = vmatpush1.msra.mxu0 %v474
        %2044 = vmatprep.subr.mxu0 0.0
        %2045 = vmatpush1.msra.mxu0 %v475
        %2046 = vmatprep.subr.mxu0 0.0
        %2047 = vmatpush1.msra.mxu0 %v476
        %2048 = vmatprep.subr.mxu0 0.0
        %2049 = vmatpush1.msra.mxu0 %v477
        %2050 = vmatprep.subr.mxu0 0.0
        %2051 = vmatpush1.msra.mxu0 %v478
        %2052 = vmatprep.subr.mxu0 0.0
        %2053 = vmatpush1.msra.mxu0 %v479
        %2054 = vmatprep.subr.mxu0 0.0
        %2055 = vmatpush1.msra.mxu0 %v480
        %2056 = vmatprep.subr.mxu0 0.0
        %2057 = vmatpush1.msra.mxu0 %v481
        %2058 = vmatprep.subr.mxu0 0.0
        %2059 = vmatpush1.msra.mxu0 %v482
        %2060 = vmatprep.subr.mxu0 0.0
        %2061 = vmatpush1.msra.mxu0 %v483
        %2062 = vmatprep.subr.mxu0 0.0
        %2063 = vmatpush1.msra.mxu0 %v484
        %2064 = vmatprep.subr.mxu0 0.0
        %2065 = vmatpush1.msra.mxu0 %v485
        %2066 = vmatprep.subr.mxu0 0.0
        %2067 = vmatpush1.msra.mxu0 %v486
        %2068 = vmatprep.subr.mxu0 0.0
        %2069 = vmatpush1.msra.mxu0 %v487
        %2070 = vmatprep.subr.mxu0 0.0
        %2071 = vmatpush1.msra.mxu0 %v488
        %2072 = vmatprep.subr.mxu0 0.0
        %2073 = vmatpush1.msra.mxu0 %v489
        %2074 = vmatprep.subr.mxu0 0.0
        %2075 = vmatpush1.msra.mxu0 %v490
        %2076 = vmatprep.subr.mxu0 0.0
        %2077 = vmatpush1.msra.mxu0 %v491
        %2078 = vmatprep.subr.mxu0 0.0
        %2079 = vmatpush1.msra.mxu0 %v492
        %2080 = vmatprep.subr.mxu0 0.0
        %2081 = vmatpush1.msra.mxu0 %v493
        %2082 = vmatprep.subr.mxu0 0.0
        %2083 = vmatpush1.msra.mxu0 %v494
        %2084 = vmatprep.subr.mxu0 0.0
        %2085 = vmatpush1.msra.mxu0 %v495
        %2086 = vmatprep.subr.mxu0 0.0
        %2087 = vmatpush1.msra.mxu0 %v496
        %2088 = vmatprep.subr.mxu0 0.0
        %2089 = vmatpush1.msra.mxu0 %v497
        %2090 = vmatprep.subr.mxu0 0.0
        %2091 = vmatpush1.msra.mxu0 %v498
        %2092 = vmatprep.subr.mxu0 0.0
        %2093 = vmatpush1.msra.mxu0 %v499
        %2094 = vmatprep.subr.mxu0 0.0
        %2095 = vmatpush1.msra.mxu0 %v500
        %2096 = vmatprep.subr.mxu0 0.0
        %2097 = vmatpush1.msra.mxu0 %v501
        %2098 = vmatprep.subr.mxu0 0.0
        %2099 = vmatpush1.msra.mxu0 %v502
        %2100 = vmatprep.subr.mxu0 0.0
        %2101 = vmatpush1.msra.mxu0 %v503
        %2102 = vmatprep.mubr.f32.mxu0 %v1402
        %2103 = vmatmul.mubr.f32.gmra.mrb[0].mxu0 %v1400
        %v2104 = vpop.f32.mrb[0].mxu0
        %v2105 = vadd.f32 %v2035, %v2104
        %v2106 = vpop.f32.mrb[0].mxu0
        %2107 = vdwg.mxu0
        %2108 = vmatprep.subr.mxu0 0.0
        %2109 = vmatpush1.msra.mxu0 %v504
        %2110 = vmatprep.subr.mxu0 0.0
        %2111 = vmatpush1.msra.mxu0 %v505
        %2112 = vmatprep.subr.mxu0 0.0
        %2113 = vmatpush1.msra.mxu0 %v506
        %2114 = vmatprep.subr.mxu0 0.0
        %2115 = vmatpush1.msra.mxu0 %v507
        %2116 = vmatprep.subr.mxu0 0.0
        %2117 = vmatpush1.msra.mxu0 %v508
        %2118 = vmatprep.subr.mxu0 0.0
        %2119 = vmatpush1.msra.mxu0 %v509
        %2120 = vmatprep.subr.mxu0 0.0
        %2121 = vmatpush1.msra.mxu0 %v510
        %2122 = vmatprep.subr.mxu0 0.0
        %2123 = vmatpush1.msra.mxu0 %v511
        %2124 = vmatprep.subr.mxu0 0.0
        %2125 = vmatpush1.msra.mxu0 %v512
        %2126 = vmatprep.subr.mxu0 0.0
        %2127 = vmatpush1.msra.mxu0 %v513
        %2128 = vmatprep.subr.mxu0 0.0
        %2129 = vmatpush1.msra.mxu0 %v514
        %2130 = vmatprep.subr.mxu0 0.0
        %2131 = vmatpush1.msra.mxu0 %v515
        %2132 = vmatprep.subr.mxu0 0.0
        %2133 = vmatpush1.msra.mxu0 %v516
        %2134 = vmatprep.subr.mxu0 0.0
        %2135 = vmatpush1.msra.mxu0 %v517
        %2136 = vmatprep.subr.mxu0 0.0
        %2137 = vmatpush1.msra.mxu0 %v518
        %2138 = vmatprep.subr.mxu0 0.0
        %2139 = vmatpush1.msra.mxu0 %v519
        %2140 = vmatprep.subr.mxu0 0.0
        %2141 = vmatpush1.msra.mxu0 %v520
        %2142 = vmatprep.subr.mxu0 0.0
        %2143 = vmatpush1.msra.mxu0 %v521
        %2144 = vmatprep.subr.mxu0 0.0
        %2145 = vmatpush1.msra.mxu0 %v522
        %2146 = vmatprep.subr.mxu0 0.0
        %2147 = vmatpush1.msra.mxu0 %v523
        %2148 = vmatprep.subr.mxu0 0.0
        %2149 = vmatpush1.msra.mxu0 %v524
        %2150 = vmatprep.subr.mxu0 0.0
        %2151 = vmatpush1.msra.mxu0 %v525
        %2152 = vmatprep.subr.mxu0 0.0
        %2153 = vmatpush1.msra.mxu0 %v526
        %2154 = vmatprep.subr.mxu0 0.0
        %2155 = vmatpush1.msra.mxu0 %v527
        %2156 = vmatprep.subr.mxu0 0.0
        %2157 = vmatpush1.msra.mxu0 %v528
        %2158 = vmatprep.subr.mxu0 0.0
        %2159 = vmatpush1.msra.mxu0 %v529
        %2160 = vmatprep.subr.mxu0 0.0
        %2161 = vmatpush1.msra.mxu0 %v530
        %2162 = vmatprep.subr.mxu0 0.0
        %2163 = vmatpush1.msra.mxu0 %v531
        %2164 = vmatprep.subr.mxu0 0.0
        %2165 = vmatpush1.msra.mxu0 %v532
        %2166 = vmatprep.subr.mxu0 0.0
        %2167 = vmatpush1.msra.mxu0 %v533
        %2168 = vmatprep.subr.mxu0 0.0
        %2169 = vmatpush1.msra.mxu0 %v534
        %2170 = vmatprep.subr.mxu0 0.0
        %2171 = vmatpush1.msra.mxu0 %v535
        %2172 = vmatprep.mubr.f32.mxu0 %v1418
        %2173 = vmatmul.mubr.f32.gmra.mrb[0].mxu0 %v1410
        %v2174 = vpop.f32.mrb[0].mxu0
        %v2175 = vadd.f32 %v2105, %v2174
        %v2176 = vpop.f32.mrb[0].mxu0
        %2177 = vdwg.mxu0
        %2178 = vmatprep.subr.mxu0 0.0
        %2179 = vmatpush1.msra.mxu0 %v536
        %2180 = vmatprep.subr.mxu0 0.0
        %2181 = vmatpush1.msra.mxu0 %v537
        %2182 = vmatprep.subr.mxu0 0.0
        %2183 = vmatpush1.msra.mxu0 %v538
        %2184 = vmatprep.subr.mxu0 0.0
        %2185 = vmatpush1.msra.mxu0 %v539
        %2186 = vmatprep.subr.mxu0 0.0
        %2187 = vmatpush1.msra.mxu0 %v540
        %2188 = vmatprep.subr.mxu0 0.0
        %2189 = vmatpush1.msra.mxu0 %v541
        %2190 = vmatprep.subr.mxu0 0.0
        %2191 = vmatpush1.msra.mxu0 %v542
        %2192 = vmatprep.subr.mxu0 0.0
        %2193 = vmatpush1.msra.mxu0 %v543
        %2194 = vmatprep.subr.mxu0 0.0
        %2195 = vmatpush1.msra.mxu0 %v544
        %2196 = vmatprep.subr.mxu0 0.0
        %2197 = vmatpush1.msra.mxu0 %v545
        %2198 = vmatprep.subr.mxu0 0.0
        %2199 = vmatpush1.msra.mxu0 %v546
        %2200 = vmatprep.subr.mxu0 0.0
        %2201 = vmatpush1.msra.mxu0 %v547
        %2202 = vmatprep.subr.mxu0 0.0
        %2203 = vmatpush1.msra.mxu0 %v548
        %2204 = vmatprep.subr.mxu0 0.0
        %2205 = vmatpush1.msra.mxu0 %v549
        %2206 = vmatprep.subr.mxu0 0.0
        %2207 = vmatpush1.msra.mxu0 %v550
        %2208 = vmatprep.subr.mxu0 0.0
        %2209 = vmatpush1.msra.mxu0 %v551
        %2210 = vmatprep.subr.mxu0 0.0
        %2211 = vmatpush1.msra.mxu0 %v552
        %2212 = vmatprep.subr.mxu0 0.0
        %2213 = vmatpush1.msra.mxu0 %v553
        %2214 = vmatprep.subr.mxu0 0.0
        %2215 = vmatpush1.msra.mxu0 %v554
        %2216 = vmatprep.subr.mxu0 0.0
        %2217 = vmatpush1.msra.mxu0 %v555
        %2218 = vmatprep.subr.mxu0 0.0
        %2219 = vmatpush1.msra.mxu0 %v556
        %2220 = vmatprep.subr.mxu0 0.0
        %2221 = vmatpush1.msra.mxu0 %v557
        %2222 = vmatprep.subr.mxu0 0.0
        %2223 = vmatpush1.msra.mxu0 %v558
        %2224 = vmatprep.subr.mxu0 0.0
        %2225 = vmatpush1.msra.mxu0 %v559
        %2226 = vmatprep.subr.mxu0 0.0
        %2227 = vmatpush1.msra.mxu0 %v560
        %2228 = vmatprep.subr.mxu0 0.0
        %2229 = vmatpush1.msra.mxu0 %v561
        %2230 = vmatprep.subr.mxu0 0.0
        %2231 = vmatpush1.msra.mxu0 %v562
        %2232 = vmatprep.subr.mxu0 0.0
        %2233 = vmatpush1.msra.mxu0 %v563
        %2234 = vmatprep.subr.mxu0 0.0
        %2235 = vmatpush1.msra.mxu0 %v564
        %2236 = vmatprep.subr.mxu0 0.0
        %2237 = vmatpush1.msra.mxu0 %v565
        %2238 = vmatprep.subr.mxu0 0.0
        %2239 = vmatpush1.msra.mxu0 %v566
        %2240 = vmatprep.subr.mxu0 0.0
        %2241 = vmatpush1.msra.mxu0 %v567
        %2242 = vmatprep.mubr.f32.mxu0 %v1419
        %2243 = vmatmul.mubr.f32.gmra.mrb[0].mxu0 %v1417
        %v2244 = vpop.f32.mrb[0].mxu0
        %v2245 = vadd.f32 %v2175, %v2244
        %v2246 = vpop.f32.mrb[0].mxu0
        %2247 = vdwg.mxu0
        %2248 = vmatprep.subr.mxu0 0.0
        %2249 = vmatpush1.msra.mxu0 %v568
        %2250 = vmatprep.subr.mxu0 0.0
        %2251 = vmatpush1.msra.mxu0 %v569
        %2252 = vmatprep.subr.mxu0 0.0
        %2253 = vmatpush1.msra.mxu0 %v570
        %2254 = vmatprep.subr.mxu0 0.0
        %2255 = vmatpush1.msra.mxu0 %v571
        %2256 = vmatprep.subr.mxu0 0.0
        %2257 = vmatpush1.msra.mxu0 %v572
        %2258 = vmatprep.subr.mxu0 0.0
        %2259 = vmatpush1.msra.mxu0 %v573
        %2260 = vmatprep.subr.mxu0 0.0
        %2261 = vmatpush1.msra.mxu0 %v574
        %2262 = vmatprep.subr.mxu0 0.0
        %2263 = vmatpush1.msra.mxu0 %v575
        %2264 = vmatprep.subr.mxu0 0.0
        %2265 = vmatpush1.msra.mxu0 %v576
        %2266 = vmatprep.subr.mxu0 0.0
        %2267 = vmatpush1.msra.mxu0 %v577
        %2268 = vmatprep.subr.mxu0 0.0
        %2269 = vmatpush1.msra.mxu0 %v578
        %2270 = vmatprep.subr.mxu0 0.0
        %2271 = vmatpush1.msra.mxu0 %v579
        %2272 = vmatprep.subr.mxu0 0.0
        %2273 = vmatpush1.msra.mxu0 %v580
        %2274 = vmatprep.subr.mxu0 0.0
        %2275 = vmatpush1.msra.mxu0 %v581
        %2276 = vmatprep.subr.mxu0 0.0
        %2277 = vmatpush1.msra.mxu0 %v582
        %2278 = vmatprep.subr.mxu0 0.0
        %2279 = vmatpush1.msra.mxu0 %v583
        %2280 = vmatprep.subr.mxu0 0.0
        %2281 = vmatpush1.msra.mxu0 %v584
        %2282 = vmatprep.subr.mxu0 0.0
        %2283 = vmatpush1.msra.mxu0 %v585
        %2284 = vmatprep.subr.mxu0 0.0
        %2285 = vmatpush1.msra.mxu0 %v586
        %2286 = vmatprep.subr.mxu0 0.0
        %2287 = vmatpush1.msra.mxu0 %v587
        %2288 = vmatprep.subr.mxu0 0.0
        %2289 = vmatpush1.msra.mxu0 %v588
        %2290 = vmatprep.subr.mxu0 0.0
        %2291 = vmatpush1.msra.mxu0 %v589
        %2292 = vmatprep.subr.mxu0 0.0
        %2293 = vmatpush1.msra.mxu0 %v590
        %2294 = vmatprep.subr.mxu0 0.0
        %2295 = vmatpush1.msra.mxu0 %v591
        %2296 = vmatprep.subr.mxu0 0.0
        %2297 = vmatpush1.msra.mxu0 %v592
        %2298 = vmatprep.subr.mxu0 0.0
        %2299 = vmatpush1.msra.mxu0 %v593
        %2300 = vmatprep.subr.mxu0 0.0
        %2301 = vmatpush1.msra.mxu0 %v594
        %2302 = vmatprep.subr.mxu0 0.0
        %2303 = vmatpush1.msra.mxu0 %v595
        %2304 = vmatprep.subr.mxu0 0.0
        %2305 = vmatpush1.msra.mxu0 %v596
        %2306 = vmatprep.subr.mxu0 0.0
        %2307 = vmatpush1.msra.mxu0 %v597
        %2308 = vmatprep.subr.mxu0 0.0
        %2309 = vmatpush1.msra.mxu0 %v598
        %2310 = vmatprep.subr.mxu0 0.0
        %2311 = vmatpush1.msra.mxu0 %v599
        %2312 = vmatprep.mubr.f32.mxu0 %v1435
        %2313 = vmatmul.mubr.f32.gmra.mrb[0].mxu0 %v1427
        %v2314 = vpop.f32.mrb[0].mxu0
        %v2315 = vadd.f32 %v2245, %v2314
        %v2316 = vpop.f32.mrb[0].mxu0
        %2317 = vdwg.mxu0
        %2318 = vmatprep.subr.mxu0 0.0
        %2319 = vmatpush1.msra.mxu0 %v600
        %2320 = vmatprep.subr.mxu0 0.0
        %2321 = vmatpush1.msra.mxu0 %v601
        %2322 = vmatprep.subr.mxu0 0.0
        %2323 = vmatpush1.msra.mxu0 %v602
        %2324 = vmatprep.subr.mxu0 0.0
        %2325 = vmatpush1.msra.mxu0 %v603
        %2326 = vmatprep.subr.mxu0 0.0
        %2327 = vmatpush1.msra.mxu0 %v604
        %2328 = vmatprep.subr.mxu0 0.0
        %2329 = vmatpush1.msra.mxu0 %v605
        %2330 = vmatprep.subr.mxu0 0.0
        %2331 = vmatpush1.msra.mxu0 %v606
        %2332 = vmatprep.subr.mxu0 0.0
        %2333 = vmatpush1.msra.mxu0 %v607
        %2334 = vmatprep.subr.mxu0 0.0
        %2335 = vmatpush1.msra.mxu0 %v608
        %2336 = vmatprep.subr.mxu0 0.0
        %2337 = vmatpush1.msra.mxu0 %v609
        %2338 = vmatprep.subr.mxu0 0.0
        %2339 = vmatpush1.msra.mxu0 %v610
        %2340 = vmatprep.subr.mxu0 0.0
        %2341 = vmatpush1.msra.mxu0 %v611
        %2342 = vmatprep.subr.mxu0 0.0
        %2343 = vmatpush1.msra.mxu0 %v612
        %2344 = vmatprep.subr.mxu0 0.0
        %2345 = vmatpush1.msra.mxu0 %v613
        %2346 = vmatprep.subr.mxu0 0.0
        %2347 = vmatpush1.msra.mxu0 %v614
        %2348 = vmatprep.subr.mxu0 0.0
        %2349 = vmatpush1.msra.mxu0 %v615
        %2350 = vmatprep.subr.mxu0 0.0
        %2351 = vmatpush1.msra.mxu0 %v616
        %2352 = vmatprep.subr.mxu0 0.0
        %2353 = vmatpush1.msra.mxu0 %v617
        %2354 = vmatprep.subr.mxu0 0.0
        %2355 = vmatpush1.msra.mxu0 %v618
        %2356 = vmatprep.subr.mxu0 0.0
        %2357 = vmatpush1.msra.mxu0 %v619
        %2358 = vmatprep.subr.mxu0 0.0
        %2359 = vmatpush1.msra.mxu0 %v620
        %2360 = vmatprep.subr.mxu0 0.0
        %2361 = vmatpush1.msra.mxu0 %v621
        %2362 = vmatprep.subr.mxu0 0.0
        %2363 = vmatpush1.msra.mxu0 %v622
        %2364 = vmatprep.subr.mxu0 0.0
        %2365 = vmatpush1.msra.mxu0 %v623
        %2366 = vmatprep.subr.mxu0 0.0
        %2367 = vmatpush1.msra.mxu0 %v624
        %2368 = vmatprep.subr.mxu0 0.0
        %2369 = vmatpush1.msra.mxu0 %v625
        %2370 = vmatprep.subr.mxu0 0.0
        %2371 = vmatpush1.msra.mxu0 %v626
        %2372 = vmatprep.subr.mxu0 0.0
        %2373 = vmatpush1.msra.mxu0 %v627
        %2374 = vmatprep.subr.mxu0 0.0
        %2375 = vmatpush1.msra.mxu0 %v628
        %2376 = vmatprep.subr.mxu0 0.0
        %2377 = vmatpush1.msra.mxu0 %v629
        %2378 = vmatprep.subr.mxu0 0.0
        %2379 = vmatpush1.msra.mxu0 %v630
        %2380 = vmatprep.subr.mxu0 0.0
        %2381 = vmatpush1.msra.mxu0 %v631
        %2382 = vmatprep.mubr.f32.mxu0 %v1436
        %2383 = vmatmul.mubr.f32.gmra.mrb[0].mxu0 %v1434
        %v2384 = vpop.f32.mrb[0].mxu0
        %v2385 = vadd.f32 %v2315, %v2384
        %v2386 = vpop.f32.mrb[0].mxu0
        %2387 = vdwg.mxu0
        %2388 = vmatprep.subr.mxu0 0.0
        %2389 = vmatpush1.msra.mxu0 %v632
        %2390 = vmatprep.subr.mxu0 0.0
        %2391 = vmatpush1.msra.mxu0 %v633
        %2392 = vmatprep.subr.mxu0 0.0
        %2393 = vmatpush1.msra.mxu0 %v634
        %2394 = vmatprep.subr.mxu0 0.0
        %2395 = vmatpush1.msra.mxu0 %v635
        %2396 = vmatprep.subr.mxu0 0.0
        %2397 = vmatpush1.msra.mxu0 %v636
        %2398 = vmatprep.subr.mxu0 0.0
        %2399 = vmatpush1.msra.mxu0 %v637
        %2400 = vmatprep.subr.mxu0 0.0
        %2401 = vmatpush1.msra.mxu0 %v638
        %2402 = vmatprep.subr.mxu0 0.0
        %2403 = vmatpush1.msra.mxu0 %v639
        %2404 = vmatprep.subr.mxu0 0.0
        %2405 = vmatpush1.msra.mxu0 %v640
        %2406 = vmatprep.subr.mxu0 0.0
        %2407 = vmatpush1.msra.mxu0 %v641
        %2408 = vmatprep.subr.mxu0 0.0
        %2409 = vmatpush1.msra.mxu0 %v642
        %2410 = vmatprep.subr.mxu0 0.0
        %2411 = vmatpush1.msra.mxu0 %v643
        %2412 = vmatprep.subr.mxu0 0.0
        %2413 = vmatpush1.msra.mxu0 %v644
        %2414 = vmatprep.subr.mxu0 0.0
        %2415 = vmatpush1.msra.mxu0 %v645
        %2416 = vmatprep.subr.mxu0 0.0
        %2417 = vmatpush1.msra.mxu0 %v646
        %2418 = vmatprep.subr.mxu0 0.0
        %2419 = vmatpush1.msra.mxu0 %v647
        %2420 = vmatprep.subr.mxu0 0.0
        %2421 = vmatpush1.msra.mxu0 %v648
        %2422 = vmatprep.subr.mxu0 0.0
        %2423 = vmatpush1.msra.mxu0 %v649
        %2424 = vmatprep.subr.mxu0 0.0
        %2425 = vmatpush1.msra.mxu0 %v650
        %2426 = vmatprep.subr.mxu0 0.0
        %2427 = vmatpush1.msra.mxu0 %v651
        %2428 = vmatprep.subr.mxu0 0.0
        %2429 = vmatpush1.msra.mxu0 %v652
        %2430 = vmatprep.subr.mxu0 0.0
        %2431 = vmatpush1.msra.mxu0 %v653
        %2432 = vmatprep.subr.mxu0 0.0
        %2433 = vmatpush1.msra.mxu0 %v654
        %2434 = vmatprep.subr.mxu0 0.0
        %2435 = vmatpush1.msra.mxu0 %v655
        %2436 = vmatprep.subr.mxu0 0.0
        %2437 = vmatpush1.msra.mxu0 %v656
        %2438 = vmatprep.subr.mxu0 0.0
        %2439 = vmatpush1.msra.mxu0 %v657
        %2440 = vmatprep.subr.mxu0 0.0
        %2441 = vmatpush1.msra.mxu0 %v658
        %2442 = vmatprep.subr.mxu0 0.0
        %2443 = vmatpush1.msra.mxu0 %v659
        %2444 = vmatprep.subr.mxu0 0.0
        %2445 = vmatpush1.msra.mxu0 %v660
        %2446 = vmatprep.subr.mxu0 0.0
        %2447 = vmatpush1.msra.mxu0 %v661
        %2448 = vmatprep.subr.mxu0 0.0
        %2449 = vmatpush1.msra.mxu0 %v662
        %2450 = vmatprep.subr.mxu0 0.0
        %2451 = vmatpush1.msra.mxu0 %v663
        %2452 = vmatprep.mubr.f32.mxu0 %v1452
        %2453 = vmatmul.mubr.f32.gmra.mrb[0].mxu0 %v1444
        %v2454 = vpop.f32.mrb[0].mxu0
        %v2455 = vadd.f32 %v2385, %v2454
        %v2456 = vpop.f32.mrb[0].mxu0
        %2457 = vdwg.mxu0
        %2458 = vmatprep.subr.mxu0 0.0
        %2459 = vmatpush1.msra.mxu0 %v664
        %2460 = vmatprep.subr.mxu0 0.0
        %2461 = vmatpush1.msra.mxu0 %v665
        %2462 = vmatprep.subr.mxu0 0.0
        %2463 = vmatpush1.msra.mxu0 %v666
        %2464 = vmatprep.subr.mxu0 0.0
        %2465 = vmatpush1.msra.mxu0 %v667
        %2466 = vmatprep.subr.mxu0 0.0
        %2467 = vmatpush1.msra.mxu0 %v668
        %2468 = vmatprep.subr.mxu0 0.0
        %2469 = vmatpush1.msra.mxu0 %v669
        %2470 = vmatprep.subr.mxu0 0.0
        %2471 = vmatpush1.msra.mxu0 %v670
        %2472 = vmatprep.subr.mxu0 0.0
        %2473 = vmatpush1.msra.mxu0 %v671
        %2474 = vmatprep.subr.mxu0 0.0
        %2475 = vmatpush1.msra.mxu0 %v672
        %2476 = vmatprep.subr.mxu0 0.0
        %2477 = vmatpush1.msra.mxu0 %v673
        %2478 = vmatprep.subr.mxu0 0.0
        %2479 = vmatpush1.msra.mxu0 %v674
        %2480 = vmatprep.subr.mxu0 0.0
        %2481 = vmatpush1.msra.mxu0 %v675
        %2482 = vmatprep.subr.mxu0 0.0
        %2483 = vmatpush1.msra.mxu0 %v676
        %2484 = vmatprep.subr.mxu0 0.0
        %2485 = vmatpush1.msra.mxu0 %v677
        %2486 = vmatprep.subr.mxu0 0.0
        %2487 = vmatpush1.msra.mxu0 %v678
        %2488 = vmatprep.subr.mxu0 0.0
        %2489 = vmatpush1.msra.mxu0 %v679
        %2490 = vmatprep.subr.mxu0 0.0
        %2491 = vmatpush1.msra.mxu0 %v680
        %2492 = vmatprep.subr.mxu0 0.0
        %2493 = vmatpush1.msra.mxu0 %v681
        %2494 = vmatprep.subr.mxu0 0.0
        %2495 = vmatpush1.msra.mxu0 %v682
        %2496 = vmatprep.subr.mxu0 0.0
        %2497 = vmatpush1.msra.mxu0 %v683
        %2498 = vmatprep.subr.mxu0 0.0
        %2499 = vmatpush1.msra.mxu0 %v684
        %2500 = vmatprep.subr.mxu0 0.0
        %2501 = vmatpush1.msra.mxu0 %v685
        %2502 = vmatprep.subr.mxu0 0.0
        %2503 = vmatpush1.msra.mxu0 %v686
        %2504 = vmatprep.subr.mxu0 0.0
        %2505 = vmatpush1.msra.mxu0 %v687
        %2506 = vmatprep.subr.mxu0 0.0
        %2507 = vmatpush1.msra.mxu0 %v688
        %2508 = vmatprep.subr.mxu0 0.0
        %2509 = vmatpush1.msra.mxu0 %v689
        %2510 = vmatprep.subr.mxu0 0.0
        %2511 = vmatpush1.msra.mxu0 %v690
        %2512 = vmatprep.subr.mxu0 0.0
        %2513 = vmatpush1.msra.mxu0 %v691
        %2514 = vmatprep.subr.mxu0 0.0
        %2515 = vmatpush1.msra.mxu0 %v692
        %2516 = vmatprep.subr.mxu0 0.0
        %2517 = vmatpush1.msra.mxu0 %v693
        %2518 = vmatprep.subr.mxu0 0.0
        %2519 = vmatpush1.msra.mxu0 %v694
        %2520 = vmatprep.subr.mxu0 0.0
        %2521 = vmatpush1.msra.mxu0 %v695
        %2522 = vmatprep.mubr.f32.mxu0 %v1453
        %2523 = vmatmul.mubr.f32.gmra.mrb[0].mxu0 %v1451
        %v2524 = vpop.f32.mrb[0].mxu0
        %v2525 = vadd.f32 %v2455, %v2524
        %v2526 = vpop.f32.mrb[0].mxu0
        %2527 = vdwg.mxu0
        %2528 = vmatprep.subr.mxu0 0.0
        %2529 = vmatpush1.msra.mxu0 %v696
        %2530 = vmatprep.subr.mxu0 0.0
        %2531 = vmatpush1.msra.mxu0 %v697
        %2532 = vmatprep.subr.mxu0 0.0
        %2533 = vmatpush1.msra.mxu0 %v698
        %2534 = vmatprep.subr.mxu0 0.0
        %2535 = vmatpush1.msra.mxu0 %v699
        %2536 = vmatprep.subr.mxu0 0.0
        %2537 = vmatpush1.msra.mxu0 %v700
        %2538 = vmatprep.subr.mxu0 0.0
        %2539 = vmatpush1.msra.mxu0 %v701
        %2540 = vmatprep.subr.mxu0 0.0
        %2541 = vmatpush1.msra.mxu0 %v702
        %2542 = vmatprep.subr.mxu0 0.0
        %2543 = vmatpush1.msra.mxu0 %v703
        %2544 = vmatprep.subr.mxu0 0.0
        %2545 = vmatpush1.msra.mxu0 %v704
        %2546 = vmatprep.subr.mxu0 0.0
        %2547 = vmatpush1.msra.mxu0 %v705
        %2548 = vmatprep.subr.mxu0 0.0
        %2549 = vmatpush1.msra.mxu0 %v706
        %2550 = vmatprep.subr.mxu0 0.0
        %2551 = vmatpush1.msra.mxu0 %v707
        %2552 = vmatprep.subr.mxu0 0.0
        %2553 = vmatpush1.msra.mxu0 %v708
        %2554 = vmatprep.subr.mxu0 0.0
        %2555 = vmatpush1.msra.mxu0 %v709
        %2556 = vmatprep.subr.mxu0 0.0
        %2557 = vmatpush1.msra.mxu0 %v710
        %2558 = vmatprep.subr.mxu0 0.0
        %2559 = vmatpush1.msra.mxu0 %v711
        %2560 = vmatprep.subr.mxu0 0.0
        %2561 = vmatpush1.msra.mxu0 %v712
        %2562 = vmatprep.subr.mxu0 0.0
        %2563 = vmatpush1.msra.mxu0 %v713
        %2564 = vmatprep.subr.mxu0 0.0
        %2565 = vmatpush1.msra.mxu0 %v714
        %2566 = vmatprep.subr.mxu0 0.0
        %2567 = vmatpush1.msra.mxu0 %v715
        %2568 = vmatprep.subr.mxu0 0.0
        %2569 = vmatpush1.msra.mxu0 %v716
        %2570 = vmatprep.subr.mxu0 0.0
        %2571 = vmatpush1.msra.mxu0 %v717
        %2572 = vmatprep.subr.mxu0 0.0
        %2573 = vmatpush1.msra.mxu0 %v718
        %2574 = vmatprep.subr.mxu0 0.0
        %2575 = vmatpush1.msra.mxu0 %v719
        %2576 = vmatprep.subr.mxu0 0.0
        %2577 = vmatpush1.msra.mxu0 %v720
        %2578 = vmatprep.subr.mxu0 0.0
        %2579 = vmatpush1.msra.mxu0 %v721
        %2580 = vmatprep.subr.mxu0 0.0
        %2581 = vmatpush1.msra.mxu0 %v722
        %2582 = vmatprep.subr.mxu0 0.0
        %2583 = vmatpush1.msra.mxu0 %v723
        %2584 = vmatprep.subr.mxu0 0.0
        %2585 = vmatpush1.msra.mxu0 %v724
        %2586 = vmatprep.subr.mxu0 0.0
        %2587 = vmatpush1.msra.mxu0 %v725
        %2588 = vmatprep.subr.mxu0 0.0
        %2589 = vmatpush1.msra.mxu0 %v726
        %2590 = vmatprep.subr.mxu0 0.0
        %2591 = vmatpush1.msra.mxu0 %v727
        %2592 = vmatprep.mubr.f32.mxu0 %v1469
        %2593 = vmatmul.mubr.f32.gmra.mrb[0].mxu0 %v1461
        %v2594 = vpop.f32.mrb[0].mxu0
        %v2595 = vadd.f32 %v2525, %v2594
        %v2596 = vpop.f32.mrb[0].mxu0
        %2597 = vdwg.mxu0
        %2598 = vmatprep.subr.mxu0 0.0
        %2599 = vmatpush1.msra.mxu0 %v728
        %2600 = vmatprep.subr.mxu0 0.0
        %2601 = vmatpush1.msra.mxu0 %v729
        %2602 = vmatprep.subr.mxu0 0.0
        %2603 = vmatpush1.msra.mxu0 %v730
        %2604 = vmatprep.subr.mxu0 0.0
        %2605 = vmatpush1.msra.mxu0 %v731
        %2606 = vmatprep.subr.mxu0 0.0
        %2607 = vmatpush1.msra.mxu0 %v732
        %2608 = vmatprep.subr.mxu0 0.0
        %2609 = vmatpush1.msra.mxu0 %v733
        %2610 = vmatprep.subr.mxu0 0.0
        %2611 = vmatpush1.msra.mxu0 %v734
        %2612 = vmatprep.subr.mxu0 0.0
        %2613 = vmatpush1.msra.mxu0 %v735
        %2614 = vmatprep.subr.mxu0 0.0
        %2615 = vmatpush1.msra.mxu0 %v736
        %2616 = vmatprep.subr.mxu0 0.0
        %2617 = vmatpush1.msra.mxu0 %v737
        %2618 = vmatprep.subr.mxu0 0.0
        %2619 = vmatpush1.msra.mxu0 %v738
        %2620 = vmatprep.subr.mxu0 0.0
        %2621 = vmatpush1.msra.mxu0 %v739
        %2622 = vmatprep.subr.mxu0 0.0
        %2623 = vmatpush1.msra.mxu0 %v740
        %2624 = vmatprep.subr.mxu0 0.0
        %2625 = vmatpush1.msra.mxu0 %v741
        %2626 = vmatprep.subr.mxu0 0.0
        %2627 = vmatpush1.msra.mxu0 %v742
        %2628 = vmatprep.subr.mxu0 0.0
        %2629 = vmatpush1.msra.mxu0 %v743
        %2630 = vmatprep.subr.mxu0 0.0
        %2631 = vmatpush1.msra.mxu0 %v744
        %2632 = vmatprep.subr.mxu0 0.0
        %2633 = vmatpush1.msra.mxu0 %v745
        %2634 = vmatprep.subr.mxu0 0.0
        %2635 = vmatpush1.msra.mxu0 %v746
        %2636 = vmatprep.subr.mxu0 0.0
        %2637 = vmatpush1.msra.mxu0 %v747
        %2638 = vmatprep.subr.mxu0 0.0
        %2639 = vmatpush1.msra.mxu0 %v748
        %2640 = vmatprep.subr.mxu0 0.0
        %2641 = vmatpush1.msra.mxu0 %v749
        %2642 = vmatprep.subr.mxu0 0.0
        %2643 = vmatpush1.msra.mxu0 %v750
        %2644 = vmatprep.subr.mxu0 0.0
        %2645 = vmatpush1.msra.mxu0 %v751
        %2646 = vmatprep.subr.mxu0 0.0
        %2647 = vmatpush1.msra.mxu0 %v752
        %2648 = vmatprep.subr.mxu0 0.0
        %2649 = vmatpush1.msra.mxu0 %v753
        %2650 = vmatprep.subr.mxu0 0.0
        %2651 = vmatpush1.msra.mxu0 %v754
        %2652 = vmatprep.subr.mxu0 0.0
        %2653 = vmatpush1.msra.mxu0 %v755
        %2654 = vmatprep.subr.mxu0 0.0
        %2655 = vmatpush1.msra.mxu0 %v756
        %2656 = vmatprep.subr.mxu0 0.0
        %2657 = vmatpush1.msra.mxu0 %v757
        %2658 = vmatprep.subr.mxu0 0.0
        %2659 = vmatpush1.msra.mxu0 %v758
        %2660 = vmatprep.subr.mxu0 0.0
        %2661 = vmatpush1.msra.mxu0 %v759
        %2662 = vmatprep.mubr.f32.mxu0 %v1470
        %2663 = vmatmul.mubr.f32.gmra.mrb[0].mxu0 %v1468
        %v2664 = vpop.f32.mrb[0].mxu0
        %v2665 = vadd.f32 %v2595, %v2664
        %v2666 = vpop.f32.mrb[0].mxu0
        %2667 = vdwg.mxu0
        %2668 = vmatprep.subr.mxu0 0.0
        %2669 = vmatpush1.msra.mxu0 %v760
        %2670 = vmatprep.subr.mxu0 0.0
        %2671 = vmatpush1.msra.mxu0 %v761
        %2672 = vmatprep.subr.mxu0 0.0
        %2673 = vmatpush1.msra.mxu0 %v762
        %2674 = vmatprep.subr.mxu0 0.0
        %2675 = vmatpush1.msra.mxu0 %v763
        %2676 = vmatprep.subr.mxu0 0.0
        %2677 = vmatpush1.msra.mxu0 %v764
        %2678 = vmatprep.subr.mxu0 0.0
        %2679 = vmatpush1.msra.mxu0 %v765
        %2680 = vmatprep.subr.mxu0 0.0
        %2681 = vmatpush1.msra.mxu0 %v766
        %2682 = vmatprep.subr.mxu0 0.0
        %2683 = vmatpush1.msra.mxu0 %v767
        %2684 = vmatprep.subr.mxu0 0.0
        %2685 = vmatpush1.msra.mxu0 %v768
        %2686 = vmatprep.subr.mxu0 0.0
        %2687 = vmatpush1.msra.mxu0 %v769
        %2688 = vmatprep.subr.mxu0 0.0
        %2689 = vmatpush1.msra.mxu0 %v770
        %2690 = vmatprep.subr.mxu0 0.0
        %2691 = vmatpush1.msra.mxu0 %v771
        %2692 = vmatprep.subr.mxu0 0.0
        %2693 = vmatpush1.msra.mxu0 %v772
        %2694 = vmatprep.subr.mxu0 0.0
        %2695 = vmatpush1.msra.mxu0 %v773
        %2696 = vmatprep.subr.mxu0 0.0
        %2697 = vmatpush1.msra.mxu0 %v774
        %2698 = vmatprep.subr.mxu0 0.0
        %2699 = vmatpush1.msra.mxu0 %v775
        %2700 = vmatprep.subr.mxu0 0.0
        %2701 = vmatpush1.msra.mxu0 %v776
        %2702 = vmatprep.subr.mxu0 0.0
        %2703 = vmatpush1.msra.mxu0 %v777
        %2704 = vmatprep.subr.mxu0 0.0
        %2705 = vmatpush1.msra.mxu0 %v778
        %2706 = vmatprep.subr.mxu0 0.0
        %2707 = vmatpush1.msra.mxu0 %v779
        %2708 = vmatprep.subr.mxu0 0.0
        %2709 = vmatpush1.msra.mxu0 %v780
        %2710 = vmatprep.subr.mxu0 0.0
        %2711 = vmatpush1.msra.mxu0 %v781
        %2712 = vmatprep.subr.mxu0 0.0
        %2713 = vmatpush1.msra.mxu0 %v782
        %2714 = vmatprep.subr.mxu0 0.0
        %2715 = vmatpush1.msra.mxu0 %v783
        %2716 = vmatprep.subr.mxu0 0.0
        %2717 = vmatpush1.msra.mxu0 %v784
        %2718 = vmatprep.subr.mxu0 0.0
        %2719 = vmatpush1.msra.mxu0 %v785
        %2720 = vmatprep.subr.mxu0 0.0
        %2721 = vmatpush1.msra.mxu0 %v786
        %2722 = vmatprep.subr.mxu0 0.0
        %2723 = vmatpush1.msra.mxu0 %v787
        %2724 = vmatprep.subr.mxu0 0.0
        %2725 = vmatpush1.msra.mxu0 %v788
        %2726 = vmatprep.subr.mxu0 0.0
        %2727 = vmatpush1.msra.mxu0 %v789
        %2728 = vmatprep.subr.mxu0 0.0
        %2729 = vmatpush1.msra.mxu0 %v790
        %2730 = vmatprep.subr.mxu0 0.0
        %2731 = vmatpush1.msra.mxu0 %v791
        %2732 = vmatprep.mubr.f32.mxu0 %v1486
        %2733 = vmatmul.mubr.f32.gmra.mrb[0].mxu0 %v1478
        %v2734 = vpop.f32.mrb[0].mxu0
        %v2735 = vadd.f32 %v2665, %v2734
        %v2736 = vpop.f32.mrb[0].mxu0
        %2737 = vdwg.mxu0
        %2738 = vmatprep.subr.mxu0 0.0
        %2739 = vmatpush1.msra.mxu0 %v792
        %2740 = vmatprep.subr.mxu0 0.0
        %2741 = vmatpush1.msra.mxu0 %v793
        %2742 = vmatprep.subr.mxu0 0.0
        %2743 = vmatpush1.msra.mxu0 %v794
        %2744 = vmatprep.subr.mxu0 0.0
        %2745 = vmatpush1.msra.mxu0 %v795
        %2746 = vmatprep.subr.mxu0 0.0
        %2747 = vmatpush1.msra.mxu0 %v796
        %2748 = vmatprep.subr.mxu0 0.0
        %2749 = vmatpush1.msra.mxu0 %v797
        %2750 = vmatprep.subr.mxu0 0.0
        %2751 = vmatpush1.msra.mxu0 %v798
        %2752 = vmatprep.subr.mxu0 0.0
        %2753 = vmatpush1.msra.mxu0 %v799
        %2754 = vmatprep.subr.mxu0 0.0
        %2755 = vmatpush1.msra.mxu0 %v800
        %2756 = vmatprep.subr.mxu0 0.0
        %2757 = vmatpush1.msra.mxu0 %v801
        %2758 = vmatprep.subr.mxu0 0.0
        %2759 = vmatpush1.msra.mxu0 %v802
        %2760 = vmatprep.subr.mxu0 0.0
        %2761 = vmatpush1.msra.mxu0 %v803
        %2762 = vmatprep.subr.mxu0 0.0
        %2763 = vmatpush1.msra.mxu0 %v804
        %2764 = vmatprep.subr.mxu0 0.0
        %2765 = vmatpush1.msra.mxu0 %v805
        %2766 = vmatprep.subr.mxu0 0.0
        %2767 = vmatpush1.msra.mxu0 %v806
        %2768 = vmatprep.subr.mxu0 0.0
        %2769 = vmatpush1.msra.mxu0 %v807
        %2770 = vmatprep.subr.mxu0 0.0
        %2771 = vmatpush1.msra.mxu0 %v808
        %2772 = vmatprep.subr.mxu0 0.0
        %2773 = vmatpush1.msra.mxu0 %v809
        %2774 = vmatprep.subr.mxu0 0.0
        %2775 = vmatpush1.msra.mxu0 %v810
        %2776 = vmatprep.subr.mxu0 0.0
        %2777 = vmatpush1.msra.mxu0 %v811
        %2778 = vmatprep.subr.mxu0 0.0
        %2779 = vmatpush1.msra.mxu0 %v812
        %2780 = vmatprep.subr.mxu0 0.0
        %2781 = vmatpush1.msra.mxu0 %v813
        %2782 = vmatprep.subr.mxu0 0.0
        %2783 = vmatpush1.msra.mxu0 %v814
        %2784 = vmatprep.subr.mxu0 0.0
        %2785 = vmatpush1.msra.mxu0 %v815
        %2786 = vmatprep.subr.mxu0 0.0
        %2787 = vmatpush1.msra.mxu0 %v816
        %2788 = vmatprep.subr.mxu0 0.0
        %2789 = vmatpush1.msra.mxu0 %v817
        %2790 = vmatprep.subr.mxu0 0.0
        %2791 = vmatpush1.msra.mxu0 %v818
        %2792 = vmatprep.subr.mxu0 0.0
        %2793 = vmatpush1.msra.mxu0 %v819
        %2794 = vmatprep.subr.mxu0 0.0
        %2795 = vmatpush1.msra.mxu0 %v820
        %2796 = vmatprep.subr.mxu0 0.0
        %2797 = vmatpush1.msra.mxu0 %v821
        %2798 = vmatprep.subr.mxu0 0.0
        %2799 = vmatpush1.msra.mxu0 %v822
        %2800 = vmatprep.subr.mxu0 0.0
        %2801 = vmatpush1.msra.mxu0 %v823
        %2802 = vmatprep.mubr.f32.mxu0 %v1487
        %2803 = vmatmul.mubr.f32.gmra.mrb[0].mxu0 %v1485
        %v2804 = vpop.f32.mrb[0].mxu0
        %v2805 = vadd.f32 %v2735, %v2804
        %v2806 = vpop.f32.mrb[0].mxu0
        %2807 = vdwg.mxu0
        %2808 = vmatprep.subr.mxu0 0.0
        %2809 = vmatpush1.msra.mxu0 %v824
        %2810 = vmatprep.subr.mxu0 0.0
        %2811 = vmatpush1.msra.mxu0 %v825
        %2812 = vmatprep.subr.mxu0 0.0
        %2813 = vmatpush1.msra.mxu0 %v826
        %2814 = vmatprep.subr.mxu0 0.0
        %2815 = vmatpush1.msra.mxu0 %v827
        %2816 = vmatprep.subr.mxu0 0.0
        %2817 = vmatpush1.msra.mxu0 %v828
        %2818 = vmatprep.subr.mxu0 0.0
        %2819 = vmatpush1.msra.mxu0 %v829
        %2820 = vmatprep.subr.mxu0 0.0
        %2821 = vmatpush1.msra.mxu0 %v830
        %2822 = vmatprep.subr.mxu0 0.0
        %2823 = vmatpush1.msra.mxu0 %v831
        %2824 = vmatprep.subr.mxu0 0.0
        %2825 = vmatpush1.msra.mxu0 %v832
        %2826 = vmatprep.subr.mxu0 0.0
        %2827 = vmatpush1.msra.mxu0 %v833
        %2828 = vmatprep.subr.mxu0 0.0
        %2829 = vmatpush1.msra.mxu0 %v834
        %2830 = vmatprep.subr.mxu0 0.0
        %2831 = vmatpush1.msra.mxu0 %v835
        %2832 = vmatprep.subr.mxu0 0.0
        %2833 = vmatpush1.msra.mxu0 %v836
        %2834 = vmatprep.subr.mxu0 0.0
        %2835 = vmatpush1.msra.mxu0 %v837
        %2836 = vmatprep.subr.mxu0 0.0
        %2837 = vmatpush1.msra.mxu0 %v838
        %2838 = vmatprep.subr.mxu0 0.0
        %2839 = vmatpush1.msra.mxu0 %v839
        %2840 = vmatprep.subr.mxu0 0.0
        %2841 = vmatpush1.msra.mxu0 %v840
        %2842 = vmatprep.subr.mxu0 0.0
        %2843 = vmatpush1.msra.mxu0 %v841
        %2844 = vmatprep.subr.mxu0 0.0
        %2845 = vmatpush1.msra.mxu0 %v842
        %2846 = vmatprep.subr.mxu0 0.0
        %2847 = vmatpush1.msra.mxu0 %v843
        %2848 = vmatprep.subr.mxu0 0.0
        %2849 = vmatpush1.msra.mxu0 %v844
        %2850 = vmatprep.subr.mxu0 0.0
        %2851 = vmatpush1.msra.mxu0 %v845
        %2852 = vmatprep.subr.mxu0 0.0
        %2853 = vmatpush1.msra.mxu0 %v846
        %2854 = vmatprep.subr.mxu0 0.0
        %2855 = vmatpush1.msra.mxu0 %v847
        %2856 = vmatprep.subr.mxu0 0.0
        %2857 = vmatpush1.msra.mxu0 %v848
        %2858 = vmatprep.subr.mxu0 0.0
        %2859 = vmatpush1.msra.mxu0 %v849
        %2860 = vmatprep.subr.mxu0 0.0
        %2861 = vmatpush1.msra.mxu0 %v850
        %2862 = vmatprep.subr.mxu0 0.0
        %2863 = vmatpush1.msra.mxu0 %v851
        %2864 = vmatprep.subr.mxu0 0.0
        %2865 = vmatpush1.msra.mxu0 %v852
        %2866 = vmatprep.subr.mxu0 0.0
        %2867 = vmatpush1.msra.mxu0 %v853
        %2868 = vmatprep.subr.mxu0 0.0
        %2869 = vmatpush1.msra.mxu0 %v854
        %2870 = vmatprep.subr.mxu0 0.0
        %2871 = vmatpush1.msra.mxu0 %v855
        %2872 = vmatprep.mubr.f32.mxu0 %v1503
        %2873 = vmatmul.mubr.f32.gmra.mrb[0].mxu0 %v1495
        %v2874 = vpop.f32.mrb[0].mxu0
        %v2875 = vadd.f32 %v2805, %v2874
        %v2876 = vpop.f32.mrb[0].mxu0
        %2877 = vdwg.mxu0
        %2878 = vmatprep.subr.mxu0 0.0
        %2879 = vmatpush1.msra.mxu0 %v856
        %2880 = vmatprep.subr.mxu0 0.0
        %2881 = vmatpush1.msra.mxu0 %v857
        %2882 = vmatprep.subr.mxu0 0.0
        %2883 = vmatpush1.msra.mxu0 %v858
        %2884 = vmatprep.subr.mxu0 0.0
        %2885 = vmatpush1.msra.mxu0 %v859
        %2886 = vmatprep.subr.mxu0 0.0
        %2887 = vmatpush1.msra.mxu0 %v860
        %2888 = vmatprep.subr.mxu0 0.0
        %2889 = vmatpush1.msra.mxu0 %v861
        %2890 = vmatprep.subr.mxu0 0.0
        %2891 = vmatpush1.msra.mxu0 %v862
        %2892 = vmatprep.subr.mxu0 0.0
        %2893 = vmatpush1.msra.mxu0 %v863
        %2894 = vmatprep.subr.mxu0 0.0
        %2895 = vmatpush1.msra.mxu0 %v864
        %2896 = vmatprep.subr.mxu0 0.0
        %2897 = vmatpush1.msra.mxu0 %v865
        %2898 = vmatprep.subr.mxu0 0.0
        %2899 = vmatpush1.msra.mxu0 %v866
        %2900 = vmatprep.subr.mxu0 0.0
        %2901 = vmatpush1.msra.mxu0 %v867
        %2902 = vmatprep.subr.mxu0 0.0
        %2903 = vmatpush1.msra.mxu0 %v868
        %2904 = vmatprep.subr.mxu0 0.0
        %2905 = vmatpush1.msra.mxu0 %v869
        %2906 = vmatprep.subr.mxu0 0.0
        %2907 = vmatpush1.msra.mxu0 %v870
        %2908 = vmatprep.subr.mxu0 0.0
        %2909 = vmatpush1.msra.mxu0 %v871
        %2910 = vmatprep.subr.mxu0 0.0
        %2911 = vmatpush1.msra.mxu0 %v872
        %2912 = vmatprep.subr.mxu0 0.0
        %2913 = vmatpush1.msra.mxu0 %v873
        %2914 = vmatprep.subr.mxu0 0.0
        %2915 = vmatpush1.msra.mxu0 %v874
        %2916 = vmatprep.subr.mxu0 0.0
        %2917 = vmatpush1.msra.mxu0 %v875
        %2918 = vmatprep.subr.mxu0 0.0
        %2919 = vmatpush1.msra.mxu0 %v876
        %2920 = vmatprep.subr.mxu0 0.0
        %2921 = vmatpush1.msra.mxu0 %v877
        %2922 = vmatprep.subr.mxu0 0.0
        %2923 = vmatpush1.msra.mxu0 %v878
        %2924 = vmatprep.subr.mxu0 0.0
        %2925 = vmatpush1.msra.mxu0 %v879
        %2926 = vmatprep.subr.mxu0 0.0
        %2927 = vmatpush1.msra.mxu0 %v880
        %2928 = vmatprep.subr.mxu0 0.0
        %2929 = vmatpush1.msra.mxu0 %v881
        %2930 = vmatprep.subr.mxu0 0.0
        %2931 = vmatpush1.msra.mxu0 %v882
        %2932 = vmatprep.subr.mxu0 0.0
        %2933 = vmatpush1.msra.mxu0 %v883
        %2934 = vmatprep.subr.mxu0 0.0
        %2935 = vmatpush1.msra.mxu0 %v884
        %2936 = vmatprep.subr.mxu0 0.0
        %2937 = vmatpush1.msra.mxu0 %v885
        %2938 = vmatprep.subr.mxu0 0.0
        %2939 = vmatpush1.msra.mxu0 %v886
        %2940 = vmatprep.subr.mxu0 0.0
        %2941 = vmatpush1.msra.mxu0 %v887
        %2942 = vmatprep.mubr.f32.mxu0 %v1504
        %2943 = vmatmul.mubr.f32.gmra.mrb[0].mxu0 %v1502
        %v2944 = vpop.f32.mrb[0].mxu0
        %v2945 = vadd.f32 %v2875, %v2944
        %v2946 = vpop.f32.mrb[0].mxu0
        %2947 = vdwg.mxu0
        %2948 = vmatprep.subr.mxu0 0.0
        %2949 = vmatpush1.msra.mxu0 %v888
        %2950 = vmatprep.subr.mxu0 0.0
        %2951 = vmatpush1.msra.mxu0 %v889
        %2952 = vmatprep.subr.mxu0 0.0
        %2953 = vmatpush1.msra.mxu0 %v890
        %2954 = vmatprep.subr.mxu0 0.0
        %2955 = vmatpush1.msra.mxu0 %v891
        %2956 = vmatprep.subr.mxu0 0.0
        %2957 = vmatpush1.msra.mxu0 %v892
        %2958 = vmatprep.subr.mxu0 0.0
        %2959 = vmatpush1.msra.mxu0 %v893
        %2960 = vmatprep.subr.mxu0 0.0
        %2961 = vmatpush1.msra.mxu0 %v894
        %2962 = vmatprep.subr.mxu0 0.0
        %2963 = vmatpush1.msra.mxu0 %v895
        %2964 = vmatprep.subr.mxu0 0.0
        %2965 = vmatpush1.msra.mxu0 %v896
        %2966 = vmatprep.subr.mxu0 0.0
        %2967 = vmatpush1.msra.mxu0 %v897
        %2968 = vmatprep.subr.mxu0 0.0
        %2969 = vmatpush1.msra.mxu0 %v898
        %2970 = vmatprep.subr.mxu0 0.0
        %2971 = vmatpush1.msra.mxu0 %v899
        %2972 = vmatprep.subr.mxu0 0.0
        %2973 = vmatpush1.msra.mxu0 %v900
        %2974 = vmatprep.subr.mxu0 0.0
        %2975 = vmatpush1.msra.mxu0 %v901
        %2976 = vmatprep.subr.mxu0 0.0
        %2977 = vmatpush1.msra.mxu0 %v902
        %2978 = vmatprep.subr.mxu0 0.0
        %2979 = vmatpush1.msra.mxu0 %v903
        %2980 = vmatprep.subr.mxu0 0.0
        %2981 = vmatpush1.msra.mxu0 %v904
        %2982 = vmatprep.subr.mxu0 0.0
        %2983 = vmatpush1.msra.mxu0 %v905
        %2984 = vmatprep.subr.mxu0 0.0
        %2985 = vmatpush1.msra.mxu0 %v906
        %2986 = vmatprep.subr.mxu0 0.0
        %2987 = vmatpush1.msra.mxu0 %v907
        %2988 = vmatprep.subr.mxu0 0.0
        %2989 = vmatpush1.msra.mxu0 %v908
        %2990 = vmatprep.subr.mxu0 0.0
        %2991 = vmatpush1.msra.mxu0 %v909
        %2992 = vmatprep.subr.mxu0 0.0
        %2993 = vmatpush1.msra.mxu0 %v910
        %2994 = vmatprep.subr.mxu0 0.0
        %2995 = vmatpush1.msra.mxu0 %v911
        %2996 = vmatprep.subr.mxu0 0.0
        %2997 = vmatpush1.msra.mxu0 %v912
        %2998 = vmatprep.subr.mxu0 0.0
        %2999 = vmatpush1.msra.mxu0 %v913
        %3000 = vmatprep.subr.mxu0 0.0
        %3001 = vmatpush1.msra.mxu0 %v914
        %3002 = vmatprep.subr.mxu0 0.0
        %3003 = vmatpush1.msra.mxu0 %v915
        %3004 = vmatprep.subr.mxu0 0.0
        %3005 = vmatpush1.msra.mxu0 %v916
        %3006 = vmatprep.subr.mxu0 0.0
        %3007 = vmatpush1.msra.mxu0 %v917
        %3008 = vmatprep.subr.mxu0 0.0
        %3009 = vmatpush1.msra.mxu0 %v918
        %3010 = vmatprep.subr.mxu0 0.0
        %3011 = vmatpush1.msra.mxu0 %v919
        %3012 = vmatprep.mubr.f32.mxu0 %v1520
        %3013 = vmatmul.mubr.f32.gmra.mrb[0].mxu0 %v1512
        %v3014 = vpop.f32.mrb[0].mxu0
        %v3015 = vadd.f32 %v2945, %v3014
        %v3016 = vpop.f32.mrb[0].mxu0
        %3017 = vdwg.mxu0
        %3018 = vmatprep.subr.mxu0 0.0
        %3019 = vmatpush1.msra.mxu0 %v920
        %3020 = vmatprep.subr.mxu0 0.0
        %3021 = vmatpush1.msra.mxu0 %v921
        %3022 = vmatprep.subr.mxu0 0.0
        %3023 = vmatpush1.msra.mxu0 %v922
        %3024 = vmatprep.subr.mxu0 0.0
        %3025 = vmatpush1.msra.mxu0 %v923
        %3026 = vmatprep.subr.mxu0 0.0
        %3027 = vmatpush1.msra.mxu0 %v924
        %3028 = vmatprep.subr.mxu0 0.0
        %3029 = vmatpush1.msra.mxu0 %v925
        %3030 = vmatprep.subr.mxu0 0.0
        %3031 = vmatpush1.msra.mxu0 %v926
        %3032 = vmatprep.subr.mxu0 0.0
        %3033 = vmatpush1.msra.mxu0 %v927
        %3034 = vmatprep.subr.mxu0 0.0
        %3035 = vmatpush1.msra.mxu0 %v928
        %3036 = vmatprep.subr.mxu0 0.0
        %3037 = vmatpush1.msra.mxu0 %v929
        %3038 = vmatprep.subr.mxu0 0.0
        %3039 = vmatpush1.msra.mxu0 %v930
        %3040 = vmatprep.subr.mxu0 0.0
        %3041 = vmatpush1.msra.mxu0 %v931
        %3042 = vmatprep.subr.mxu0 0.0
        %3043 = vmatpush1.msra.mxu0 %v932
        %3044 = vmatprep.subr.mxu0 0.0
        %3045 = vmatpush1.msra.mxu0 %v933
        %3046 = vmatprep.subr.mxu0 0.0
        %3047 = vmatpush1.msra.mxu0 %v934
        %3048 = vmatprep.subr.mxu0 0.0
        %3049 = vmatpush1.msra.mxu0 %v935
        %3050 = vmatprep.subr.mxu0 0.0
        %3051 = vmatpush1.msra.mxu0 %v936
        %3052 = vmatprep.subr.mxu0 0.0
        %3053 = vmatpush1.msra.mxu0 %v937
        %3054 = vmatprep.subr.mxu0 0.0
        %3055 = vmatpush1.msra.mxu0 %v938
        %3056 = vmatprep.subr.mxu0 0.0
        %3057 = vmatpush1.msra.mxu0 %v939
        %3058 = vmatprep.subr.mxu0 0.0
        %3059 = vmatpush1.msra.mxu0 %v940
        %3060 = vmatprep.subr.mxu0 0.0
        %3061 = vmatpush1.msra.mxu0 %v941
        %3062 = vmatprep.subr.mxu0 0.0
        %3063 = vmatpush1.msra.mxu0 %v942
        %3064 = vmatprep.subr.mxu0 0.0
        %3065 = vmatpush1.msra.mxu0 %v943
        %3066 = vmatprep.subr.mxu0 0.0
        %3067 = vmatpush1.msra.mxu0 %v944
        %3068 = vmatprep.subr.mxu0 0.0
        %3069 = vmatpush1.msra.mxu0 %v945
        %3070 = vmatprep.subr.mxu0 0.0
        %3071 = vmatpush1.msra.mxu0 %v946
        %3072 = vmatprep.subr.mxu0 0.0
        %3073 = vmatpush1.msra.mxu0 %v947
        %3074 = vmatprep.subr.mxu0 0.0
        %3075 = vmatpush1.msra.mxu0 %v948
        %3076 = vmatprep.subr.mxu0 0.0
        %3077 = vmatpush1.msra.mxu0 %v949
        %3078 = vmatprep.subr.mxu0 0.0
        %3079 = vmatpush1.msra.mxu0 %v950
        %3080 = vmatprep.subr.mxu0 0.0
        %3081 = vmatpush1.msra.mxu0 %v951
        %3082 = vmatprep.mubr.f32.mxu0 %v1521
        %3083 = vmatmul.mubr.f32.gmra.mrb[0].mxu0 %v1519
        %v3084 = vpop.f32.mrb[0].mxu0
        %v3085 = vadd.f32 %v3015, %v3084
        %v3086 = vpop.f32.mrb[0].mxu0
        %3087 = vdwg.mxu0
        %3088 = vmatprep.subr.mxu0 0.0
        %3089 = vmatpush1.msra.mxu0 %v952
        %3090 = vmatprep.subr.mxu0 0.0
        %3091 = vmatpush1.msra.mxu0 %v953
        %3092 = vmatprep.subr.mxu0 0.0
        %3093 = vmatpush1.msra.mxu0 %v954
        %3094 = vmatprep.subr.mxu0 0.0
        %3095 = vmatpush1.msra.mxu0 %v955
        %3096 = vmatprep.subr.mxu0 0.0
        %3097 = vmatpush1.msra.mxu0 %v956
        %3098 = vmatprep.subr.mxu0 0.0
        %3099 = vmatpush1.msra.mxu0 %v957
        %3100 = vmatprep.subr.mxu0 0.0
        %3101 = vmatpush1.msra.mxu0 %v958
        %3102 = vmatprep.subr.mxu0 0.0
        %3103 = vmatpush1.msra.mxu0 %v959
        %3104 = vmatprep.subr.mxu0 0.0
        %3105 = vmatpush1.msra.mxu0 %v960
        %3106 = vmatprep.subr.mxu0 0.0
        %3107 = vmatpush1.msra.mxu0 %v961
        %3108 = vmatprep.subr.mxu0 0.0
        %3109 = vmatpush1.msra.mxu0 %v962
        %3110 = vmatprep.subr.mxu0 0.0
        %3111 = vmatpush1.msra.mxu0 %v963
        %3112 = vmatprep.subr.mxu0 0.0
        %3113 = vmatpush1.msra.mxu0 %v964
        %3114 = vmatprep.subr.mxu0 0.0
        %3115 = vmatpush1.msra.mxu0 %v965
        %3116 = vmatprep.subr.mxu0 0.0
        %3117 = vmatpush1.msra.mxu0 %v966
        %3118 = vmatprep.subr.mxu0 0.0
        %3119 = vmatpush1.msra.mxu0 %v967
        %3120 = vmatprep.subr.mxu0 0.0
        %3121 = vmatpush1.msra.mxu0 %v968
        %3122 = vmatprep.subr.mxu0 0.0
        %3123 = vmatpush1.msra.mxu0 %v969
        %3124 = vmatprep.subr.mxu0 0.0
        %3125 = vmatpush1.msra.mxu0 %v970
        %3126 = vmatprep.subr.mxu0 0.0
        %3127 = vmatpush1.msra.mxu0 %v971
        %3128 = vmatprep.subr.mxu0 0.0
        %3129 = vmatpush1.msra.mxu0 %v972
        %3130 = vmatprep.subr.mxu0 0.0
        %3131 = vmatpush1.msra.mxu0 %v973
        %3132 = vmatprep.subr.mxu0 0.0
        %3133 = vmatpush1.msra.mxu0 %v974
        %3134 = vmatprep.subr.mxu0 0.0
        %3135 = vmatpush1.msra.mxu0 %v975
        %3136 = vmatprep.subr.mxu0 0.0
        %3137 = vmatpush1.msra.mxu0 %v976
        %3138 = vmatprep.subr.mxu0 0.0
        %3139 = vmatpush1.msra.mxu0 %v977
        %3140 = vmatprep.subr.mxu0 0.0
        %3141 = vmatpush1.msra.mxu0 %v978
        %3142 = vmatprep.subr.mxu0 0.0
        %3143 = vmatpush1.msra.mxu0 %v979
        %3144 = vmatprep.subr.mxu0 0.0
        %3145 = vmatpush1.msra.mxu0 %v980
        %3146 = vmatprep.subr.mxu0 0.0
        %3147 = vmatpush1.msra.mxu0 %v981
        %3148 = vmatprep.subr.mxu0 0.0
        %3149 = vmatpush1.msra.mxu0 %v982
        %3150 = vmatprep.subr.mxu0 0.0
        %3151 = vmatpush1.msra.mxu0 %v983
        %3152 = vmatprep.mubr.f32.mxu0 %v1537
        %3153 = vmatmul.mubr.f32.gmra.mrb[0].mxu0 %v1529
        %v3154 = vpop.f32.mrb[0].mxu0
        %v3155 = vadd.f32 %v3085, %v3154
        %v3156 = vpop.f32.mrb[0].mxu0
        %3157 = vdwg.mxu0
        %3158 = vmatprep.subr.mxu0 0.0
        %3159 = vmatpush1.msra.mxu0 %v984
        %3160 = vmatprep.subr.mxu0 0.0
        %3161 = vmatpush1.msra.mxu0 %v985
        %3162 = vmatprep.subr.mxu0 0.0
        %3163 = vmatpush1.msra.mxu0 %v986
        %3164 = vmatprep.subr.mxu0 0.0
        %3165 = vmatpush1.msra.mxu0 %v987
        %3166 = vmatprep.subr.mxu0 0.0
        %3167 = vmatpush1.msra.mxu0 %v988
        %3168 = vmatprep.subr.mxu0 0.0
        %3169 = vmatpush1.msra.mxu0 %v989
        %3170 = vmatprep.subr.mxu0 0.0
        %3171 = vmatpush1.msra.mxu0 %v990
        %3172 = vmatprep.subr.mxu0 0.0
        %3173 = vmatpush1.msra.mxu0 %v991
        %3174 = vmatprep.subr.mxu0 0.0
        %3175 = vmatpush1.msra.mxu0 %v992
        %3176 = vmatprep.subr.mxu0 0.0
        %3177 = vmatpush1.msra.mxu0 %v993
        %3178 = vmatprep.subr.mxu0 0.0
        %3179 = vmatpush1.msra.mxu0 %v994
        %3180 = vmatprep.subr.mxu0 0.0
        %3181 = vmatpush1.msra.mxu0 %v995
        %3182 = vmatprep.subr.mxu0 0.0
        %3183 = vmatpush1.msra.mxu0 %v996
        %3184 = vmatprep.subr.mxu0 0.0
        %3185 = vmatpush1.msra.mxu0 %v997
        %3186 = vmatprep.subr.mxu0 0.0
        %3187 = vmatpush1.msra.mxu0 %v998
        %3188 = vmatprep.subr.mxu0 0.0
        %3189 = vmatpush1.msra.mxu0 %v999
        %3190 = vmatprep.subr.mxu0 0.0
        %3191 = vmatpush1.msra.mxu0 %v1000
        %3192 = vmatprep.subr.mxu0 0.0
        %3193 = vmatpush1.msra.mxu0 %v1001
        %3194 = vmatprep.subr.mxu0 0.0
        %3195 = vmatpush1.msra.mxu0 %v1002
        %3196 = vmatprep.subr.mxu0 0.0
        %3197 = vmatpush1.msra.mxu0 %v1003
        %3198 = vmatprep.subr.mxu0 0.0
        %3199 = vmatpush1.msra.mxu0 %v1004
        %3200 = vmatprep.subr.mxu0 0.0
        %3201 = vmatpush1.msra.mxu0 %v1005
        %3202 = vmatprep.subr.mxu0 0.0
        %3203 = vmatpush1.msra.mxu0 %v1006
        %3204 = vmatprep.subr.mxu0 0.0
        %3205 = vmatpush1.msra.mxu0 %v1007
        %3206 = vmatprep.subr.mxu0 0.0
        %3207 = vmatpush1.msra.mxu0 %v1008
        %3208 = vmatprep.subr.mxu0 0.0
        %3209 = vmatpush1.msra.mxu0 %v1009
        %3210 = vmatprep.subr.mxu0 0.0
        %3211 = vmatpush1.msra.mxu0 %v1010
        %3212 = vmatprep.subr.mxu0 0.0
        %3213 = vmatpush1.msra.mxu0 %v1011
        %3214 = vmatprep.subr.mxu0 0.0
        %3215 = vmatpush1.msra.mxu0 %v1012
        %3216 = vmatprep.subr.mxu0 0.0
        %3217 = vmatpush1.msra.mxu0 %v1013
        %3218 = vmatprep.subr.mxu0 0.0
        %3219 = vmatpush1.msra.mxu0 %v1014
        %3220 = vmatprep.subr.mxu0 0.0
        %3221 = vmatpush1.msra.mxu0 %v1015
        %3222 = vmatprep.mubr.f32.mxu0 %v1538
        %3223 = vmatmul.mubr.f32.gmra.mrb[0].mxu0 %v1536
        %v3224 = vpop.f32.mrb[0].mxu0
        %v3225 = vadd.f32 %v3155, %v3224
        %v3226 = vpop.f32.mrb[0].mxu0
        %3227 = vdwg.mxu0
        %3228 = vmatprep.subr.mxu0 0.0
        %3229 = vmatpush1.msra.mxu0 %v1016
        %3230 = vmatprep.subr.mxu0 0.0
        %3231 = vmatpush1.msra.mxu0 %v1017
        %3232 = vmatprep.subr.mxu0 0.0
        %3233 = vmatpush1.msra.mxu0 %v1018
        %3234 = vmatprep.subr.mxu0 0.0
        %3235 = vmatpush1.msra.mxu0 %v1019
        %3236 = vmatprep.subr.mxu0 0.0
        %3237 = vmatpush1.msra.mxu0 %v1020
        %3238 = vmatprep.subr.mxu0 0.0
        %3239 = vmatpush1.msra.mxu0 %v1021
        %3240 = vmatprep.subr.mxu0 0.0
        %3241 = vmatpush1.msra.mxu0 %v1022
        %3242 = vmatprep.subr.mxu0 0.0
        %3243 = vmatpush1.msra.mxu0 %v1023
        %3244 = vmatprep.subr.mxu0 0.0
        %3245 = vmatpush1.msra.mxu0 %v1024
        %3246 = vmatprep.subr.mxu0 0.0
        %3247 = vmatpush1.msra.mxu0 %v1025
        %3248 = vmatprep.subr.mxu0 0.0
        %3249 = vmatpush1.msra.mxu0 %v1026
        %3250 = vmatprep.subr.mxu0 0.0
        %3251 = vmatpush1.msra.mxu0 %v1027
        %3252 = vmatprep.subr.mxu0 0.0
        %3253 = vmatpush1.msra.mxu0 %v1028
        %3254 = vmatprep.subr.mxu0 0.0
        %3255 = vmatpush1.msra.mxu0 %v1029
        %3256 = vmatprep.subr.mxu0 0.0
        %3257 = vmatpush1.msra.mxu0 %v1030
        %3258 = vmatprep.subr.mxu0 0.0
        %3259 = vmatpush1.msra.mxu0 %v1031
        %3260 = vmatprep.subr.mxu0 0.0
        %3261 = vmatpush1.msra.mxu0 %v1032
        %3262 = vmatprep.subr.mxu0 0.0
        %3263 = vmatpush1.msra.mxu0 %v1033
        %3264 = vmatprep.subr.mxu0 0.0
        %3265 = vmatpush1.msra.mxu0 %v1034
        %3266 = vmatprep.subr.mxu0 0.0
        %3267 = vmatpush1.msra.mxu0 %v1035
        %3268 = vmatprep.subr.mxu0 0.0
        %3269 = vmatpush1.msra.mxu0 %v1036
        %3270 = vmatprep.subr.mxu0 0.0
        %3271 = vmatpush1.msra.mxu0 %v1037
        %3272 = vmatprep.subr.mxu0 0.0
        %3273 = vmatpush1.msra.mxu0 %v1038
        %3274 = vmatprep.subr.mxu0 0.0
        %3275 = vmatpush1.msra.mxu0 %v1039
        %3276 = vmatprep.subr.mxu0 0.0
        %3277 = vmatpush1.msra.mxu0 %v1040
        %3278 = vmatprep.subr.mxu0 0.0
        %3279 = vmatpush1.msra.mxu0 %v1041
        %3280 = vmatprep.subr.mxu0 0.0
        %3281 = vmatpush1.msra.mxu0 %v1042
        %3282 = vmatprep.subr.mxu0 0.0
        %3283 = vmatpush1.msra.mxu0 %v1043
        %3284 = vmatprep.subr.mxu0 0.0
        %3285 = vmatpush1.msra.mxu0 %v1044
        %3286 = vmatprep.subr.mxu0 0.0
        %3287 = vmatpush1.msra.mxu0 %v1045
        %3288 = vmatprep.subr.mxu0 0.0
        %3289 = vmatpush1.msra.mxu0 %v1046
        %3290 = vmatprep.subr.mxu0 0.0
        %3291 = vmatpush1.msra.mxu0 %v1047
        %3292 = vmatprep.mubr.f32.mxu0 %v1554
        %3293 = vmatmul.mubr.f32.gmra.mrb[0].mxu0 %v1546
        %v3294 = vpop.f32.mrb[0].mxu0
        %v3295 = vadd.f32 %v3225, %v3294
        %v3296 = vpop.f32.mrb[0].mxu0
        %3297 = vdwg.mxu0
        %3298 = vmatprep.subr.mxu0 0.0
        %3299 = vmatpush1.msra.mxu0 %v1048
        %3300 = vmatprep.subr.mxu0 0.0
        %3301 = vmatpush1.msra.mxu0 %v1049
        %3302 = vmatprep.subr.mxu0 0.0
        %3303 = vmatpush1.msra.mxu0 %v1050
        %3304 = vmatprep.subr.mxu0 0.0
        %3305 = vmatpush1.msra.mxu0 %v1051
        %3306 = vmatprep.subr.mxu0 0.0
        %3307 = vmatpush1.msra.mxu0 %v1052
        %3308 = vmatprep.subr.mxu0 0.0
        %3309 = vmatpush1.msra.mxu0 %v1053
        %3310 = vmatprep.subr.mxu0 0.0
        %3311 = vmatpush1.msra.mxu0 %v1054
        %3312 = vmatprep.subr.mxu0 0.0
        %3313 = vmatpush1.msra.mxu0 %v1055
        %3314 = vmatprep.subr.mxu0 0.0
        %3315 = vmatpush1.msra.mxu0 %v1056
        %3316 = vmatprep.subr.mxu0 0.0
        %3317 = vmatpush1.msra.mxu0 %v1057
        %3318 = vmatprep.subr.mxu0 0.0
        %3319 = vmatpush1.msra.mxu0 %v1058
        %3320 = vmatprep.subr.mxu0 0.0
        %3321 = vmatpush1.msra.mxu0 %v1059
        %3322 = vmatprep.subr.mxu0 0.0
        %3323 = vmatpush1.msra.mxu0 %v1060
        %3324 = vmatprep.subr.mxu0 0.0
        %3325 = vmatpush1.msra.mxu0 %v1061
        %3326 = vmatprep.subr.mxu0 0.0
        %3327 = vmatpush1.msra.mxu0 %v1062
        %3328 = vmatprep.subr.mxu0 0.0
        %3329 = vmatpush1.msra.mxu0 %v1063
        %3330 = vmatprep.subr.mxu0 0.0
        %3331 = vmatpush1.msra.mxu0 %v1064
        %3332 = vmatprep.subr.mxu0 0.0
        %3333 = vmatpush1.msra.mxu0 %v1065
        %3334 = vmatprep.subr.mxu0 0.0
        %3335 = vmatpush1.msra.mxu0 %v1066
        %3336 = vmatprep.subr.mxu0 0.0
        %3337 = vmatpush1.msra.mxu0 %v1067
        %3338 = vmatprep.subr.mxu0 0.0
        %3339 = vmatpush1.msra.mxu0 %v1068
        %3340 = vmatprep.subr.mxu0 0.0
        %3341 = vmatpush1.msra.mxu0 %v1069
        %3342 = vmatprep.subr.mxu0 0.0
        %3343 = vmatpush1.msra.mxu0 %v1070
        %3344 = vmatprep.subr.mxu0 0.0
        %3345 = vmatpush1.msra.mxu0 %v1071
        %3346 = vmatprep.subr.mxu0 0.0
        %3347 = vmatpush1.msra.mxu0 %v1072
        %3348 = vmatprep.subr.mxu0 0.0
        %3349 = vmatpush1.msra.mxu0 %v1073
        %3350 = vmatprep.subr.mxu0 0.0
        %3351 = vmatpush1.msra.mxu0 %v1074
        %3352 = vmatprep.subr.mxu0 0.0
        %3353 = vmatpush1.msra.mxu0 %v1075
        %3354 = vmatprep.subr.mxu0 0.0
        %3355 = vmatpush1.msra.mxu0 %v1076
        %3356 = vmatprep.subr.mxu0 0.0
        %3357 = vmatpush1.msra.mxu0 %v1077
        %3358 = vmatprep.subr.mxu0 0.0
        %3359 = vmatpush1.msra.mxu0 %v1078
        %3360 = vmatprep.subr.mxu0 0.0
        %3361 = vmatpush1.msra.mxu0 %v1079
        %3362 = vmatprep.mubr.f32.mxu0 %v1555
        %3363 = vmatmul.mubr.f32.gmra.mrb[0].mxu0 %v1553
        %v3364 = vpop.f32.mrb[0].mxu0
        %v3365 = vadd.f32 %v3295, %v3364
        %v3366 = vpop.f32.mrb[0].mxu0
        %3367 = vdwg.mxu0
        %3368 = vmatprep.subr.mxu0 0.0
        %3369 = vmatpush1.msra.mxu0 %v1080
        %3370 = vmatprep.subr.mxu0 0.0
        %3371 = vmatpush1.msra.mxu0 %v1081
        %3372 = vmatprep.subr.mxu0 0.0
        %3373 = vmatpush1.msra.mxu0 %v1082
        %3374 = vmatprep.subr.mxu0 0.0
        %3375 = vmatpush1.msra.mxu0 %v1083
        %3376 = vmatprep.subr.mxu0 0.0
        %3377 = vmatpush1.msra.mxu0 %v1084
        %3378 = vmatprep.subr.mxu0 0.0
        %3379 = vmatpush1.msra.mxu0 %v1085
        %3380 = vmatprep.subr.mxu0 0.0
        %3381 = vmatpush1.msra.mxu0 %v1086
        %3382 = vmatprep.subr.mxu0 0.0
        %3383 = vmatpush1.msra.mxu0 %v1087
        %3384 = vmatprep.subr.mxu0 0.0
        %3385 = vmatpush1.msra.mxu0 %v1088
        %3386 = vmatprep.subr.mxu0 0.0
        %3387 = vmatpush1.msra.mxu0 %v1089
        %3388 = vmatprep.subr.mxu0 0.0
        %3389 = vmatpush1.msra.mxu0 %v1090
        %3390 = vmatprep.subr.mxu0 0.0
        %3391 = vmatpush1.msra.mxu0 %v1091
        %3392 = vmatprep.subr.mxu0 0.0
        %3393 = vmatpush1.msra.mxu0 %v1092
        %3394 = vmatprep.subr.mxu0 0.0
        %3395 = vmatpush1.msra.mxu0 %v1093
        %3396 = vmatprep.subr.mxu0 0.0
        %3397 = vmatpush1.msra.mxu0 %v1094
        %3398 = vmatprep.subr.mxu0 0.0
        %3399 = vmatpush1.msra.mxu0 %v1095
        %3400 = vmatprep.subr.mxu0 0.0
        %3401 = vmatpush1.msra.mxu0 %v1096
        %3402 = vmatprep.subr.mxu0 0.0
        %3403 = vmatpush1.msra.mxu0 %v1097
        %3404 = vmatprep.subr.mxu0 0.0
        %3405 = vmatpush1.msra.mxu0 %v1098
        %3406 = vmatprep.subr.mxu0 0.0
        %3407 = vmatpush1.msra.mxu0 %v1099
        %3408 = vmatprep.subr.mxu0 0.0
        %3409 = vmatpush1.msra.mxu0 %v1100
        %3410 = vmatprep.subr.mxu0 0.0
        %3411 = vmatpush1.msra.mxu0 %v1101
        %3412 = vmatprep.subr.mxu0 0.0
        %3413 = vmatpush1.msra.mxu0 %v1102
        %3414 = vmatprep.subr.mxu0 0.0
        %3415 = vmatpush1.msra.mxu0 %v1103
        %3416 = vmatprep.subr.mxu0 0.0
        %3417 = vmatpush1.msra.mxu0 %v1104
        %3418 = vmatprep.subr.mxu0 0.0
        %3419 = vmatpush1.msra.mxu0 %v1105
        %3420 = vmatprep.subr.mxu0 0.0
        %3421 = vmatpush1.msra.mxu0 %v1106
        %3422 = vmatprep.subr.mxu0 0.0
        %3423 = vmatpush1.msra.mxu0 %v1107
        %3424 = vmatprep.subr.mxu0 0.0
        %3425 = vmatpush1.msra.mxu0 %v1108
        %3426 = vmatprep.subr.mxu0 0.0
        %3427 = vmatpush1.msra.mxu0 %v1109
        %3428 = vmatprep.subr.mxu0 0.0
        %3429 = vmatpush1.msra.mxu0 %v1110
        %3430 = vmatprep.subr.mxu0 0.0
        %3431 = vmatpush1.msra.mxu0 %v1111
        %3432 = vmatprep.mubr.f32.mxu0 %v1571
        %3433 = vmatmul.mubr.f32.gmra.mrb[0].mxu0 %v1563
        %v3434 = vpop.f32.mrb[0].mxu0
        %v3435 = vadd.f32 %v3365, %v3434
        %v3436 = vpop.f32.mrb[0].mxu0
        %3437 = vdwg.mxu0
        %3438 = vmatprep.subr.mxu0 0.0
        %3439 = vmatpush1.msra.mxu0 %v1112
        %3440 = vmatprep.subr.mxu0 0.0
        %3441 = vmatpush1.msra.mxu0 %v1113
        %3442 = vmatprep.subr.mxu0 0.0
        %3443 = vmatpush1.msra.mxu0 %v1114
        %3444 = vmatprep.subr.mxu0 0.0
        %3445 = vmatpush1.msra.mxu0 %v1115
        %3446 = vmatprep.subr.mxu0 0.0
        %3447 = vmatpush1.msra.mxu0 %v1116
        %3448 = vmatprep.subr.mxu0 0.0
        %3449 = vmatpush1.msra.mxu0 %v1117
        %3450 = vmatprep.subr.mxu0 0.0
        %3451 = vmatpush1.msra.mxu0 %v1118
        %3452 = vmatprep.subr.mxu0 0.0
        %3453 = vmatpush1.msra.mxu0 %v1119
        %3454 = vmatprep.subr.mxu0 0.0
        %3455 = vmatpush1.msra.mxu0 %v1120
        %3456 = vmatprep.subr.mxu0 0.0
        %3457 = vmatpush1.msra.mxu0 %v1121
        %3458 = vmatprep.subr.mxu0 0.0
        %3459 = vmatpush1.msra.mxu0 %v1122
        %3460 = vmatprep.subr.mxu0 0.0
        %3461 = vmatpush1.msra.mxu0 %v1123
        %3462 = vmatprep.subr.mxu0 0.0
        %3463 = vmatpush1.msra.mxu0 %v1124
        %3464 = vmatprep.subr.mxu0 0.0
        %3465 = vmatpush1.msra.mxu0 %v1125
        %3466 = vmatprep.subr.mxu0 0.0
        %3467 = vmatpush1.msra.mxu0 %v1126
        %3468 = vmatprep.subr.mxu0 0.0
        %3469 = vmatpush1.msra.mxu0 %v1127
        %3470 = vmatprep.subr.mxu0 0.0
        %3471 = vmatpush1.msra.mxu0 %v1128
        %3472 = vmatprep.subr.mxu0 0.0
        %3473 = vmatpush1.msra.mxu0 %v1129
        %3474 = vmatprep.subr.mxu0 0.0
        %3475 = vmatpush1.msra.mxu0 %v1130
        %3476 = vmatprep.subr.mxu0 0.0
        %3477 = vmatpush1.msra.mxu0 %v1131
        %3478 = vmatprep.subr.mxu0 0.0
        %3479 = vmatpush1.msra.mxu0 %v1132
        %3480 = vmatprep.subr.mxu0 0.0
        %3481 = vmatpush1.msra.mxu0 %v1133
        %3482 = vmatprep.subr.mxu0 0.0
        %3483 = vmatpush1.msra.mxu0 %v1134
        %3484 = vmatprep.subr.mxu0 0.0
        %3485 = vmatpush1.msra.mxu0 %v1135
        %3486 = vmatprep.subr.mxu0 0.0
        %3487 = vmatpush1.msra.mxu0 %v1136
        %3488 = vmatprep.subr.mxu0 0.0
        %3489 = vmatpush1.msra.mxu0 %v1137
        %3490 = vmatprep.subr.mxu0 0.0
        %3491 = vmatpush1.msra.mxu0 %v1138
        %3492 = vmatprep.subr.mxu0 0.0
        %3493 = vmatpush1.msra.mxu0 %v1139
        %3494 = vmatprep.subr.mxu0 0.0
        %3495 = vmatpush1.msra.mxu0 %v1140
        %3496 = vmatprep.subr.mxu0 0.0
        %3497 = vmatpush1.msra.mxu0 %v1141
        %3498 = vmatprep.subr.mxu0 0.0
        %3499 = vmatpush1.msra.mxu0 %v1142
        %3500 = vmatprep.subr.mxu0 0.0
        %3501 = vmatpush1.msra.mxu0 %v1143
        %3502 = vmatprep.mubr.f32.mxu0 %v1572
        %3503 = vmatmul.mubr.f32.gmra.mrb[0].mxu0 %v1570
        %v3504 = vpop.f32.mrb[0].mxu0
        %v3505 = vadd.f32 %v3435, %v3504
        %v3506 = vpop.f32.mrb[0].mxu0
        %3507 = vdwg.mxu0
        %3508 = vmatprep.subr.mxu0 0.0
        %3509 = vmatpush1.msra.mxu0 %v1144
        %3510 = vmatprep.subr.mxu0 0.0
        %3511 = vmatpush1.msra.mxu0 %v1145
        %3512 = vmatprep.subr.mxu0 0.0
        %3513 = vmatpush1.msra.mxu0 %v1146
        %3514 = vmatprep.subr.mxu0 0.0
        %3515 = vmatpush1.msra.mxu0 %v1147
        %3516 = vmatprep.subr.mxu0 0.0
        %3517 = vmatpush1.msra.mxu0 %v1148
        %3518 = vmatprep.subr.mxu0 0.0
        %3519 = vmatpush1.msra.mxu0 %v1149
        %3520 = vmatprep.subr.mxu0 0.0
        %3521 = vmatpush1.msra.mxu0 %v1150
        %3522 = vmatprep.subr.mxu0 0.0
        %3523 = vmatpush1.msra.mxu0 %v1151
        %3524 = vmatprep.subr.mxu0 0.0
        %3525 = vmatpush1.msra.mxu0 %v1152
        %3526 = vmatprep.subr.mxu0 0.0
        %3527 = vmatpush1.msra.mxu0 %v1153
        %3528 = vmatprep.subr.mxu0 0.0
        %3529 = vmatpush1.msra.mxu0 %v1154
        %3530 = vmatprep.subr.mxu0 0.0
        %3531 = vmatpush1.msra.mxu0 %v1155
        %3532 = vmatprep.subr.mxu0 0.0
        %3533 = vmatpush1.msra.mxu0 %v1156
        %3534 = vmatprep.subr.mxu0 0.0
        %3535 = vmatpush1.msra.mxu0 %v1157
        %3536 = vmatprep.subr.mxu0 0.0
        %3537 = vmatpush1.msra.mxu0 %v1158
        %3538 = vmatprep.subr.mxu0 0.0
        %3539 = vmatpush1.msra.mxu0 %v1159
        %3540 = vmatprep.subr.mxu0 0.0
        %3541 = vmatpush1.msra.mxu0 %v1160
        %3542 = vmatprep.subr.mxu0 0.0
        %3543 = vmatpush1.msra.mxu0 %v1161
        %3544 = vmatprep.subr.mxu0 0.0
        %3545 = vmatpush1.msra.mxu0 %v1162
        %3546 = vmatprep.subr.mxu0 0.0
        %3547 = vmatpush1.msra.mxu0 %v1163
        %3548 = vmatprep.subr.mxu0 0.0
        %3549 = vmatpush1.msra.mxu0 %v1164
        %3550 = vmatprep.subr.mxu0 0.0
        %3551 = vmatpush1.msra.mxu0 %v1165
        %3552 = vmatprep.subr.mxu0 0.0
        %3553 = vmatpush1.msra.mxu0 %v1166
        %3554 = vmatprep.subr.mxu0 0.0
        %3555 = vmatpush1.msra.mxu0 %v1167
        %3556 = vmatprep.subr.mxu0 0.0
        %3557 = vmatpush1.msra.mxu0 %v1168
        %3558 = vmatprep.subr.mxu0 0.0
        %3559 = vmatpush1.msra.mxu0 %v1169
        %3560 = vmatprep.subr.mxu0 0.0
        %3561 = vmatpush1.msra.mxu0 %v1170
        %3562 = vmatprep.subr.mxu0 0.0
        %3563 = vmatpush1.msra.mxu0 %v1171
        %3564 = vmatprep.subr.mxu0 0.0
        %3565 = vmatpush1.msra.mxu0 %v1172
        %3566 = vmatprep.subr.mxu0 0.0
        %3567 = vmatpush1.msra.mxu0 %v1173
        %3568 = vmatprep.subr.mxu0 0.0
        %3569 = vmatpush1.msra.mxu0 %v1174
        %3570 = vmatprep.subr.mxu0 0.0
        %3571 = vmatpush1.msra.mxu0 %v1175
        %3572 = vmatprep.mubr.f32.mxu0 %v1588
        %3573 = vmatmul.mubr.f32.gmra.mrb[0].mxu0 %v1580
        %v3574 = vpop.f32.mrb[0].mxu0
        %v3575 = vadd.f32 %v3505, %v3574
        %v3576 = vpop.f32.mrb[0].mxu0
        %3577 = vdwg.mxu0
        %3578 = vmatprep.subr.mxu0 0.0
        %3579 = vmatpush1.msra.mxu0 %v1176
        %3580 = vmatprep.subr.mxu0 0.0
        %3581 = vmatpush1.msra.mxu0 %v1177
        %3582 = vmatprep.subr.mxu0 0.0
        %3583 = vmatpush1.msra.mxu0 %v1178
        %3584 = vmatprep.subr.mxu0 0.0
        %3585 = vmatpush1.msra.mxu0 %v1179
        %3586 = vmatprep.subr.mxu0 0.0
        %3587 = vmatpush1.msra.mxu0 %v1180
        %3588 = vmatprep.subr.mxu0 0.0
        %3589 = vmatpush1.msra.mxu0 %v1181
        %3590 = vmatprep.subr.mxu0 0.0
        %3591 = vmatpush1.msra.mxu0 %v1182
        %3592 = vmatprep.subr.mxu0 0.0
        %3593 = vmatpush1.msra.mxu0 %v1183
        %3594 = vmatprep.subr.mxu0 0.0
        %3595 = vmatpush1.msra.mxu0 %v1184
        %3596 = vmatprep.subr.mxu0 0.0
        %3597 = vmatpush1.msra.mxu0 %v1185
        %3598 = vmatprep.subr.mxu0 0.0
        %3599 = vmatpush1.msra.mxu0 %v1186
        %3600 = vmatprep.subr.mxu0 0.0
        %3601 = vmatpush1.msra.mxu0 %v1187
        %3602 = vmatprep.subr.mxu0 0.0
        %3603 = vmatpush1.msra.mxu0 %v1188
        %3604 = vmatprep.subr.mxu0 0.0
        %3605 = vmatpush1.msra.mxu0 %v1189
        %3606 = vmatprep.subr.mxu0 0.0
        %3607 = vmatpush1.msra.mxu0 %v1190
        %3608 = vmatprep.subr.mxu0 0.0
        %3609 = vmatpush1.msra.mxu0 %v1191
        %3610 = vmatprep.subr.mxu0 0.0
        %3611 = vmatpush1.msra.mxu0 %v1192
        %3612 = vmatprep.subr.mxu0 0.0
        %3613 = vmatpush1.msra.mxu0 %v1193
        %3614 = vmatprep.subr.mxu0 0.0
        %3615 = vmatpush1.msra.mxu0 %v1194
        %3616 = vmatprep.subr.mxu0 0.0
        %3617 = vmatpush1.msra.mxu0 %v1195
        %3618 = vmatprep.subr.mxu0 0.0
        %3619 = vmatpush1.msra.mxu0 %v1196
        %3620 = vmatprep.subr.mxu0 0.0
        %3621 = vmatpush1.msra.mxu0 %v1197
        %3622 = vmatprep.subr.mxu0 0.0
        %3623 = vmatpush1.msra.mxu0 %v1198
        %3624 = vmatprep.subr.mxu0 0.0
        %3625 = vmatpush1.msra.mxu0 %v1199
        %3626 = vmatprep.subr.mxu0 0.0
        %3627 = vmatpush1.msra.mxu0 %v1200
        %3628 = vmatprep.subr.mxu0 0.0
        %3629 = vmatpush1.msra.mxu0 %v1201
        %3630 = vmatprep.subr.mxu0 0.0
        %3631 = vmatpush1.msra.mxu0 %v1202
        %3632 = vmatprep.subr.mxu0 0.0
        %3633 = vmatpush1.msra.mxu0 %v1203
        %3634 = vmatprep.subr.mxu0 0.0
        %3635 = vmatpush1.msra.mxu0 %v1204
        %3636 = vmatprep.subr.mxu0 0.0
        %3637 = vmatpush1.msra.mxu0 %v1205
        %3638 = vmatprep.subr.mxu0 0.0
        %3639 = vmatpush1.msra.mxu0 %v1206
        %3640 = vmatprep.subr.mxu0 0.0
        %3641 = vmatpush1.msra.mxu0 %v1207
        %3642 = vmatprep.mubr.f32.mxu0 %v1589
        %3643 = vmatmul.mubr.f32.gmra.mrb[0].mxu0 %v1587
        %v3644 = vpop.f32.mrb[0].mxu0
        %v3645 = vadd.f32 %v3575, %v3644
        %v3646 = vpop.f32.mrb[0].mxu0
        %3647 = vdwg.mxu0
        %3648 = vmatprep.subr.mxu0 0.0
        %3649 = vmatpush1.msra.mxu0 %v1208
        %3650 = vmatprep.subr.mxu0 0.0
        %3651 = vmatpush1.msra.mxu0 %v1209
        %3652 = vmatprep.subr.mxu0 0.0
        %3653 = vmatpush1.msra.mxu0 %v1210
        %3654 = vmatprep.subr.mxu0 0.0
        %3655 = vmatpush1.msra.mxu0 %v1211
        %3656 = vmatprep.subr.mxu0 0.0
        %3657 = vmatpush1.msra.mxu0 %v1212
        %3658 = vmatprep.subr.mxu0 0.0
        %3659 = vmatpush1.msra.mxu0 %v1213
        %3660 = vmatprep.subr.mxu0 0.0
        %3661 = vmatpush1.msra.mxu0 %v1214
        %3662 = vmatprep.subr.mxu0 0.0
        %3663 = vmatpush1.msra.mxu0 %v1215
        %3664 = vmatprep.subr.mxu0 0.0
        %3665 = vmatpush1.msra.mxu0 %v1216
        %3666 = vmatprep.subr.mxu0 0.0
        %3667 = vmatpush1.msra.mxu0 %v1217
        %3668 = vmatprep.subr.mxu0 0.0
        %3669 = vmatpush1.msra.mxu0 %v1218
        %3670 = vmatprep.subr.mxu0 0.0
        %3671 = vmatpush1.msra.mxu0 %v1219
        %3672 = vmatprep.subr.mxu0 0.0
        %3673 = vmatpush1.msra.mxu0 %v1220
        %3674 = vmatprep.subr.mxu0 0.0
        %3675 = vmatpush1.msra.mxu0 %v1221
        %3676 = vmatprep.subr.mxu0 0.0
        %3677 = vmatpush1.msra.mxu0 %v1222
        %3678 = vmatprep.subr.mxu0 0.0
        %3679 = vmatpush1.msra.mxu0 %v1223
        %3680 = vmatprep.subr.mxu0 0.0
        %3681 = vmatpush1.msra.mxu0 %v1224
        %3682 = vmatprep.subr.mxu0 0.0
        %3683 = vmatpush1.msra.mxu0 %v1225
        %3684 = vmatprep.subr.mxu0 0.0
        %3685 = vmatpush1.msra.mxu0 %v1226
        %3686 = vmatprep.subr.mxu0 0.0
        %3687 = vmatpush1.msra.mxu0 %v1227
        %3688 = vmatprep.subr.mxu0 0.0
        %3689 = vmatpush1.msra.mxu0 %v1228
        %3690 = vmatprep.subr.mxu0 0.0
        %3691 = vmatpush1.msra.mxu0 %v1229
        %3692 = vmatprep.subr.mxu0 0.0
        %3693 = vmatpush1.msra.mxu0 %v1230
        %3694 = vmatprep.subr.mxu0 0.0
        %3695 = vmatpush1.msra.mxu0 %v1231
        %3696 = vmatprep.subr.mxu0 0.0
        %3697 = vmatpush1.msra.mxu0 %v1232
        %3698 = vmatprep.subr.mxu0 0.0
        %3699 = vmatpush1.msra.mxu0 %v1233
        %3700 = vmatprep.subr.mxu0 0.0
        %3701 = vmatpush1.msra.mxu0 %v1234
        %3702 = vmatprep.subr.mxu0 0.0
        %3703 = vmatpush1.msra.mxu0 %v1235
        %3704 = vmatprep.subr.mxu0 0.0
        %3705 = vmatpush1.msra.mxu0 %v1236
        %3706 = vmatprep.subr.mxu0 0.0
        %3707 = vmatpush1.msra.mxu0 %v1237
        %3708 = vmatprep.subr.mxu0 0.0
        %3709 = vmatpush1.msra.mxu0 %v1238
        %3710 = vmatprep.subr.mxu0 0.0
        %3711 = vmatpush1.msra.mxu0 %v1239
        %3712 = vmatprep.mubr.f32.mxu0 %v1605
        %3713 = vmatmul.mubr.f32.gmra.mrb[0].mxu0 %v1597
        %v3714 = vpop.f32.mrb[0].mxu0
        %v3715 = vadd.f32 %v3645, %v3714
        %v3716 = vpop.f32.mrb[0].mxu0
        %3717 = vdwg.mxu0
        %3718 = vmatprep.subr.mxu0 0.0
        %3719 = vmatpush1.msra.mxu0 %v1240
        %3720 = vmatprep.subr.mxu0 0.0
        %3721 = vmatpush1.msra.mxu0 %v1241
        %3722 = vmatprep.subr.mxu0 0.0
        %3723 = vmatpush1.msra.mxu0 %v1242
        %3724 = vmatprep.subr.mxu0 0.0
        %3725 = vmatpush1.msra.mxu0 %v1243
        %3726 = vmatprep.subr.mxu0 0.0
        %3727 = vmatpush1.msra.mxu0 %v1244
        %3728 = vmatprep.subr.mxu0 0.0
        %3729 = vmatpush1.msra.mxu0 %v1245
        %3730 = vmatprep.subr.mxu0 0.0
        %3731 = vmatpush1.msra.mxu0 %v1246
        %3732 = vmatprep.subr.mxu0 0.0
        %3733 = vmatpush1.msra.mxu0 %v1247
        %3734 = vmatprep.subr.mxu0 0.0
        %3735 = vmatpush1.msra.mxu0 %v1248
        %3736 = vmatprep.subr.mxu0 0.0
        %3737 = vmatpush1.msra.mxu0 %v1249
        %3738 = vmatprep.subr.mxu0 0.0
        %3739 = vmatpush1.msra.mxu0 %v1250
        %3740 = vmatprep.subr.mxu0 0.0
        %3741 = vmatpush1.msra.mxu0 %v1251
        %3742 = vmatprep.subr.mxu0 0.0
        %3743 = vmatpush1.msra.mxu0 %v1252
        %3744 = vmatprep.subr.mxu0 0.0
        %3745 = vmatpush1.msra.mxu0 %v1253
        %3746 = vmatprep.subr.mxu0 0.0
        %3747 = vmatpush1.msra.mxu0 %v1254
        %3748 = vmatprep.subr.mxu0 0.0
        %3749 = vmatpush1.msra.mxu0 %v1255
        %3750 = vmatprep.subr.mxu0 0.0
        %3751 = vmatpush1.msra.mxu0 %v1256
        %3752 = vmatprep.subr.mxu0 0.0
        %3753 = vmatpush1.msra.mxu0 %v1257
        %3754 = vmatprep.subr.mxu0 0.0
        %3755 = vmatpush1.msra.mxu0 %v1258
        %3756 = vmatprep.subr.mxu0 0.0
        %3757 = vmatpush1.msra.mxu0 %v1259
        %3758 = vmatprep.subr.mxu0 0.0
        %3759 = vmatpush1.msra.mxu0 %v1260
        %3760 = vmatprep.subr.mxu0 0.0
        %3761 = vmatpush1.msra.mxu0 %v1261
        %3762 = vmatprep.subr.mxu0 0.0
        %3763 = vmatpush1.msra.mxu0 %v1262
        %3764 = vmatprep.subr.mxu0 0.0
        %3765 = vmatpush1.msra.mxu0 %v1263
        %3766 = vmatprep.subr.mxu0 0.0
        %3767 = vmatpush1.msra.mxu0 %v1264
        %3768 = vmatprep.subr.mxu0 0.0
        %3769 = vmatpush1.msra.mxu0 %v1265
        %3770 = vmatprep.subr.mxu0 0.0
        %3771 = vmatpush1.msra.mxu0 %v1266
        %3772 = vmatprep.subr.mxu0 0.0
        %3773 = vmatpush1.msra.mxu0 %v1267
        %3774 = vmatprep.subr.mxu0 0.0
        %3775 = vmatpush1.msra.mxu0 %v1268
        %3776 = vmatprep.subr.mxu0 0.0
        %3777 = vmatpush1.msra.mxu0 %v1269
        %3778 = vmatprep.subr.mxu0 0.0
        %3779 = vmatpush1.msra.mxu0 %v1270
        %3780 = vmatprep.subr.mxu0 0.0
        %3781 = vmatpush1.msra.mxu0 %v1271
        %3782 = vmatprep.mubr.f32.mxu0 %v1606
        %3783 = vmatmul.mubr.f32.gmra.mrb[0].mxu0 %v1604
        %v3784 = vpop.f32.mrb[0].mxu0
        %v3785 = vadd.f32 %v3715, %v3784
        %v3786 = vpop.f32.mrb[0].mxu0
        %3787 = vdwg.mxu0
        %3788 = vmatprep.subr.mxu0 0.0
        %3789 = vmatpush1.msra.mxu0 %v1272
        %3790 = vmatprep.subr.mxu0 0.0
        %3791 = vmatpush1.msra.mxu0 %v1273
        %3792 = vmatprep.subr.mxu0 0.0
        %3793 = vmatpush1.msra.mxu0 %v1274
        %3794 = vmatprep.subr.mxu0 0.0
        %3795 = vmatpush1.msra.mxu0 %v1275
        %3796 = vmatprep.subr.mxu0 0.0
        %3797 = vmatpush1.msra.mxu0 %v1276
        %3798 = vmatprep.subr.mxu0 0.0
        %3799 = vmatpush1.msra.mxu0 %v1277
        %3800 = vmatprep.subr.mxu0 0.0
        %3801 = vmatpush1.msra.mxu0 %v1278
        %3802 = vmatprep.subr.mxu0 0.0
        %3803 = vmatpush1.msra.mxu0 %v1279
        %3804 = vmatprep.subr.mxu0 0.0
        %3805 = vmatpush1.msra.mxu0 %v1280
        %3806 = vmatprep.subr.mxu0 0.0
        %3807 = vmatpush1.msra.mxu0 %v1281
        %3808 = vmatprep.subr.mxu0 0.0
        %3809 = vmatpush1.msra.mxu0 %v1282
        %3810 = vmatprep.subr.mxu0 0.0
        %3811 = vmatpush1.msra.mxu0 %v1283
        %3812 = vmatprep.subr.mxu0 0.0
        %3813 = vmatpush1.msra.mxu0 %v1284
        %3814 = vmatprep.subr.mxu0 0.0
        %3815 = vmatpush1.msra.mxu0 %v1285
        %3816 = vmatprep.subr.mxu0 0.0
        %3817 = vmatpush1.msra.mxu0 %v1286
        %3818 = vmatprep.subr.mxu0 0.0
        %3819 = vmatpush1.msra.mxu0 %v1287
        %3820 = vmatprep.subr.mxu0 0.0
        %3821 = vmatpush1.msra.mxu0 %v1288
        %3822 = vmatprep.subr.mxu0 0.0
        %3823 = vmatpush1.msra.mxu0 %v1289
        %3824 = vmatprep.subr.mxu0 0.0
        %3825 = vmatpush1.msra.mxu0 %v1290
        %3826 = vmatprep.subr.mxu0 0.0
        %3827 = vmatpush1.msra.mxu0 %v1291
        %3828 = vmatprep.subr.mxu0 0.0
        %3829 = vmatpush1.msra.mxu0 %v1292
        %3830 = vmatprep.subr.mxu0 0.0
        %3831 = vmatpush1.msra.mxu0 %v1293
        %3832 = vmatprep.subr.mxu0 0.0
        %3833 = vmatpush1.msra.mxu0 %v1294
        %3834 = vmatprep.subr.mxu0 0.0
        %3835 = vmatpush1.msra.mxu0 %v1295
        %3836 = vmatprep.subr.mxu0 0.0
        %3837 = vmatpush1.msra.mxu0 %v1296
        %3838 = vmatprep.subr.mxu0 0.0
        %3839 = vmatpush1.msra.mxu0 %v1297
        %3840 = vmatprep.subr.mxu0 0.0
        %3841 = vmatpush1.msra.mxu0 %v1298
        %3842 = vmatprep.subr.mxu0 0.0
        %3843 = vmatpush1.msra.mxu0 %v1299
        %3844 = vmatprep.subr.mxu0 0.0
        %3845 = vmatpush1.msra.mxu0 %v1300
        %3846 = vmatprep.subr.mxu0 0.0
        %3847 = vmatpush1.msra.mxu0 %v1301
        %3848 = vmatprep.subr.mxu0 0.0
        %3849 = vmatpush1.msra.mxu0 %v1302
        %3850 = vmatprep.subr.mxu0 0.0
        %3851 = vmatpush1.msra.mxu0 %v1303
        %3852 = vmatprep.mubr.f32.mxu0 %v1622
        %3853 = vmatmul.mubr.f32.gmra.mrb[0].mxu0 %v1614
        %v3854 = vpop.f32.mrb[0].mxu0
        %v3855 = vadd.f32 %v3785, %v3854
        %v3856 = vpop.f32.mrb[0].mxu0
        %3857 = vdwg.mxu0
        %3858 = vmatprep.subr.mxu0 0.0
        %3859 = vmatpush1.msra.mxu0 %v1304
        %3860 = vmatprep.subr.mxu0 0.0
        %3861 = vmatpush1.msra.mxu0 %v1305
        %3862 = vmatprep.subr.mxu0 0.0
        %3863 = vmatpush1.msra.mxu0 %v1306
        %3864 = vmatprep.subr.mxu0 0.0
        %3865 = vmatpush1.msra.mxu0 %v1307
        %3866 = vmatprep.subr.mxu0 0.0
        %3867 = vmatpush1.msra.mxu0 %v1308
        %3868 = vmatprep.subr.mxu0 0.0
        %3869 = vmatpush1.msra.mxu0 %v1309
        %3870 = vmatprep.subr.mxu0 0.0
        %3871 = vmatpush1.msra.mxu0 %v1310
        %3872 = vmatprep.subr.mxu0 0.0
        %3873 = vmatpush1.msra.mxu0 %v1311
        %3874 = vmatprep.subr.mxu0 0.0
        %3875 = vmatpush1.msra.mxu0 %v1312
        %3876 = vmatprep.subr.mxu0 0.0
        %3877 = vmatpush1.msra.mxu0 %v1313
        %3878 = vmatprep.subr.mxu0 0.0
        %3879 = vmatpush1.msra.mxu0 %v1314
        %3880 = vmatprep.subr.mxu0 0.0
        %3881 = vmatpush1.msra.mxu0 %v1315
        %3882 = vmatprep.subr.mxu0 0.0
        %3883 = vmatpush1.msra.mxu0 %v1316
        %3884 = vmatprep.subr.mxu0 0.0
        %3885 = vmatpush1.msra.mxu0 %v1317
        %3886 = vmatprep.subr.mxu0 0.0
        %3887 = vmatpush1.msra.mxu0 %v1318
        %3888 = vmatprep.subr.mxu0 0.0
        %3889 = vmatpush1.msra.mxu0 %v1319
        %3890 = vmatprep.subr.mxu0 0.0
        %3891 = vmatpush1.msra.mxu0 %v1320
        %3892 = vmatprep.subr.mxu0 0.0
        %3893 = vmatpush1.msra.mxu0 %v1321
        %3894 = vmatprep.subr.mxu0 0.0
        %3895 = vmatpush1.msra.mxu0 %v1322
        %3896 = vmatprep.subr.mxu0 0.0
        %3897 = vmatpush1.msra.mxu0 %v1323
        %3898 = vmatprep.subr.mxu0 0.0
        %3899 = vmatpush1.msra.mxu0 %v1324
        %3900 = vmatprep.subr.mxu0 0.0
        %3901 = vmatpush1.msra.mxu0 %v1325
        %3902 = vmatprep.subr.mxu0 0.0
        %3903 = vmatpush1.msra.mxu0 %v1326
        %3904 = vmatprep.subr.mxu0 0.0
        %3905 = vmatpush1.msra.mxu0 %v1327
        %3906 = vmatprep.subr.mxu0 0.0
        %3907 = vmatpush1.msra.mxu0 %v1328
        %3908 = vmatprep.subr.mxu0 0.0
        %3909 = vmatpush1.msra.mxu0 %v1329
        %3910 = vmatprep.subr.mxu0 0.0
        %3911 = vmatpush1.msra.mxu0 %v1330
        %3912 = vmatprep.subr.mxu0 0.0
        %3913 = vmatpush1.msra.mxu0 %v1331
        %3914 = vmatprep.subr.mxu0 0.0
        %3915 = vmatpush1.msra.mxu0 %v1332
        %3916 = vmatprep.subr.mxu0 0.0
        %3917 = vmatpush1.msra.mxu0 %v1333
        %3918 = vmatprep.subr.mxu0 0.0
        %3919 = vmatpush1.msra.mxu0 %v1334
        %3920 = vmatprep.subr.mxu0 0.0
        %3921 = vmatpush1.msra.mxu0 %v1335
        %3922 = vmatprep.mubr.f32.mxu0 %v1623
        %3923 = vmatmul.mubr.f32.gmra.mrb[0].mxu0 %v1621
        %v3924 = vpop.f32.mrb[0].mxu0
        %v3925 = vadd.f32 %v3855, %v3924
        %v3926 = vpop.f32.mrb[0].mxu0
        %3927 = vdwg.mxu0
        %v3928 = vadd.f32 %v295, %v3925
        %vm3929 = vcmask 517120
        %3930 = vst.msk [vmem:[#allocation2] sm:$0x3] %vm3929, %v3928
        %p3931 = scmp.eq.s32.totalorder %s19, 1
        // Predicated region
        $region53: #{tpu_custom_call.1} parent=47 // pred_check
          %p3932 = pneg %p3931
        $region54: #{tpu_custom_call.1} parent=47 // pred_check_branch
          %3934 = sbr.rel (%p3932) target = $region56
        $region55: #{tpu_custom_call.1} parent=47 // pred_region
          %v3935 = vld [vmem:[#allocation2] sm:$0x3]
          %v3936 = vld [vmem:[%s2] sm:$0x1]
          %v3938 = vlaneseq
          %v3939 = vshrl.u32 %v3938, 7
          %v3940 = vsub.s32 0, %v3939
          %v3941 = vrot.slane %v3936, %v3940
          %v3943 = vadd.f32 %v3935, %v3941
          %v3944 = vld [vmem:[%s3] sm:$0xff]
          %v3945 = vld [vmem:[%s3 + $0x8] sm:$0xff]
          %v3946 = vld [vmem:[%s3 + $0x10] sm:$0xff]
          %v3947 = vld [vmem:[%s3 + $0x18] sm:$0xff]
          %v3948 = vld [vmem:[%s3 + $0x20] sm:$0xff]
          %v3949 = vld [vmem:[%s3 + $0x28] sm:$0xff]
          %v3950 = vld [vmem:[%s3 + $0x30] sm:$0xff]
          %v3951 = vld [vmem:[%s3 + $0x38] sm:$0xff]
          %v3952 = vld [vmem:[%s4] sm:$0x1]
          %v3954 = vlaneseq
          %v3955 = vshrl.u32 %v3954, 7
          %v3956 = vsub.s32 0, %v3955
          %v3957 = vrot.slane %v3952, %v3956
          %vm3959 = vcmask 523264
          %v3961 = vsel %vm3959, %v3943, 0
          %3963 = vmatprep.subr.mxu0 0.0
          %3964 = vmatpush1.msra.mxu0 %v3944
          %3965 = vmatprep.subr.mxu0 0.0
          %3966 = vmatpush1.msra.mxu0 %v3945
          %3967 = vmatprep.subr.mxu0 0.0
          %3968 = vmatpush1.msra.mxu0 %v3946
          %3969 = vmatprep.subr.mxu0 0.0
          %3970 = vmatpush1.msra.mxu0 %v3947
          %3971 = vmatprep.subr.mxu0 0.0
          %3972 = vmatpush1.msra.mxu0 %v3948
          %3973 = vmatprep.subr.mxu0 0.0
          %3974 = vmatpush1.msra.mxu0 %v3949
          %3975 = vmatprep.subr.mxu0 0.0
          %3976 = vmatpush1.msra.mxu0 %v3950
          %3977 = vmatprep.subr.mxu0 0.0
          %3978 = vmatpush1.msra.mxu0 %v3951
          %3979 = vmatprep.subr.mxu0 0.0
          %3980 = vmatpush1.msra.mxu0 0.0
          %3981 = vmatprep.subr.mxu0 0.0
          %3982 = vmatpush1.msra.mxu0 0.0
          %3983 = vmatprep.subr.mxu0 0.0
          %3984 = vmatpush1.msra.mxu0 0.0
          %3985 = vmatprep.subr.mxu0 0.0
          %3986 = vmatpush1.msra.mxu0 0.0
          %3987 = vmatprep.subr.mxu0 0.0
          %3988 = vmatpush1.msra.mxu0 0.0
          %3989 = vmatprep.subr.mxu0 0.0
          %3990 = vmatpush1.msra.mxu0 0.0
          %3991 = vmatprep.subr.mxu0 0.0
          %3992 = vmatpush1.msra.mxu0 0.0
          %3993 = vmatprep.subr.mxu0 0.0
          %3994 = vmatpush1.msra.mxu0 0.0
          %3995 = vmatprep.subr.mxu0 0.0
          %3996 = vmatpush1.msra.mxu0 0.0
          %3997 = vmatprep.subr.mxu0 0.0
          %3998 = vmatpush1.msra.mxu0 0.0
          %3999 = vmatprep.subr.mxu0 0.0
          %4000 = vmatpush1.msra.mxu0 0.0
          %4001 = vmatprep.subr.mxu0 0.0
          %4002 = vmatpush1.msra.mxu0 0.0
          %4003 = vmatprep.subr.mxu0 0.0
          %4004 = vmatpush1.msra.mxu0 0.0
          %4005 = vmatprep.subr.mxu0 0.0
          %4006 = vmatpush1.msra.mxu0 0.0
          %4007 = vmatprep.subr.mxu0 0.0
          %4008 = vmatpush1.msra.mxu0 0.0
          %4009 = vmatprep.subr.mxu0 0.0
          %4010 = vmatpush1.msra.mxu0 0.0
          %4011 = vmatprep.subr.mxu0 0.0
          %4012 = vmatpush1.msra.mxu0 0.0
          %4013 = vmatprep.subr.mxu0 0.0
          %4014 = vmatpush1.msra.mxu0 0.0
          %4015 = vmatprep.subr.mxu0 0.0
          %4016 = vmatpush1.msra.mxu0 0.0
          %4017 = vmatprep.subr.mxu0 0.0
          %4018 = vmatpush1.msra.mxu0 0.0
          %4019 = vmatprep.subr.mxu0 0.0
          %4020 = vmatpush1.msra.mxu0 0.0
          %4021 = vmatprep.subr.mxu0 0.0
          %4022 = vmatpush1.msra.mxu0 0.0
          %4023 = vmatprep.subr.mxu0 0.0
          %4024 = vmatpush1.msra.mxu0 0.0
          %4025 = vmatprep.subr.mxu0 0.0
          %4026 = vmatpush1.msra.mxu0 0.0
          %4027 = vmatprep.mubr.f32.mxu0 0.0
          %4028 = vmatmul.mubr.f32.gmra.mrb[0].mxu0 %v3961
          %v4029 = vpop.f32.mrb[0].mxu0
          %v4030 = vadd.f32 %v3957, %v4029
          %v4031 = vpop.f32.mrb[0].mxu0
          %4032 = vdwg.mxu0
          %v4033 = vmax.f32 %v4030, 0.0
          %v4034 = vld [vmem:[%s5] sm:$0xf]
          %v4035 = vld [vmem:[%s6] sm:$0x1]
          %v4037 = vlaneseq
          %v4038 = vshrl.u32 %v4037, 7
          %v4039 = vsub.s32 0, %v4038
          %v4040 = vrot.slane %v4035, %v4039
          %vm4042 = vcmask 31744
          %v4044 = vsel %vm4042, %v4033, 0
          %vm4046 = vcmask 1043456
          %v4048 = vsel %vm4046, %v4034, 0
          %4050 = vmatprep.subr.mxu0 0.0
          %4051 = vmatpush1.msra.mxu0 %v4048
          %4052 = vmatprep.subr.mxu0 0.0
          %4053 = vmatpush1.msra.mxu0 0.0
          %4054 = vmatprep.subr.mxu0 0.0
          %4055 = vmatpush1.msra.mxu0 0.0
          %4056 = vmatprep.subr.mxu0 0.0
          %4057 = vmatpush1.msra.mxu0 0.0
          %4058 = vmatprep.subr.mxu0 0.0
          %4059 = vmatpush1.msra.mxu0 0.0
          %4060 = vmatprep.subr.mxu0 0.0
          %4061 = vmatpush1.msra.mxu0 0.0
          %4062 = vmatprep.subr.mxu0 0.0
          %4063 = vmatpush1.msra.mxu0 0.0
          %4064 = vmatprep.subr.mxu0 0.0
          %4065 = vmatpush1.msra.mxu0 0.0
          %4066 = vmatprep.subr.mxu0 0.0
          %4067 = vmatpush1.msra.mxu0 0.0
          %4068 = vmatprep.subr.mxu0 0.0
          %4069 = vmatpush1.msra.mxu0 0.0
          %4070 = vmatprep.subr.mxu0 0.0
          %4071 = vmatpush1.msra.mxu0 0.0
          %4072 = vmatprep.subr.mxu0 0.0
          %4073 = vmatpush1.msra.mxu0 0.0
          %4074 = vmatprep.subr.mxu0 0.0
          %4075 = vmatpush1.msra.mxu0 0.0
          %4076 = vmatprep.subr.mxu0 0.0
          %4077 = vmatpush1.msra.mxu0 0.0
          %4078 = vmatprep.subr.mxu0 0.0
          %4079 = vmatpush1.msra.mxu0 0.0
          %4080 = vmatprep.subr.mxu0 0.0
          %4081 = vmatpush1.msra.mxu0 0.0
          %4082 = vmatprep.subr.mxu0 0.0
          %4083 = vmatpush1.msra.mxu0 0.0
          %4084 = vmatprep.subr.mxu0 0.0
          %4085 = vmatpush1.msra.mxu0 0.0
          %4086 = vmatprep.subr.mxu0 0.0
          %4087 = vmatpush1.msra.mxu0 0.0
          %4088 = vmatprep.subr.mxu0 0.0
          %4089 = vmatpush1.msra.mxu0 0.0
          %4090 = vmatprep.subr.mxu0 0.0
          %4091 = vmatpush1.msra.mxu0 0.0
          %4092 = vmatprep.subr.mxu0 0.0
          %4093 = vmatpush1.msra.mxu0 0.0
          %4094 = vmatprep.subr.mxu0 0.0
          %4095 = vmatpush1.msra.mxu0 0.0
          %4096 = vmatprep.subr.mxu0 0.0
          %4097 = vmatpush1.msra.mxu0 0.0
          %4098 = vmatprep.subr.mxu0 0.0
          %4099 = vmatpush1.msra.mxu0 0.0
          %4100 = vmatprep.subr.mxu0 0.0
          %4101 = vmatpush1.msra.mxu0 0.0
          %4102 = vmatprep.subr.mxu0 0.0
          %4103 = vmatpush1.msra.mxu0 0.0
          %4104 = vmatprep.subr.mxu0 0.0
          %4105 = vmatpush1.msra.mxu0 0.0
          %4106 = vmatprep.subr.mxu0 0.0
          %4107 = vmatpush1.msra.mxu0 0.0
          %4108 = vmatprep.subr.mxu0 0.0
          %4109 = vmatpush1.msra.mxu0 0.0
          %4110 = vmatprep.subr.mxu0 0.0
          %4111 = vmatpush1.msra.mxu0 0.0
          %4112 = vmatprep.subr.mxu0 0.0
          %4113 = vmatpush1.msra.mxu0 0.0
          %4114 = vmatprep.mubr.f32.mxu0 0.0
          %4115 = vmatmul.mubr.f32.gmra.mrb[0].mxu0 %v4044
          %v4116 = vpop.f32.mrb[0].mxu0
          %v4117 = vadd.f32 %v4040, %v4116
          %v4118 = vpop.f32.mrb[0].mxu0
          %4119 = vdwg.mxu0
          %v4120 = vxor.u32 %v4117, 2147483648
          %v4121 = vmul.f32 %v4120, 1.442695
          %v4122 = vpow.pop %v4121
          %v4123 = vadd.f32 %v4122, 1.0
          %v4124 = vrcp.pop %v4123
          %v4125 = vmul.f32 1.0, %v4124
          %4126 = vst.msk [vmem:[#allocation3] sm:$0x3] %vm3929, %v4125
        $region56: #{tpu_custom_call.1} parent=47 // pred_fallthru
          _
        // Predicated region
        $region57: #{tpu_custom_call.1} parent=47 // pred_check
          %p4127 = pneg %p189
        $region58: #{tpu_custom_call.1} parent=47 // pred_check_branch
          %4129 = sbr.rel (%p4127) target = $region60
        $region59: #{tpu_custom_call.1} parent=47 // pred_region
          %s4131 = ssub.s32 32, 32
          %4132 = vsyncadd [#allocation4], %s4131
          %s4134 = sshll.u32 [#allocation3], 4
          %s4135 = int_to_ptr.vmem [resolvable:$true] %s4134
          %4137 = dma.vmem_to_hbm [thread:$0]  %s4135, 32, %s7, [#allocation4]
        $region60: #{tpu_custom_call.1} parent=47 // pred_fallthru
          _
        // Predicated region
        $region61: #{tpu_custom_call.1} parent=47 // pred_check
          %p4138 = pneg %p189
        $region62: #{tpu_custom_call.1} parent=47 // pred_check_branch
          %4140 = sbr.rel (%p4138) target = $region64
        $region63: #{tpu_custom_call.1} parent=47 // pred_region
          %4141 = dma.done [#allocation4], 32
        $region64: #{tpu_custom_call.1} parent=47 // pred_fallthru
          _
      $region48: #{tpu_custom_call.1} parent=5 // pred_fallthru
        _
      %p4142 = scmp.le.s32.totalorder 2, %s14
      // Predicated region
      $region65: #{tpu_custom_call.1} parent=5 // pred_check
        %p4143 = pneg %p4142
      $region66: #{tpu_custom_call.1} parent=5 // pred_check_branch
        %4145 = sbr.rel (%p4143) target = $region68
      $region67: #{tpu_custom_call.1} parent=5 // pred_region
        %s4146 = ssub.s32 %s14, 2
      $region68: #{tpu_custom_call.1} parent=5 // pred_fallthru
        _
    $region6: #{tpu_custom_call.1} parent=1 // loop_footer
      %s18 = sadd.s32 1, %s14
    $region7: #{tpu_custom_call.1} parent=1 // loop_footer_branch
      %13 = sbr.rel target = $region3
    $region8: #{tpu_custom_call.1} parent=1 // loop_exit
      _
    %4147 = vsyncpa [#allocation4], 1
    %s4148 = scalar_lea.sflag [#allocation4], 1
    %4149 = vsyncpa %s4148, 1

</llo_original>
